<compile_context>
chip_gen: v7x
topology: tpu7x:2x2x1
jax: 0.10.0
libtpu: 0.0.40
codegen_flags: <defaults>
</compile_context>

<pallas_src>
import functools
import math

import numpy as np
import jax
import jax.numpy as jnp
from jax.experimental import pallas as pl
from jax.experimental.pallas import tpu as pltpu


# ----------------------------------------------------------------------------
# shared helpers (usable both in-kernel and in the pure-JAX reference)
# ----------------------------------------------------------------------------
def _layer_norm(x, w, b, eps=1e-5):
    mu = jnp.mean(x, axis=-1, keepdims=True)
    var = jnp.mean((x - mu) ** 2, axis=-1, keepdims=True)
    return (x - mu) * jax.lax.rsqrt(var + eps) * w + b


def _wdot(x, w):
    """x @ w with x cast to the weight dtype (bf16), f32 accumulation."""
    return jnp.dot(x.astype(w.dtype), w, preferred_element_type=jnp.float32)


# ----------------------------------------------------------------------------
# Pallas kernel #1: decoder stack, grid = (batch blocks, layers)
# ----------------------------------------------------------------------------
def _decoder_kernel(num_heads,
                    feat_ref, emb_ref, pe_ref, vp_w_ref, vp_b_ref,
                    sa_qw_ref, sa_qb_ref, sa_kw_ref, sa_kb_ref,
                    sa_vw_ref, sa_vb_ref, sa_pw_ref, sa_pb_ref,
                    ca_w_ref, ca_b_ref,
                    ff1_w_ref, ff1_b_ref, ff2_w_ref, ff2_b_ref,
                    ln1_w_ref, ln1_b_ref, ln2_w_ref, ln2_b_ref,
                    ln3_w_ref, ln3_b_ref,
                    x_out_ref, x_sc, mem_sc):
    B, T, W = emb_ref.shape
    H = num_heads
    hd = W // H
    BT = B * T
    scale = 1.0 / math.sqrt(hd)

    l = pl.program_id(1)
    L = pl.num_programs(1)

    # ---- layer 0 of this batch block: build memory + initial activations ----
    @pl.when(l == 0)
    def _init():
        feat = feat_ref[...].reshape(B, feat_ref.shape[-1])
        # visual projection: memory = features @ Wp + bp  -> (B, W); length-1
        # memory sequence (this is what makes the cross-attn fusion exact).
        mem_sc[...] = _wdot(feat, vp_w_ref[...]) + vp_b_ref[...]
        # word embeddings + positional encoding (dropout = identity)
        x_sc[...] = (emb_ref[...] + pe_ref[...]).reshape(BT, W)

    x2 = x_sc[...]                 # (BT, W) f32, carried across layer steps
    memory = mem_sc[...]           # (B, W)  f32

    # additive causal mask (cheap iota + where, per grid step)
    row = jax.lax.broadcasted_iota(jnp.int32, (T, T), 0)
    col = jax.lax.broadcasted_iota(jnp.int32, (T, T), 1)
    neg_mask = jnp.where(col <= row, 0.0, -1e9).astype(jnp.float32)   # (T, T)

    # ---- masked multi-head self-attention (bf16 MXU, f32 softmax stats) -----
    x_bf = x2.astype(jnp.bfloat16)                  # hoisted single cast
    q = _wdot(x_bf, sa_qw_ref[0]) + sa_qb_ref[0]    # (BT, W) f32
    k = _wdot(x_bf, sa_kw_ref[0]) + sa_kb_ref[0]
    v = _wdot(x_bf, sa_vw_ref[0]) + sa_vb_ref[0]
    q3 = q.reshape(B, T, W).astype(jnp.bfloat16)
    k3 = k.reshape(B, T, W).astype(jnp.bfloat16)
    v3 = v.reshape(B, T, W).astype(jnp.bfloat16)

    head_outs = []
    for h in range(H):
        sl = slice(h * hd, (h + 1) * hd)
        qh, kh, vh = q3[:, :, sl], k3[:, :, sl], v3[:, :, sl]
        s = jnp.einsum('bqd,bkd->bqk', qh, kh,
                       preferred_element_type=jnp.float32) * scale
        s = s + neg_mask
        s = s - jnp.max(s, axis=-1, keepdims=True)
        p = jnp.exp(s)
        p = p * pl.reciprocal(jnp.sum(p, axis=-1, keepdims=True), approx=True)
        head_outs.append(jnp.einsum('bqk,bkd->bqd', p.astype(jnp.bfloat16), vh,
                                    preferred_element_type=jnp.float32))
    o3 = jnp.concatenate(head_outs, axis=-1)        # (B, T, W)
    attn = _wdot(o3.reshape(BT, W), sa_pw_ref[0]) + sa_pb_ref[0]
    x2 = _layer_norm(x2 + attn, ln1_w_ref[0], ln1_b_ref[0])

    # ---- cross-attention with length-1 memory (pre-fused weights) -----------
    # softmax over a single key is identically 1, so the attention output is
    # memory @ (Wv @ Wo) + (bv @ Wo + bo), independent of the query (exact).
    cross = _wdot(memory, ca_w_ref[0]) + ca_b_ref[0]           # (B, W)
    x3 = x2.reshape(B, T, W) + cross.reshape(B, 1, W)
    x2 = _layer_norm(x3.reshape(BT, W), ln2_w_ref[0], ln2_b_ref[0])

    # ---- position-wise feed-forward -----------------------------------------
    h1 = jnp.maximum(_wdot(x2, ff1_w_ref[0]) + ff1_b_ref[0], 0.0)
    f2 = _wdot(h1, ff2_w_ref[0]) + ff2_b_ref[0]
    x2 = _layer_norm(x2 + f2, ln3_w_ref[0], ln3_b_ref[0])

    x_sc[...] = x2   # carry to next layer step

    @pl.when(l == L - 1)
    def _finalize():
        x_out_ref[...] = x2.reshape(B, T, W).astype(x_out_ref.dtype)


# ----------------------------------------------------------------------------
# Pallas kernel #2: vocab projection, tiled over the (padded) vocab dimension
# ----------------------------------------------------------------------------
def _vocab_kernel(x_ref, w_ref, b_ref, out_ref):
    B, T, W = x_ref.shape
    s = jnp.dot(x_ref[...].reshape(B * T, W).astype(w_ref.dtype), w_ref[...],
                preferred_element_type=jnp.float32) + b_ref[...]
    out_ref[...] = s.reshape(B, T, out_ref.shape[-1]).astype(out_ref.dtype)


# ----------------------------------------------------------------------------
# wrapper
# ----------------------------------------------------------------------------
def _pick_vocab_tile(Vp, target=1024):
    t = max(128, min(Vp, target) - (min(Vp, target) % 128))
    while Vp % t:
        t -= 128
    return t


def captioning_transformer_forward(features, captions, params,
                                   num_layers, num_heads):
    N, D = features.shape
    _, T = captions.shape
    W = params["embedding"].shape[1]
    V = params["out_w"].shape[1]
    Vp = ((V + 127) // 128) * 128                       # lane-dense padded vocab

    # Pad T to a multiple of 8 (layout-preserving (B,T,W)<->(BT,W) reshapes) and
    # pick a block batch targeting ~256 activation rows; pad N instead of a
    # divisor search so prime N never degrades to BB=1.
    T_pad = ((T + 7) // 8) * 8
    BB = max(1, min(N, 256 // T_pad))
    N_pad = ((N + BB - 1) // BB) * BB

    # TODO(synk): data-dependent embedding gather has no clean BlockSpec form;
    # it is done in plain JAX here and the result is streamed into the kernel.
    emb = jnp.take(params["embedding"], captions, axis=0).astype(jnp.float32)
    emb = jnp.pad(emb, ((0, N_pad - N), (0, T_pad - T), (0, 0)))
    pe_full = params["pe"]
    if T_pad > pe_full.shape[0]:
        pe_full = jnp.pad(pe_full, ((0, T_pad - pe_full.shape[0]), (0, 0)))
    pe = pe_full[:T_pad]
    feat = jnp.pad(features.astype(jnp.float32),
                   ((0, N_pad - N), (0, 0))).reshape(N_pad, 1, D)

    bf = lambda a: a.astype(jnp.bfloat16)

    # Pre-fuse cross-attention (length-1 memory): Wv @ Wo and bv @ Wo + bo.
    ca_w = jnp.einsum('lij,ljk->lik', params["ca_vw"], params["ca_pw"])
    ca_b = jnp.einsum('lij,ljk->lik', params["ca_vb"], params["ca_pw"]) \
        + params["ca_pb"]

    layer_args = [
        bf(params["sa_qw"]), params["sa_qb"],
        bf(params["sa_kw"]), params["sa_kb"],
        bf(params["sa_vw"]), params["sa_vb"],
        bf(params["sa_pw"]), params["sa_pb"],
        bf(ca_w), ca_b,
        bf(params["ff1_w"]), params["ff1_b"],
        bf(params["ff2_w"]), params["ff2_b"],
        params["ln1_w"], params["ln1_b"],
        params["ln2_w"], params["ln2_b"],
        params["ln3_w"], params["ln3_b"],
    ]
    const_args = [pe, bf(params["vp_w"]), params["vp_b"]]

    def const_spec(a):
        nd = a.ndim
        return pl.BlockSpec(a.shape, lambda b, l, _n=nd: (0,) * _n)

    def layer_spec(a):
        nd = a.ndim
        return pl.BlockSpec((1,) + a.shape[1:],
                            lambda b, l, _n=nd - 1: (l,) + (0,) * _n)

    in_specs = [
        pl.BlockSpec((BB, 1, D), lambda b, l: (b, 0, 0)),        # image features
        pl.BlockSpec((BB, T_pad, W), lambda b, l: (b, 0, 0)),    # embeddings
    ] + [const_spec(a) for a in const_args] + [layer_spec(a) for a in layer_args]

    BT = BB * T_pad
    F = params["ff1_w"].shape[-1]
    # resident-set estimate: ~2 layers of bf16 weights + activation working set
    est1 = 2 * (5 * W * W + 2 * W * F) * 2 + BT * (10 * W + 2 * F) * 4 \
        + (T_pad * W + D * W + 4 * BT * W) * 4 + (1 << 20)
    vmem1 = int(min(64 * 2 ** 20, max(32 * 2 ** 20, est1)))

    kernel = functools.partial(_decoder_kernel, num_heads)
    x_final = pl.pallas_call(
        kernel,
        out_shape=jax.ShapeDtypeStruct((N_pad, T_pad, W), jnp.float32),
        grid=(N_pad // BB, num_layers),
        in_specs=in_specs,
        out_specs=pl.BlockSpec((BB, T_pad, W), lambda b, l: (b, 0, 0)),
        scratch_shapes=[pltpu.VMEM((BT, W), jnp.float32),      # carried x2
                        pltpu.VMEM((BB, W), jnp.float32)],     # carried memory
        compiler_params=pltpu.CompilerParams(
            dimension_semantics=("parallel", "arbitrary"),
            vmem_limit_bytes=vmem1),
    )(feat, emb, *const_args, *layer_args)

    # -------- vocab projection, tiled over the padded vocab dimension --------
    out_w_p = bf(jnp.pad(params["out_w"], ((0, 0), (0, Vp - V))))
    out_b_p = jnp.pad(params["out_b"], ((0, 0), (0, Vp - V)))
    TV = _pick_vocab_tile(Vp)
    est2 = 2 * (W * TV * 2 + TV * 4 + BT * W * 4 + BT * TV * 4) \
        + BT * TV * 4 + (1 << 20)
    vmem2 = int(min(64 * 2 ** 20, max(32 * 2 ** 20, est2)))

    scores_p = pl.pallas_call(
        _vocab_kernel,
        out_shape=jax.ShapeDtypeStruct((N_pad, T_pad, Vp), jnp.float32),
        grid=(N_pad // BB, Vp // TV),
        in_specs=[pl.BlockSpec((BB, T_pad, W), lambda b, v: (b, 0, 0)),
                  pl.BlockSpec((W, TV), lambda b, v: (0, v)),
                  pl.BlockSpec((1, TV), lambda b, v: (0, v))],
        out_specs=pl.BlockSpec((BB, T_pad, TV), lambda b, v: (b, 0, v)),
        compiler_params=pltpu.CompilerParams(
            dimension_semantics=("parallel", "parallel"),
            vmem_limit_bytes=vmem2),
    )(x_final, out_w_p, out_b_p)

    return scores_p[:N, :T, :V]


# ----------------------------------------------------------------------------
# deterministic init (mirrors _init_weights) + pure-JAX f32 reference
# ----------------------------------------------------------------------------
def init_params(key, vocab_size, input_dim, wordvec_dim, dim_feedforward,
                num_layers, max_length):
    std = 0.02
    L, D, W, F, V = num_layers, input_dim, wordvec_dim, dim_feedforward, vocab_size
    ks = jax.random.split(key, 16)

    def nrm(k, shape):
        return (std * jax.random.normal(k, shape)).astype(jnp.float32)

    pos = np.arange(max_length)[:, None].astype(np.float64)
    div = np.exp(np.arange(0, W, 2).astype(np.float64) * (-math.log(10000.0) / W))
    pe = np.zeros((max_length, W), dtype=np.float32)
    pe[:, 0::2] = np.sin(pos * div)
    pe[:, 1::2] = np.cos(pos * div)

    z = lambda shape: jnp.zeros(shape, jnp.float32)
    o = lambda shape: jnp.ones(shape, jnp.float32)

    return dict(
        embedding=nrm(ks[0], (V, W)),
        pe=jnp.asarray(pe),
        vp_w=nrm(ks[1], (D, W)), vp_b=z((1, W)),
        sa_qw=nrm(ks[2], (L, W, W)), sa_qb=z((L, 1, W)),
        sa_kw=nrm(ks[3], (L, W, W)), sa_kb=z((L, 1, W)),
        sa_vw=nrm(ks[4], (L, W, W)), sa_vb=z((L, 1, W)),
        sa_pw=nrm(ks[5], (L, W, W)), sa_pb=z((L, 1, W)),
        ca_qw=nrm(ks[6], (L, W, W)), ca_qb=z((L, 1, W)),
        ca_kw=nrm(ks[7], (L, W, W)), ca_kb=z((L, 1, W)),
        ca_vw=nrm(ks[8], (L, W, W)), ca_vb=z((L, 1, W)),
        ca_pw=nrm(ks[9], (L, W, W)), ca_pb=z((L, 1, W)),
        ff1_w=nrm(ks[10], (L, W, F)), ff1_b=z((L, 1, F)),
        ff2_w=nrm(ks[11], (L, F, W)), ff2_b=z((L, 1, W)),
        ln1_w=o((L, 1, W)), ln1_b=z((L, 1, W)),
        ln2_w=o((L, 1, W)), ln2_b=z((L, 1, W)),
        ln3_w=o((L, 1, W)), ln3_b=z((L, 1, W)),
        out_w=nrm(ks[12], (W, V)), out_b=z((1, V)),
    )


def _mha_ref(q_in, k_in, v_in, qw, qb, kw, kb, vw, vb, pw, pb, mask, num_heads):
    """Full multi-head attention (reference only, f32, per-head loop)."""
    W = q_in.shape[-1]
    hd = W // num_heads
    scale = 1.0 / math.sqrt(hd)
    q = q_in @ qw + qb
    k = k_in @ kw + kb
    v = v_in @ vw + vb
    outs = []
    for h in range(num_heads):
        qh = q[:, h * hd:(h + 1) * hd]
        kh = k[:, h * hd:(h + 1) * hd]
        vh = v[:, h * hd:(h + 1) * hd]
        s = (qh @ kh.T) * scale
        if mask is not None:
            s = jnp.where(mask, s, -jnp.inf)
        s = s - jnp.max(s, axis=-1, keepdims=True)
        p = jnp.exp(s)
        p = p / jnp.sum(p, axis=-1, keepdims=True)
        outs.append(p @ vh)
    return jnp.concatenate(outs, axis=-1) @ pw + pb


def _reference(features, captions, params, num_layers, num_heads):
    """Pure-JAX f32 reference of the same forward pass (full cross-attention)."""
    N, T = captions.shape
    emb = jnp.take(params["embedding"], captions, axis=0)
    pe = params["pe"][:T]
    row = jax.lax.broadcasted_iota(jnp.int32, (T, T), 0)
    col = jax.lax.broadcasted_iota(jnp.int32, (T, T), 1)
    causal = col <= row
    p = params
    outs = []
    for n in range(N):
        memory = features[n:n + 1] @ p["vp_w"] + p["vp_b"]
        tgt = emb[n] + pe
        for l in range(num_layers):
            t2 = _mha_ref(tgt, tgt, tgt,
                          p["sa_qw"][l], p["sa_qb"][l], p["sa_kw"][l], p["sa_kb"][l],
                          p["sa_vw"][l], p["sa_vb"][l], p["sa_pw"][l], p["sa_pb"][l],
                          causal, num_heads)
            tgt = _layer_norm(tgt + t2, p["ln1_w"][l], p["ln1_b"][l])
            t2 = _mha_ref(tgt, memory, memory,
                          p["ca_qw"][l], p["ca_qb"][l], p["ca_kw"][l], p["ca_kb"][l],
                          p["ca_vw"][l], p["ca_vb"][l], p["ca_pw"][l], p["ca_pb"][l],
                          None, num_heads)
            tgt = _layer_norm(tgt + t2, p["ln2_w"][l], p["ln2_b"][l])
            h1 = jnp.maximum(tgt @ p["ff1_w"][l] + p["ff1_b"][l], 0.0)
            t2 = h1 @ p["ff2_w"][l] + p["ff2_b"][l]
            tgt = _layer_norm(tgt + t2, p["ln3_w"][l], p["ln3_b"][l])
        outs.append(tgt @ p["out_w"] + p["out_b"])
    return jnp.stack(outs)


if __name__ == "__main__":
    vocab_size = 16        # V
    input_dim = 32         # D
    wordvec_dim = 32       # W
    num_heads = 4
    num_layers = 2
    dim_feedforward = 2048  # PyTorch TransformerDecoderLayer default
    max_length = 50
    N, T = 2, 8

    key = jax.random.PRNGKey(0)
    k_param, k_feat, k_cap = jax.random.split(key, 3)
    params = init_params(k_param, vocab_size, input_dim, wordvec_dim,
                         dim_feedforward, num_layers, max_length)
    features = jax.random.normal(k_feat, (N, input_dim), dtype=jnp.float32)
    captions = jax.random.randint(k_cap, (N, T), 0, vocab_size, dtype=jnp.int32)

    scores = captioning_transformer_forward(features, captions, params,
                                            num_layers, num_heads)
    scores = jax.block_until_ready(scores)

    assert scores.shape == (N, T, vocab_size)
    assert bool(jnp.all(jnp.isfinite(scores)))
    ref = _reference(features, captions, params, num_layers, num_heads)
    np.testing.assert_allclose(np.asarray(scores), np.asarray(ref),
                               atol=2e-2, rtol=2e-2)
    print("KERNEL_OK")
</pallas_src>

<mosaic_0001>
module attributes {stable_mosaic.version = 11 : i64} {
  func.func @_decoder_kernel(%arg0: i32, %arg1: i32, %arg2: memref<2x1x32xf32, #tpu.memory_space<vmem>>, %arg3: memref<2x8x32xf32, #tpu.memory_space<vmem>>, %arg4: memref<8x32xf32, #tpu.memory_space<vmem>>, %arg5: memref<32x32xbf16, #tpu.memory_space<vmem>>, %arg6: memref<1x32xf32, #tpu.memory_space<vmem>>, %arg7: memref<1x32x32xbf16, #tpu.memory_space<vmem>>, %arg8: memref<1x1x32xf32, #tpu.memory_space<vmem>>, %arg9: memref<1x32x32xbf16, #tpu.memory_space<vmem>>, %arg10: memref<1x1x32xf32, #tpu.memory_space<vmem>>, %arg11: memref<1x32x32xbf16, #tpu.memory_space<vmem>>, %arg12: memref<1x1x32xf32, #tpu.memory_space<vmem>>, %arg13: memref<1x32x32xbf16, #tpu.memory_space<vmem>>, %arg14: memref<1x1x32xf32, #tpu.memory_space<vmem>>, %arg15: memref<1x32x32xbf16, #tpu.memory_space<vmem>>, %arg16: memref<1x1x32xf32, #tpu.memory_space<vmem>>, %arg17: memref<1x32x2048xbf16, #tpu.memory_space<vmem>>, %arg18: memref<1x1x2048xf32, #tpu.memory_space<vmem>>, %arg19: memref<1x2048x32xbf16, #tpu.memory_space<vmem>>, %arg20: memref<1x1x32xf32, #tpu.memory_space<vmem>>, %arg21: memref<1x1x32xf32, #tpu.memory_space<vmem>>, %arg22: memref<1x1x32xf32, #tpu.memory_space<vmem>>, %arg23: memref<1x1x32xf32, #tpu.memory_space<vmem>>, %arg24: memref<1x1x32xf32, #tpu.memory_space<vmem>>, %arg25: memref<1x1x32xf32, #tpu.memory_space<vmem>>, %arg26: memref<1x1x32xf32, #tpu.memory_space<vmem>>, %arg27: memref<2x8x32xf32, #tpu.memory_space<vmem>>, %arg28: memref<16x32xf32, #tpu.memory_space<vmem>>, %arg29: memref<2x32xf32, #tpu.memory_space<vmem>>) attributes {dimension_semantics = [#tpu.dimension_semantics<parallel>, #tpu.dimension_semantics<arbitrary>], iteration_bounds = array<i64: 1, 2>, scalar_prefetch = 0 : i64, scratch_operands = 2 : i64, tpu.core_type = #tpu.core_type<tc>, window_params = [{transform_indices = @transform_0, window_bounds = array<i64: 2, 1, 32>}, {transform_indices = @transform_1, window_bounds = array<i64: 2, 8, 32>}, {pipeline_mode = #tpu.pipeline_mode<synchronous>, transform_indices = @transform_2, window_bounds = array<i64: 8, 32>}, {pipeline_mode = #tpu.pipeline_mode<synchronous>, transform_indices = @transform_3, window_bounds = array<i64: 32, 32>}, {pipeline_mode = #tpu.pipeline_mode<synchronous>, transform_indices = @transform_4, window_bounds = array<i64: 1, 32>}, {transform_indices = @transform_5, window_bounds = array<i64: 1, 32, 32>}, {transform_indices = @transform_6, window_bounds = array<i64: 1, 1, 32>}, {transform_indices = @transform_7, window_bounds = array<i64: 1, 32, 32>}, {transform_indices = @transform_8, window_bounds = array<i64: 1, 1, 32>}, {transform_indices = @transform_9, window_bounds = array<i64: 1, 32, 32>}, {transform_indices = @transform_10, window_bounds = array<i64: 1, 1, 32>}, {transform_indices = @transform_11, window_bounds = array<i64: 1, 32, 32>}, {transform_indices = @transform_12, window_bounds = array<i64: 1, 1, 32>}, {transform_indices = @transform_13, window_bounds = array<i64: 1, 32, 32>}, {transform_indices = @transform_14, window_bounds = array<i64: 1, 1, 32>}, {transform_indices = @transform_15, window_bounds = array<i64: 1, 32, 2048>}, {transform_indices = @transform_16, window_bounds = array<i64: 1, 1, 2048>}, {transform_indices = @transform_17, window_bounds = array<i64: 1, 2048, 32>}, {transform_indices = @transform_18, window_bounds = array<i64: 1, 1, 32>}, {transform_indices = @transform_19, window_bounds = array<i64: 1, 1, 32>}, {transform_indices = @transform_20, window_bounds = array<i64: 1, 1, 32>}, {transform_indices = @transform_21, window_bounds = array<i64: 1, 1, 32>}, {transform_indices = @transform_22, window_bounds = array<i64: 1, 1, 32>}, {transform_indices = @transform_23, window_bounds = array<i64: 1, 1, 32>}, {transform_indices = @transform_24, window_bounds = array<i64: 1, 1, 32>}, {transform_indices = @transform_25, window_bounds = array<i64: 2, 8, 32>}]} {
    %c0_i32 = arith.constant 0 : i32
    %0 = arith.cmpi eq, %arg1, %c0_i32 : i32
    %1 = arith.extui %0 : i1 to i32
    %c0_i32_0 = arith.constant 0 : i32
    %2 = arith.cmpi ne, %1, %c0_i32_0 : i32
    scf.if %2 {
      %c0_111 = arith.constant 0 : index
      %c0_112 = arith.constant 0 : index
      %c0_113 = arith.constant 0 : index
      %248 = vector.load %arg2[%c0_111, %c0_112, %c0_113] : memref<2x1x32xf32, #tpu.memory_space<vmem>>, vector<2x1x32xf32>
      %249 = vector.shape_cast %248 : vector<2x1x32xf32> to vector<2x32xf32>
      %c0_114 = arith.constant 0 : index
      %c0_115 = arith.constant 0 : index
      %250 = vector.load %arg5[%c0_114, %c0_115] : memref<32x32xbf16, #tpu.memory_space<vmem>>, vector<32x32xbf16>
      %251 = arith.truncf %249 : vector<2x32xf32> to vector<2x32xbf16>
      %cst_116 = arith.constant dense<0.000000e+00> : vector<2x32xf32>
      %252 = tpu.matmul %251, %250, %cst_116 {dimension_numbers = #tpu.dot_dimension_numbers<[1], [0], [0], [1], [0, 0, 1, 1], [], []>} : vector<2x32xbf16>, vector<32x32xbf16>, vector<2x32xf32> -> vector<2x32xf32>
      %c0_117 = arith.constant 0 : index
      %c0_118 = arith.constant 0 : index
      %253 = vector.load %arg6[%c0_117, %c0_118] : memref<1x32xf32, #tpu.memory_space<vmem>>, vector<1x32xf32>
      %254 = vector.broadcast %253 : vector<1x32xf32> to vector<2x32xf32>
      %255 = arith.addf %252, %254 : vector<2x32xf32>
      %c0_119 = arith.constant 0 : index
      %c0_120 = arith.constant 0 : index
      %256 = vector.load %arg29[%c0_119, %c0_120] : memref<2x32xf32, #tpu.memory_space<vmem>>, vector<2x32xf32>
      tpu.vector_store %arg29[%c0_119, %c0_120], %255 {strides = array<i32>} : memref<2x32xf32, #tpu.memory_space<vmem>>, vector<2x32xf32>,
      %c0_121 = arith.constant 0 : index
      %c0_122 = arith.constant 0 : index
      %c0_123 = arith.constant 0 : index
      %257 = vector.load %arg3[%c0_121, %c0_122, %c0_123] : memref<2x8x32xf32, #tpu.memory_space<vmem>>, vector<2x8x32xf32>
      %c0_124 = arith.constant 0 : index
      %c0_125 = arith.constant 0 : index
      %258 = vector.load %arg4[%c0_124, %c0_125] : memref<8x32xf32, #tpu.memory_space<vmem>>, vector<8x32xf32>
      %259 = vector.shape_cast %258 : vector<8x32xf32> to vector<1x8x32xf32>
      %260 = vector.broadcast %259 : vector<1x8x32xf32> to vector<2x8x32xf32>
      %261 = arith.addf %257, %260 : vector<2x8x32xf32>
      %262 = vector.shape_cast %261 : vector<2x8x32xf32> to vector<16x32xf32>
      %c0_126 = arith.constant 0 : index
      %c0_127 = arith.constant 0 : index
      %263 = vector.load %arg28[%c0_126, %c0_127] : memref<16x32xf32, #tpu.memory_space<vmem>>, vector<16x32xf32>
      tpu.vector_store %arg28[%c0_126, %c0_127], %262 {strides = array<i32>} : memref<16x32xf32, #tpu.memory_space<vmem>>, vector<16x32xf32>,
    } else {
    }
    %c0 = arith.constant 0 : index
    %c0_1 = arith.constant 0 : index
    %3 = vector.load %arg28[%c0, %c0_1] : memref<16x32xf32, #tpu.memory_space<vmem>>, vector<16x32xf32>
    %c0_2 = arith.constant 0 : index
    %c0_3 = arith.constant 0 : index
    %4 = vector.load %arg29[%c0_2, %c0_3] : memref<2x32xf32, #tpu.memory_space<vmem>>, vector<2x32xf32>
    %5 = tpu.iota {dimensions = array<i32: 0>} : vector<8x8xi32>
    %6 = tpu.iota {dimensions = array<i32: 1>} : vector<8x8xi32>
    %7 = arith.cmpi sle, %6, %5 : vector<8x8xi32>
    %cst = arith.constant 0.000000e+00 : f32
    %cst_4 = arith.constant -1.000000e+09 : f32
    %8 = vector.broadcast %cst : f32 to vector<8x8xf32>
    %9 = vector.broadcast %cst_4 : f32 to vector<8x8xf32>
    %10 = arith.select %7, %8, %9 : vector<8x8xi1>, vector<8x8xf32>
    %11 = arith.truncf %3 : vector<16x32xf32> to vector<16x32xbf16>
    %c0_5 = arith.constant 0 : index
    %c0_6 = arith.constant 0 : index
    %c0_7 = arith.constant 0 : index
    %12 = vector.load %arg7[%c0_5, %c0_6, %c0_7] : memref<1x32x32xbf16, #tpu.memory_space<vmem>>, vector<1x32x32xbf16>
    %13 = vector.shape_cast %12 : vector<1x32x32xbf16> to vector<32x32xbf16>
    %cst_8 = arith.constant dense<0.000000e+00> : vector<16x32xf32>
    %14 = tpu.matmul %11, %13, %cst_8 {dimension_numbers = #tpu.dot_dimension_numbers<[1], [0], [0], [1], [0, 0, 1, 1], [], []>} : vector<16x32xbf16>, vector<32x32xbf16>, vector<16x32xf32> -> vector<16x32xf32>
    %c0_9 = arith.constant 0 : index
    %c0_10 = arith.constant 0 : index
    %c0_11 = arith.constant 0 : index
    %15 = vector.load %arg8[%c0_9, %c0_10, %c0_11] : memref<1x1x32xf32, #tpu.memory_space<vmem>>, vector<1x1x32xf32>
    %16 = vector.shape_cast %15 : vector<1x1x32xf32> to vector<1x32xf32>
    %17 = vector.broadcast %16 : vector<1x32xf32> to vector<16x32xf32>
    %18 = arith.addf %14, %17 : vector<16x32xf32>
    %c0_12 = arith.constant 0 : index
    %c0_13 = arith.constant 0 : index
    %c0_14 = arith.constant 0 : index
    %19 = vector.load %arg9[%c0_12, %c0_13, %c0_14] : memref<1x32x32xbf16, #tpu.memory_space<vmem>>, vector<1x32x32xbf16>
    %20 = vector.shape_cast %19 : vector<1x32x32xbf16> to vector<32x32xbf16>
    %cst_15 = arith.constant dense<0.000000e+00> : vector<16x32xf32>
    %21 = tpu.matmul %11, %20, %cst_15 {dimension_numbers = #tpu.dot_dimension_numbers<[1], [0], [0], [1], [0, 0, 1, 1], [], []>} : vector<16x32xbf16>, vector<32x32xbf16>, vector<16x32xf32> -> vector<16x32xf32>
    %c0_16 = arith.constant 0 : index
    %c0_17 = arith.constant 0 : index
    %c0_18 = arith.constant 0 : index
    %22 = vector.load %arg10[%c0_16, %c0_17, %c0_18] : memref<1x1x32xf32, #tpu.memory_space<vmem>>, vector<1x1x32xf32>
    %23 = vector.shape_cast %22 : vector<1x1x32xf32> to vector<1x32xf32>
    %24 = vector.broadcast %23 : vector<1x32xf32> to vector<16x32xf32>
    %25 = arith.addf %21, %24 : vector<16x32xf32>
    %c0_19 = arith.constant 0 : index
    %c0_20 = arith.constant 0 : index
    %c0_21 = arith.constant 0 : index
    %26 = vector.load %arg11[%c0_19, %c0_20, %c0_21] : memref<1x32x32xbf16, #tpu.memory_space<vmem>>, vector<1x32x32xbf16>
    %27 = vector.shape_cast %26 : vector<1x32x32xbf16> to vector<32x32xbf16>
    %cst_22 = arith.constant dense<0.000000e+00> : vector<16x32xf32>
    %28 = tpu.matmul %11, %27, %cst_22 {dimension_numbers = #tpu.dot_dimension_numbers<[1], [0], [0], [1], [0, 0, 1, 1], [], []>} : vector<16x32xbf16>, vector<32x32xbf16>, vector<16x32xf32> -> vector<16x32xf32>
    %c0_23 = arith.constant 0 : index
    %c0_24 = arith.constant 0 : index
    %c0_25 = arith.constant 0 : index
    %29 = vector.load %arg12[%c0_23, %c0_24, %c0_25] : memref<1x1x32xf32, #tpu.memory_space<vmem>>, vector<1x1x32xf32>
    %30 = vector.shape_cast %29 : vector<1x1x32xf32> to vector<1x32xf32>
    %31 = vector.broadcast %30 : vector<1x32xf32> to vector<16x32xf32>
    %32 = arith.addf %28, %31 : vector<16x32xf32>
    %33 = vector.shape_cast %18 : vector<16x32xf32> to vector<2x8x32xf32>
    %34 = arith.truncf %33 : vector<2x8x32xf32> to vector<2x8x32xbf16>
    %35 = vector.shape_cast %25 : vector<16x32xf32> to vector<2x8x32xf32>
    %36 = arith.truncf %35 : vector<2x8x32xf32> to vector<2x8x32xbf16>
    %37 = vector.shape_cast %32 : vector<16x32xf32> to vector<2x8x32xf32>
    %38 = arith.truncf %37 : vector<2x8x32xf32> to vector<2x8x32xbf16>
    %39 = vector.extract_strided_slice %34 {offsets = [0, 0, 0], sizes = [2, 8, 8], strides = [1, 1, 1]} : vector<2x8x32xbf16> to vector<2x8x8xbf16>
    %40 = vector.extract_strided_slice %36 {offsets = [0, 0, 0], sizes = [2, 8, 8], strides = [1, 1, 1]} : vector<2x8x32xbf16> to vector<2x8x8xbf16>
    %41 = vector.extract_strided_slice %38 {offsets = [0, 0, 0], sizes = [2, 8, 8], strides = [1, 1, 1]} : vector<2x8x32xbf16> to vector<2x8x8xbf16>
    "tpu.trace_start"() <{level = 10 : i32, message = "bqd,bkd->bqk"}> : () -> ()
    %cst_26 = arith.constant dense<0.000000e+00> : vector<2x8x8xf32>
    %42 = tpu.matmul %39, %40, %cst_26 {dimension_numbers = #tpu.dot_dimension_numbers<[2], [2], [1], [1], [0, 0, 0, 1, 1, 1], [0], [0]>} : vector<2x8x8xbf16>, vector<2x8x8xbf16>, vector<2x8x8xf32> -> vector<2x8x8xf32>
    "tpu.trace_stop"() : () -> ()
    %cst_27 = arith.constant 0.353553385 : f32
    %43 = vector.broadcast %cst_27 : f32 to vector<2x8x8xf32>
    %44 = arith.mulf %42, %43 : vector<2x8x8xf32>
    %45 = vector.shape_cast %10 : vector<8x8xf32> to vector<1x8x8xf32>
    %46 = vector.broadcast %45 : vector<1x8x8xf32> to vector<2x8x8xf32>
    %47 = arith.addf %44, %46 : vector<2x8x8xf32>
    %cst_28 = arith.constant dense<0xFF800000> : vector<2x8xf32>
    %48 = vector.multi_reduction <maximumf>, %47, %cst_28 [2] : vector<2x8x8xf32> to vector<2x8xf32>
    %49 = vector.shape_cast %48 : vector<2x8xf32> to vector<2x8x1xf32>
    %50 = vector.broadcast %49 : vector<2x8x1xf32> to vector<2x8x8xf32>
    %51 = arith.subf %47, %50 : vector<2x8x8xf32>
    %52 = math.exp %51 : vector<2x8x8xf32>
    %cst_29 = arith.constant dense<0.000000e+00> : vector<2x8xf32>
    %53 = vector.multi_reduction <add>, %52, %cst_29 [2] : vector<2x8x8xf32> to vector<2x8xf32>
    %54 = vector.shape_cast %53 : vector<2x8xf32> to vector<2x8x1xf32>
    %55 = tpu.reciprocal %54 {approx = true} : vector<2x8x1xf32> -> vector<2x8x1xf32>
    %56 = vector.broadcast %55 : vector<2x8x1xf32> to vector<2x8x8xf32>
    %57 = arith.mulf %52, %56 : vector<2x8x8xf32>
    %58 = arith.truncf %57 : vector<2x8x8xf32> to vector<2x8x8xbf16>
    "tpu.trace_start"() <{level = 10 : i32, message = "bqk,bkd->bqd"}> : () -> ()
    %cst_30 = arith.constant dense<0.000000e+00> : vector<2x8x8xf32>
    %59 = tpu.matmul %58, %41, %cst_30 {dimension_numbers = #tpu.dot_dimension_numbers<[2], [1], [1], [2], [0, 0, 0, 1, 1, 2], [0], [0]>} : vector<2x8x8xbf16>, vector<2x8x8xbf16>, vector<2x8x8xf32> -> vector<2x8x8xf32>
    "tpu.trace_stop"() : () -> ()
    %60 = vector.extract_strided_slice %34 {offsets = [0, 0, 8], sizes = [2, 8, 8], strides = [1, 1, 1]} : vector<2x8x32xbf16> to vector<2x8x8xbf16>
    %61 = vector.extract_strided_slice %36 {offsets = [0, 0, 8], sizes = [2, 8, 8], strides = [1, 1, 1]} : vector<2x8x32xbf16> to vector<2x8x8xbf16>
    %62 = vector.extract_strided_slice %38 {offsets = [0, 0, 8], sizes = [2, 8, 8], strides = [1, 1, 1]} : vector<2x8x32xbf16> to vector<2x8x8xbf16>
    "tpu.trace_start"() <{level = 10 : i32, message = "bqd,bkd->bqk"}> : () -> ()
    %cst_31 = arith.constant dense<0.000000e+00> : vector<2x8x8xf32>
    %63 = tpu.matmul %60, %61, %cst_31 {dimension_numbers = #tpu.dot_dimension_numbers<[2], [2], [1], [1], [0, 0, 0, 1, 1, 1], [0], [0]>} : vector<2x8x8xbf16>, vector<2x8x8xbf16>, vector<2x8x8xf32> -> vector<2x8x8xf32>
    "tpu.trace_stop"() : () -> ()
    %cst_32 = arith.constant 0.353553385 : f32
    %64 = vector.broadcast %cst_32 : f32 to vector<2x8x8xf32>
    %65 = arith.mulf %63, %64 : vector<2x8x8xf32>
    %66 = vector.shape_cast %10 : vector<8x8xf32> to vector<1x8x8xf32>
    %67 = vector.broadcast %66 : vector<1x8x8xf32> to vector<2x8x8xf32>
    %68 = arith.addf %65, %67 : vector<2x8x8xf32>
    %cst_33 = arith.constant dense<0xFF800000> : vector<2x8xf32>
    %69 = vector.multi_reduction <maximumf>, %68, %cst_33 [2] : vector<2x8x8xf32> to vector<2x8xf32>
    %70 = vector.shape_cast %69 : vector<2x8xf32> to vector<2x8x1xf32>
    %71 = vector.broadcast %70 : vector<2x8x1xf32> to vector<2x8x8xf32>
    %72 = arith.subf %68, %71 : vector<2x8x8xf32>
    %73 = math.exp %72 : vector<2x8x8xf32>
    %cst_34 = arith.constant dense<0.000000e+00> : vector<2x8xf32>
    %74 = vector.multi_reduction <add>, %73, %cst_34 [2] : vector<2x8x8xf32> to vector<2x8xf32>
    %75 = vector.shape_cast %74 : vector<2x8xf32> to vector<2x8x1xf32>
    %76 = tpu.reciprocal %75 {approx = true} : vector<2x8x1xf32> -> vector<2x8x1xf32>
    %77 = vector.broadcast %76 : vector<2x8x1xf32> to vector<2x8x8xf32>
    %78 = arith.mulf %73, %77 : vector<2x8x8xf32>
    %79 = arith.truncf %78 : vector<2x8x8xf32> to vector<2x8x8xbf16>
    "tpu.trace_start"() <{level = 10 : i32, message = "bqk,bkd->bqd"}> : () -> ()
    %cst_35 = arith.constant dense<0.000000e+00> : vector<2x8x8xf32>
    %80 = tpu.matmul %79, %62, %cst_35 {dimension_numbers = #tpu.dot_dimension_numbers<[2], [1], [1], [2], [0, 0, 0, 1, 1, 2], [0], [0]>} : vector<2x8x8xbf16>, vector<2x8x8xbf16>, vector<2x8x8xf32> -> vector<2x8x8xf32>
    "tpu.trace_stop"() : () -> ()
    %81 = vector.extract_strided_slice %34 {offsets = [0, 0, 16], sizes = [2, 8, 8], strides = [1, 1, 1]} : vector<2x8x32xbf16> to vector<2x8x8xbf16>
    %82 = vector.extract_strided_slice %36 {offsets = [0, 0, 16], sizes = [2, 8, 8], strides = [1, 1, 1]} : vector<2x8x32xbf16> to vector<2x8x8xbf16>
    %83 = vector.extract_strided_slice %38 {offsets = [0, 0, 16], sizes = [2, 8, 8], strides = [1, 1, 1]} : vector<2x8x32xbf16> to vector<2x8x8xbf16>
    "tpu.trace_start"() <{level = 10 : i32, message = "bqd,bkd->bqk"}> : () -> ()
    %cst_36 = arith.constant dense<0.000000e+00> : vector<2x8x8xf32>
    %84 = tpu.matmul %81, %82, %cst_36 {dimension_numbers = #tpu.dot_dimension_numbers<[2], [2], [1], [1], [0, 0, 0, 1, 1, 1], [0], [0]>} : vector<2x8x8xbf16>, vector<2x8x8xbf16>, vector<2x8x8xf32> -> vector<2x8x8xf32>
    "tpu.trace_stop"() : () -> ()
    %cst_37 = arith.constant 0.353553385 : f32
    %85 = vector.broadcast %cst_37 : f32 to vector<2x8x8xf32>
    %86 = arith.mulf %84, %85 : vector<2x8x8xf32>
    %87 = vector.shape_cast %10 : vector<8x8xf32> to vector<1x8x8xf32>
    %88 = vector.broadcast %87 : vector<1x8x8xf32> to vector<2x8x8xf32>
    %89 = arith.addf %86, %88 : vector<2x8x8xf32>
    %cst_38 = arith.constant dense<0xFF800000> : vector<2x8xf32>
    %90 = vector.multi_reduction <maximumf>, %89, %cst_38 [2] : vector<2x8x8xf32> to vector<2x8xf32>
    %91 = vector.shape_cast %90 : vector<2x8xf32> to vector<2x8x1xf32>
    %92 = vector.broadcast %91 : vector<2x8x1xf32> to vector<2x8x8xf32>
    %93 = arith.subf %89, %92 : vector<2x8x8xf32>
    %94 = math.exp %93 : vector<2x8x8xf32>
    %cst_39 = arith.constant dense<0.000000e+00> : vector<2x8xf32>
    %95 = vector.multi_reduction <add>, %94, %cst_39 [2] : vector<2x8x8xf32> to vector<2x8xf32>
    %96 = vector.shape_cast %95 : vector<2x8xf32> to vector<2x8x1xf32>
    %97 = tpu.reciprocal %96 {approx = true} : vector<2x8x1xf32> -> vector<2x8x1xf32>
    %98 = vector.broadcast %97 : vector<2x8x1xf32> to vector<2x8x8xf32>
    %99 = arith.mulf %94, %98 : vector<2x8x8xf32>
    %100 = arith.truncf %99 : vector<2x8x8xf32> to vector<2x8x8xbf16>
    "tpu.trace_start"() <{level = 10 : i32, message = "bqk,bkd->bqd"}> : () -> ()
    %cst_40 = arith.constant dense<0.000000e+00> : vector<2x8x8xf32>
    %101 = tpu.matmul %100, %83, %cst_40 {dimension_numbers = #tpu.dot_dimension_numbers<[2], [1], [1], [2], [0, 0, 0, 1, 1, 2], [0], [0]>} : vector<2x8x8xbf16>, vector<2x8x8xbf16>, vector<2x8x8xf32> -> vector<2x8x8xf32>
    "tpu.trace_stop"() : () -> ()
    %102 = vector.extract_strided_slice %34 {offsets = [0, 0, 24], sizes = [2, 8, 8], strides = [1, 1, 1]} : vector<2x8x32xbf16> to vector<2x8x8xbf16>
    %103 = vector.extract_strided_slice %36 {offsets = [0, 0, 24], sizes = [2, 8, 8], strides = [1, 1, 1]} : vector<2x8x32xbf16> to vector<2x8x8xbf16>
    %104 = vector.extract_strided_slice %38 {offsets = [0, 0, 24], sizes = [2, 8, 8], strides = [1, 1, 1]} : vector<2x8x32xbf16> to vector<2x8x8xbf16>
    "tpu.trace_start"() <{level = 10 : i32, message = "bqd,bkd->bqk"}> : () -> ()
    %cst_41 = arith.constant dense<0.000000e+00> : vector<2x8x8xf32>
    %105 = tpu.matmul %102, %103, %cst_41 {dimension_numbers = #tpu.dot_dimension_numbers<[2], [2], [1], [1], [0, 0, 0, 1, 1, 1], [0], [0]>} : vector<2x8x8xbf16>, vector<2x8x8xbf16>, vector<2x8x8xf32> -> vector<2x8x8xf32>
    "tpu.trace_stop"() : () -> ()
    %cst_42 = arith.constant 0.353553385 : f32
    %106 = vector.broadcast %cst_42 : f32 to vector<2x8x8xf32>
    %107 = arith.mulf %105, %106 : vector<2x8x8xf32>
    %108 = vector.shape_cast %10 : vector<8x8xf32> to vector<1x8x8xf32>
    %109 = vector.broadcast %108 : vector<1x8x8xf32> to vector<2x8x8xf32>
    %110 = arith.addf %107, %109 : vector<2x8x8xf32>
    %cst_43 = arith.constant dense<0xFF800000> : vector<2x8xf32>
    %111 = vector.multi_reduction <maximumf>, %110, %cst_43 [2] : vector<2x8x8xf32> to vector<2x8xf32>
    %112 = vector.shape_cast %111 : vector<2x8xf32> to vector<2x8x1xf32>
    %113 = vector.broadcast %112 : vector<2x8x1xf32> to vector<2x8x8xf32>
    %114 = arith.subf %110, %113 : vector<2x8x8xf32>
    %115 = math.exp %114 : vector<2x8x8xf32>
    %cst_44 = arith.constant dense<0.000000e+00> : vector<2x8xf32>
    %116 = vector.multi_reduction <add>, %115, %cst_44 [2] : vector<2x8x8xf32> to vector<2x8xf32>
    %117 = vector.shape_cast %116 : vector<2x8xf32> to vector<2x8x1xf32>
    %118 = tpu.reciprocal %117 {approx = true} : vector<2x8x1xf32> -> vector<2x8x1xf32>
    %119 = vector.broadcast %118 : vector<2x8x1xf32> to vector<2x8x8xf32>
    %120 = arith.mulf %115, %119 : vector<2x8x8xf32>
    %121 = arith.truncf %120 : vector<2x8x8xf32> to vector<2x8x8xbf16>
    "tpu.trace_start"() <{level = 10 : i32, message = "bqk,bkd->bqd"}> : () -> ()
    %cst_45 = arith.constant dense<0.000000e+00> : vector<2x8x8xf32>
    %122 = tpu.matmul %121, %104, %cst_45 {dimension_numbers = #tpu.dot_dimension_numbers<[2], [1], [1], [2], [0, 0, 0, 1, 1, 2], [0], [0]>} : vector<2x8x8xbf16>, vector<2x8x8xbf16>, vector<2x8x8xf32> -> vector<2x8x8xf32>
    "tpu.trace_stop"() : () -> ()
    %123 = tpu.concatenate %59, %80, %101, %122 in 2 : vector<2x8x8xf32>, vector<2x8x8xf32>, vector<2x8x8xf32>, vector<2x8x8xf32> -> vector<2x8x32xf32>
    %124 = vector.shape_cast %123 : vector<2x8x32xf32> to vector<16x32xf32>
    %c0_46 = arith.constant 0 : index
    %c0_47 = arith.constant 0 : index
    %c0_48 = arith.constant 0 : index
    %125 = vector.load %arg13[%c0_46, %c0_47, %c0_48] : memref<1x32x32xbf16, #tpu.memory_space<vmem>>, vector<1x32x32xbf16>
    %126 = vector.shape_cast %125 : vector<1x32x32xbf16> to vector<32x32xbf16>
    %127 = arith.truncf %124 : vector<16x32xf32> to vector<16x32xbf16>
    %cst_49 = arith.constant dense<0.000000e+00> : vector<16x32xf32>
    %128 = tpu.matmul %127, %126, %cst_49 {dimension_numbers = #tpu.dot_dimension_numbers<[1], [0], [0], [1], [0, 0, 1, 1], [], []>} : vector<16x32xbf16>, vector<32x32xbf16>, vector<16x32xf32> -> vector<16x32xf32>
    %c0_50 = arith.constant 0 : index
    %c0_51 = arith.constant 0 : index
    %c0_52 = arith.constant 0 : index
    %129 = vector.load %arg14[%c0_50, %c0_51, %c0_52] : memref<1x1x32xf32, #tpu.memory_space<vmem>>, vector<1x1x32xf32>
    %130 = vector.shape_cast %129 : vector<1x1x32xf32> to vector<1x32xf32>
    %131 = vector.broadcast %130 : vector<1x32xf32> to vector<16x32xf32>
    %132 = arith.addf %128, %131 : vector<16x32xf32>
    %133 = arith.addf %3, %132 : vector<16x32xf32>
    %c0_53 = arith.constant 0 : index
    %c0_54 = arith.constant 0 : index
    %c0_55 = arith.constant 0 : index
    %134 = vector.load %arg21[%c0_53, %c0_54, %c0_55] : memref<1x1x32xf32, #tpu.memory_space<vmem>>, vector<1x1x32xf32>
    %135 = vector.shape_cast %134 : vector<1x1x32xf32> to vector<1x32xf32>
    %c0_56 = arith.constant 0 : index
    %c0_57 = arith.constant 0 : index
    %c0_58 = arith.constant 0 : index
    %136 = vector.load %arg22[%c0_56, %c0_57, %c0_58] : memref<1x1x32xf32, #tpu.memory_space<vmem>>, vector<1x1x32xf32>
    %137 = vector.shape_cast %136 : vector<1x1x32xf32> to vector<1x32xf32>
    %cst_59 = arith.constant dense<0.000000e+00> : vector<16xf32>
    %138 = vector.multi_reduction <add>, %133, %cst_59 [1] : vector<16x32xf32> to vector<16xf32>
    %139 = vector.shape_cast %138 : vector<16xf32> to vector<16x1xf32>
    %cst_60 = arith.constant 3.200000e+01 : f32
    %140 = vector.broadcast %cst_60 : f32 to vector<16x1xf32>
    %141 = arith.divf %139, %140 : vector<16x1xf32>
    %142 = vector.broadcast %141 : vector<16x1xf32> to vector<16x32xf32>
    %143 = arith.subf %133, %142 : vector<16x32xf32>
    %144 = arith.mulf %143, %143 : vector<16x32xf32>
    %cst_61 = arith.constant dense<0.000000e+00> : vector<16xf32>
    %145 = vector.multi_reduction <add>, %144, %cst_61 [1] : vector<16x32xf32> to vector<16xf32>
    %146 = vector.shape_cast %145 : vector<16xf32> to vector<16x1xf32>
    %cst_62 = arith.constant 3.200000e+01 : f32
    %147 = vector.broadcast %cst_62 : f32 to vector<16x1xf32>
    %148 = arith.divf %146, %147 : vector<16x1xf32>
    %149 = vector.broadcast %141 : vector<16x1xf32> to vector<16x32xf32>
    %150 = arith.subf %133, %149 : vector<16x32xf32>
    %cst_63 = arith.constant 9.99999974E-6 : f32
    %151 = vector.broadcast %cst_63 : f32 to vector<16x1xf32>
    %152 = arith.addf %148, %151 : vector<16x1xf32>
    %153 = math.rsqrt %152 : vector<16x1xf32>
    %154 = vector.broadcast %153 : vector<16x1xf32> to vector<16x32xf32>
    %155 = arith.mulf %150, %154 : vector<16x32xf32>
    %156 = vector.broadcast %135 : vector<1x32xf32> to vector<16x32xf32>
    %157 = arith.mulf %155, %156 : vector<16x32xf32>
    %158 = vector.broadcast %137 : vector<1x32xf32> to vector<16x32xf32>
    %159 = arith.addf %157, %158 : vector<16x32xf32>
    %c0_64 = arith.constant 0 : index
    %c0_65 = arith.constant 0 : index
    %c0_66 = arith.constant 0 : index
    %160 = vector.load %arg15[%c0_64, %c0_65, %c0_66] : memref<1x32x32xbf16, #tpu.memory_space<vmem>>, vector<1x32x32xbf16>
    %161 = vector.shape_cast %160 : vector<1x32x32xbf16> to vector<32x32xbf16>
    %162 = arith.truncf %4 : vector<2x32xf32> to vector<2x32xbf16>
    %cst_67 = arith.constant dense<0.000000e+00> : vector<2x32xf32>
    %163 = tpu.matmul %162, %161, %cst_67 {dimension_numbers = #tpu.dot_dimension_numbers<[1], [0], [0], [1], [0, 0, 1, 1], [], []>} : vector<2x32xbf16>, vector<32x32xbf16>, vector<2x32xf32> -> vector<2x32xf32>
    %c0_68 = arith.constant 0 : index
    %c0_69 = arith.constant 0 : index
    %c0_70 = arith.constant 0 : index
    %164 = vector.load %arg16[%c0_68, %c0_69, %c0_70] : memref<1x1x32xf32, #tpu.memory_space<vmem>>, vector<1x1x32xf32>
    %165 = vector.shape_cast %164 : vector<1x1x32xf32> to vector<1x32xf32>
    %166 = vector.broadcast %165 : vector<1x32xf32> to vector<2x32xf32>
    %167 = arith.addf %163, %166 : vector<2x32xf32>
    %168 = vector.shape_cast %159 : vector<16x32xf32> to vector<2x8x32xf32>
    %169 = vector.shape_cast %167 : vector<2x32xf32> to vector<2x1x32xf32>
    %170 = vector.broadcast %169 : vector<2x1x32xf32> to vector<2x8x32xf32>
    %171 = arith.addf %168, %170 : vector<2x8x32xf32>
    %172 = vector.shape_cast %171 : vector<2x8x32xf32> to vector<16x32xf32>
    %c0_71 = arith.constant 0 : index
    %c0_72 = arith.constant 0 : index
    %c0_73 = arith.constant 0 : index
    %173 = vector.load %arg23[%c0_71, %c0_72, %c0_73] : memref<1x1x32xf32, #tpu.memory_space<vmem>>, vector<1x1x32xf32>
    %174 = vector.shape_cast %173 : vector<1x1x32xf32> to vector<1x32xf32>
    %c0_74 = arith.constant 0 : index
    %c0_75 = arith.constant 0 : index
    %c0_76 = arith.constant 0 : index
    %175 = vector.load %arg24[%c0_74, %c0_75, %c0_76] : memref<1x1x32xf32, #tpu.memory_space<vmem>>, vector<1x1x32xf32>
    %176 = vector.shape_cast %175 : vector<1x1x32xf32> to vector<1x32xf32>
    %cst_77 = arith.constant dense<0.000000e+00> : vector<16xf32>
    %177 = vector.multi_reduction <add>, %172, %cst_77 [1] : vector<16x32xf32> to vector<16xf32>
    %178 = vector.shape_cast %177 : vector<16xf32> to vector<16x1xf32>
    %cst_78 = arith.constant 3.200000e+01 : f32
    %179 = vector.broadcast %cst_78 : f32 to vector<16x1xf32>
    %180 = arith.divf %178, %179 : vector<16x1xf32>
    %181 = vector.broadcast %180 : vector<16x1xf32> to vector<16x32xf32>
    %182 = arith.subf %172, %181 : vector<16x32xf32>
    %183 = arith.mulf %182, %182 : vector<16x32xf32>
    %cst_79 = arith.constant dense<0.000000e+00> : vector<16xf32>
    %184 = vector.multi_reduction <add>, %183, %cst_79 [1] : vector<16x32xf32> to vector<16xf32>
    %185 = vector.shape_cast %184 : vector<16xf32> to vector<16x1xf32>
    %cst_80 = arith.constant 3.200000e+01 : f32
    %186 = vector.broadcast %cst_80 : f32 to vector<16x1xf32>
    %187 = arith.divf %185, %186 : vector<16x1xf32>
    %188 = vector.broadcast %180 : vector<16x1xf32> to vector<16x32xf32>
    %189 = arith.subf %172, %188 : vector<16x32xf32>
    %cst_81 = arith.constant 9.99999974E-6 : f32
    %190 = vector.broadcast %cst_81 : f32 to vector<16x1xf32>
    %191 = arith.addf %187, %190 : vector<16x1xf32>
    %192 = math.rsqrt %191 : vector<16x1xf32>
    %193 = vector.broadcast %192 : vector<16x1xf32> to vector<16x32xf32>
    %194 = arith.mulf %189, %193 : vector<16x32xf32>
    %195 = vector.broadcast %174 : vector<1x32xf32> to vector<16x32xf32>
    %196 = arith.mulf %194, %195 : vector<16x32xf32>
    %197 = vector.broadcast %176 : vector<1x32xf32> to vector<16x32xf32>
    %198 = arith.addf %196, %197 : vector<16x32xf32>
    %c0_82 = arith.constant 0 : index
    %c0_83 = arith.constant 0 : index
    %c0_84 = arith.constant 0 : index
    %199 = vector.load %arg17[%c0_82, %c0_83, %c0_84] : memref<1x32x2048xbf16, #tpu.memory_space<vmem>>, vector<1x32x2048xbf16>
    %200 = vector.shape_cast %199 : vector<1x32x2048xbf16> to vector<32x2048xbf16>
    %201 = arith.truncf %198 : vector<16x32xf32> to vector<16x32xbf16>
    %cst_85 = arith.constant dense<0.000000e+00> : vector<16x2048xf32>
    %202 = tpu.matmul %201, %200, %cst_85 {dimension_numbers = #tpu.dot_dimension_numbers<[1], [0], [0], [1], [0, 0, 1, 1], [], []>} : vector<16x32xbf16>, vector<32x2048xbf16>, vector<16x2048xf32> -> vector<16x2048xf32>
    %c0_86 = arith.constant 0 : index
    %c0_87 = arith.constant 0 : index
    %c0_88 = arith.constant 0 : index
    %203 = vector.load %arg18[%c0_86, %c0_87, %c0_88] : memref<1x1x2048xf32, #tpu.memory_space<vmem>>, vector<1x1x2048xf32>
    %204 = vector.shape_cast %203 : vector<1x1x2048xf32> to vector<1x2048xf32>
    %205 = vector.broadcast %204 : vector<1x2048xf32> to vector<16x2048xf32>
    %206 = arith.addf %202, %205 : vector<16x2048xf32>
    %cst_89 = arith.constant 0.000000e+00 : f32
    %207 = vector.broadcast %cst_89 : f32 to vector<16x2048xf32>
    %208 = arith.maximumf %206, %207 : vector<16x2048xf32>
    %c0_90 = arith.constant 0 : index
    %c0_91 = arith.constant 0 : index
    %c0_92 = arith.constant 0 : index
    %209 = vector.load %arg19[%c0_90, %c0_91, %c0_92] : memref<1x2048x32xbf16, #tpu.memory_space<vmem>>, vector<1x2048x32xbf16>
    %210 = vector.shape_cast %209 : vector<1x2048x32xbf16> to vector<2048x32xbf16>
    %211 = arith.truncf %208 : vector<16x2048xf32> to vector<16x2048xbf16>
    %cst_93 = arith.constant dense<0.000000e+00> : vector<16x32xf32>
    %212 = tpu.matmul %211, %210, %cst_93 {dimension_numbers = #tpu.dot_dimension_numbers<[1], [0], [0], [1], [0, 0, 1, 1], [], []>} : vector<16x2048xbf16>, vector<2048x32xbf16>, vector<16x32xf32> -> vector<16x32xf32>
    %c0_94 = arith.constant 0 : index
    %c0_95 = arith.constant 0 : index
    %c0_96 = arith.constant 0 : index
    %213 = vector.load %arg20[%c0_94, %c0_95, %c0_96] : memref<1x1x32xf32, #tpu.memory_space<vmem>>, vector<1x1x32xf32>
    %214 = vector.shape_cast %213 : vector<1x1x32xf32> to vector<1x32xf32>
    %215 = vector.broadcast %214 : vector<1x32xf32> to vector<16x32xf32>
    %216 = arith.addf %212, %215 : vector<16x32xf32>
    %217 = arith.addf %198, %216 : vector<16x32xf32>
    %c0_97 = arith.constant 0 : index
    %c0_98 = arith.constant 0 : index
    %c0_99 = arith.constant 0 : index
    %218 = vector.load %arg25[%c0_97, %c0_98, %c0_99] : memref<1x1x32xf32, #tpu.memory_space<vmem>>, vector<1x1x32xf32>
    %219 = vector.shape_cast %218 : vector<1x1x32xf32> to vector<1x32xf32>
    %c0_100 = arith.constant 0 : index
    %c0_101 = arith.constant 0 : index
    %c0_102 = arith.constant 0 : index
    %220 = vector.load %arg26[%c0_100, %c0_101, %c0_102] : memref<1x1x32xf32, #tpu.memory_space<vmem>>, vector<1x1x32xf32>
    %221 = vector.shape_cast %220 : vector<1x1x32xf32> to vector<1x32xf32>
    %cst_103 = arith.constant dense<0.000000e+00> : vector<16xf32>
    %222 = vector.multi_reduction <add>, %217, %cst_103 [1] : vector<16x32xf32> to vector<16xf32>
    %223 = vector.shape_cast %222 : vector<16xf32> to vector<16x1xf32>
    %cst_104 = arith.constant 3.200000e+01 : f32
    %224 = vector.broadcast %cst_104 : f32 to vector<16x1xf32>
    %225 = arith.divf %223, %224 : vector<16x1xf32>
    %226 = vector.broadcast %225 : vector<16x1xf32> to vector<16x32xf32>
    %227 = arith.subf %217, %226 : vector<16x32xf32>
    %228 = arith.mulf %227, %227 : vector<16x32xf32>
    %cst_105 = arith.constant dense<0.000000e+00> : vector<16xf32>
    %229 = vector.multi_reduction <add>, %228, %cst_105 [1] : vector<16x32xf32> to vector<16xf32>
    %230 = vector.shape_cast %229 : vector<16xf32> to vector<16x1xf32>
    %cst_106 = arith.constant 3.200000e+01 : f32
    %231 = vector.broadcast %cst_106 : f32 to vector<16x1xf32>
    %232 = arith.divf %230, %231 : vector<16x1xf32>
    %233 = vector.broadcast %225 : vector<16x1xf32> to vector<16x32xf32>
    %234 = arith.subf %217, %233 : vector<16x32xf32>
    %cst_107 = arith.constant 9.99999974E-6 : f32
    %235 = vector.broadcast %cst_107 : f32 to vector<16x1xf32>
    %236 = arith.addf %232, %235 : vector<16x1xf32>
    %237 = math.rsqrt %236 : vector<16x1xf32>
    %238 = vector.broadcast %237 : vector<16x1xf32> to vector<16x32xf32>
    %239 = arith.mulf %234, %238 : vector<16x32xf32>
    %240 = vector.broadcast %219 : vector<1x32xf32> to vector<16x32xf32>
    %241 = arith.mulf %239, %240 : vector<16x32xf32>
    %242 = vector.broadcast %221 : vector<1x32xf32> to vector<16x32xf32>
    %243 = arith.addf %241, %242 : vector<16x32xf32>
    %c0_108 = arith.constant 0 : index
    %c0_109 = arith.constant 0 : index
    %244 = vector.load %arg28[%c0_108, %c0_109] : memref<16x32xf32, #tpu.memory_space<vmem>>, vector<16x32xf32>
    tpu.vector_store %arg28[%c0_108, %c0_109], %243 {strides = array<i32>} : memref<16x32xf32, #tpu.memory_space<vmem>>, vector<16x32xf32>,
    %c1_i32 = arith.constant 1 : i32
    %245 = arith.cmpi eq, %arg1, %c1_i32 : i32
    %246 = arith.extui %245 : i1 to i32
    %c0_i32_110 = arith.constant 0 : i32
    %247 = arith.cmpi ne, %246, %c0_i32_110 : i32
    scf.if %247 {
      %248 = vector.shape_cast %243 : vector<16x32xf32> to vector<2x8x32xf32>
      %c0_111 = arith.constant 0 : index
      %c0_112 = arith.constant 0 : index
      %c0_113 = arith.constant 0 : index
      %249 = vector.load %arg27[%c0_111, %c0_112, %c0_113] : memref<2x8x32xf32, #tpu.memory_space<vmem>>, vector<2x8x32xf32>
      tpu.vector_store %arg27[%c0_111, %c0_112, %c0_113], %248 {strides = array<i32>} : memref<2x8x32xf32, #tpu.memory_space<vmem>>, vector<2x8x32xf32>,
    } else {
    }
    return
  }
  func.func @transform_0(%arg0: i32, %arg1: i32) -> (i32, i32, i32) {
    %c0_i32 = arith.constant 0 : i32
    %c0_i32_0 = arith.constant 0 : i32
    %c0_i32_1 = arith.constant 0 : i32
    return %arg0, %c0_i32, %c0_i32_0 : i32, i32, i32
  }
  func.func @transform_1(%arg0: i32, %arg1: i32) -> (i32, i32, i32) {
    %c0_i32 = arith.constant 0 : i32
    %c0_i32_0 = arith.constant 0 : i32
    %c0_i32_1 = arith.constant 0 : i32
    return %arg0, %c0_i32, %c0_i32_0 : i32, i32, i32
  }
  func.func @transform_2(%arg0: i32, %arg1: i32) -> (i32, i32) {
    %c0_i32 = arith.constant 0 : i32
    %c0_i32_0 = arith.constant 0 : i32
    %c0_i32_1 = arith.constant 0 : i32
    return %c0_i32, %c0_i32_0 : i32, i32
  }
  func.func @transform_3(%arg0: i32, %arg1: i32) -> (i32, i32) {
    %c0_i32 = arith.constant 0 : i32
    %c0_i32_0 = arith.constant 0 : i32
    %c0_i32_1 = arith.constant 0 : i32
    return %c0_i32, %c0_i32_0 : i32, i32
  }
  func.func @transform_4(%arg0: i32, %arg1: i32) -> (i32, i32) {
    %c0_i32 = arith.constant 0 : i32
    %c0_i32_0 = arith.constant 0 : i32
    %c0_i32_1 = arith.constant 0 : i32
    return %c0_i32, %c0_i32_0 : i32, i32
  }
  func.func @transform_5(%arg0: i32, %arg1: i32) -> (i32, i32, i32) {
    %c0_i32 = arith.constant 0 : i32
    %c0_i32_0 = arith.constant 0 : i32
    %c0_i32_1 = arith.constant 0 : i32
    return %arg1, %c0_i32, %c0_i32_0 : i32, i32, i32
  }
  func.func @transform_6(%arg0: i32, %arg1: i32) -> (i32, i32, i32) {
    %c0_i32 = arith.constant 0 : i32
    %c0_i32_0 = arith.constant 0 : i32
    %c0_i32_1 = arith.constant 0 : i32
    return %arg1, %c0_i32, %c0_i32_0 : i32, i32, i32
  }
  func.func @transform_7(%arg0: i32, %arg1: i32) -> (i32, i32, i32) {
    %c0_i32 = arith.constant 0 : i32
    %c0_i32_0 = arith.constant 0 : i32
    %c0_i32_1 = arith.constant 0 : i32
    return %arg1, %c0_i32, %c0_i32_0 : i32, i32, i32
  }
  func.func @transform_8(%arg0: i32, %arg1: i32) -> (i32, i32, i32) {
    %c0_i32 = arith.constant 0 : i32
    %c0_i32_0 = arith.constant 0 : i32
    %c0_i32_1 = arith.constant 0 : i32
    return %arg1, %c0_i32, %c0_i32_0 : i32, i32, i32
  }
  func.func @transform_9(%arg0: i32, %arg1: i32) -> (i32, i32, i32) {
    %c0_i32 = arith.constant 0 : i32
    %c0_i32_0 = arith.constant 0 : i32
    %c0_i32_1 = arith.constant 0 : i32
    return %arg1, %c0_i32, %c0_i32_0 : i32, i32, i32
  }
  func.func @transform_10(%arg0: i32, %arg1: i32) -> (i32, i32, i32) {
    %c0_i32 = arith.constant 0 : i32
    %c0_i32_0 = arith.constant 0 : i32
    %c0_i32_1 = arith.constant 0 : i32
    return %arg1, %c0_i32, %c0_i32_0 : i32, i32, i32
  }
  func.func @transform_11(%arg0: i32, %arg1: i32) -> (i32, i32, i32) {
    %c0_i32 = arith.constant 0 : i32
    %c0_i32_0 = arith.constant 0 : i32
    %c0_i32_1 = arith.constant 0 : i32
    return %arg1, %c0_i32, %c0_i32_0 : i32, i32, i32
  }
  func.func @transform_12(%arg0: i32, %arg1: i32) -> (i32, i32, i32) {
    %c0_i32 = arith.constant 0 : i32
    %c0_i32_0 = arith.constant 0 : i32
    %c0_i32_1 = arith.constant 0 : i32
    return %arg1, %c0_i32, %c0_i32_0 : i32, i32, i32
  }
  func.func @transform_13(%arg0: i32, %arg1: i32) -> (i32, i32, i32) {
    %c0_i32 = arith.constant 0 : i32
    %c0_i32_0 = arith.constant 0 : i32
    %c0_i32_1 = arith.constant 0 : i32
    return %arg1, %c0_i32, %c0_i32_0 : i32, i32, i32
  }
  func.func @transform_14(%arg0: i32, %arg1: i32) -> (i32, i32, i32) {
    %c0_i32 = arith.constant 0 : i32
    %c0_i32_0 = arith.constant 0 : i32
    %c0_i32_1 = arith.constant 0 : i32
    return %arg1, %c0_i32, %c0_i32_0 : i32, i32, i32
  }
  func.func @transform_15(%arg0: i32, %arg1: i32) -> (i32, i32, i32) {
    %c0_i32 = arith.constant 0 : i32
    %c0_i32_0 = arith.constant 0 : i32
    %c0_i32_1 = arith.constant 0 : i32
    return %arg1, %c0_i32, %c0_i32_0 : i32, i32, i32
  }
  func.func @transform_16(%arg0: i32, %arg1: i32) -> (i32, i32, i32) {
    %c0_i32 = arith.constant 0 : i32
    %c0_i32_0 = arith.constant 0 : i32
    %c0_i32_1 = arith.constant 0 : i32
    return %arg1, %c0_i32, %c0_i32_0 : i32, i32, i32
  }
  func.func @transform_17(%arg0: i32, %arg1: i32) -> (i32, i32, i32) {
    %c0_i32 = arith.constant 0 : i32
    %c0_i32_0 = arith.constant 0 : i32
    %c0_i32_1 = arith.constant 0 : i32
    return %arg1, %c0_i32, %c0_i32_0 : i32, i32, i32
  }
  func.func @transform_18(%arg0: i32, %arg1: i32) -> (i32, i32, i32) {
    %c0_i32 = arith.constant 0 : i32
    %c0_i32_0 = arith.constant 0 : i32
    %c0_i32_1 = arith.constant 0 : i32
    return %arg1, %c0_i32, %c0_i32_0 : i32, i32, i32
  }
  func.func @transform_19(%arg0: i32, %arg1: i32) -> (i32, i32, i32) {
    %c0_i32 = arith.constant 0 : i32
    %c0_i32_0 = arith.constant 0 : i32
    %c0_i32_1 = arith.constant 0 : i32
    return %arg1, %c0_i32, %c0_i32_0 : i32, i32, i32
  }
  func.func @transform_20(%arg0: i32, %arg1: i32) -> (i32, i32, i32) {
    %c0_i32 = arith.constant 0 : i32
    %c0_i32_0 = arith.constant 0 : i32
    %c0_i32_1 = arith.constant 0 : i32
    return %arg1, %c0_i32, %c0_i32_0 : i32, i32, i32
  }
  func.func @transform_21(%arg0: i32, %arg1: i32) -> (i32, i32, i32) {
    %c0_i32 = arith.constant 0 : i32
    %c0_i32_0 = arith.constant 0 : i32
    %c0_i32_1 = arith.constant 0 : i32
    return %arg1, %c0_i32, %c0_i32_0 : i32, i32, i32
  }
  func.func @transform_22(%arg0: i32, %arg1: i32) -> (i32, i32, i32) {
    %c0_i32 = arith.constant 0 : i32
    %c0_i32_0 = arith.constant 0 : i32
    %c0_i32_1 = arith.constant 0 : i32
    return %arg1, %c0_i32, %c0_i32_0 : i32, i32, i32
  }
  func.func @transform_23(%arg0: i32, %arg1: i32) -> (i32, i32, i32) {
    %c0_i32 = arith.constant 0 : i32
    %c0_i32_0 = arith.constant 0 : i32
    %c0_i32_1 = arith.constant 0 : i32
    return %arg1, %c0_i32, %c0_i32_0 : i32, i32, i32
  }
  func.func @transform_24(%arg0: i32, %arg1: i32) -> (i32, i32, i32) {
    %c0_i32 = arith.constant 0 : i32
    %c0_i32_0 = arith.constant 0 : i32
    %c0_i32_1 = arith.constant 0 : i32
    return %arg1, %c0_i32, %c0_i32_0 : i32, i32, i32
  }
  func.func @transform_25(%arg0: i32, %arg1: i32) -> (i32, i32, i32) {
    %c0_i32 = arith.constant 0 : i32
    %c0_i32_0 = arith.constant 0 : i32
    %c0_i32_1 = arith.constant 0 : i32
    return %arg0, %c0_i32, %c0_i32_0 : i32, i32, i32
  }
}

</mosaic_0001>

<llo_original>
// kernel: tpu_custom_call.1
$region0: #{tpu_custom_call.1}
  #allocation0 [shape = 'u32[]', space=smem, size = 0x4, offset = 0x4, fixed_abs, tag = 'smem constant byte address 0x4 - core index']
  #allocation1 [shape = 'u32[144,128]{1,0:T(1,128)}', space=vmem, size = 0x12000, scoped, tag = 'internal scratch']
  #allocation2 [shape = 'f32[16,32]{1,0:T(8,128)}', space=vmem, size = 0x2000, scoped, tag = 'scratch operand']
  #allocation3 [shape = 'f32[2,32]{1,0:T(2,128)}', space=vmem, size = 0x400, scoped, tag = 'scratch operand']
  %s0 = inlined_call_operand.vmem [shape: f32[2,1,32], index: 0, kind: input, shape index: {}]
  %s1 = inlined_call_operand.vmem [shape: f32[2,8,32], index: 1, kind: input, shape index: {}]
  %s2 = inlined_call_operand.vmem [shape: f32[8,32], index: 2, kind: input, shape index: {}]
  %s3 = inlined_call_operand.vmem [shape: bf16[32,32], index: 3, kind: input, shape index: {}]
  %s4 = inlined_call_operand.vmem [shape: f32[1,32], index: 4, kind: input, shape index: {}]
  %s5 = inlined_call_operand.vmem [shape: bf16[2,32,32], index: 5, kind: input, shape index: {}]
  %s6 = inlined_call_operand.vmem [shape: f32[2,1,32], index: 6, kind: input, shape index: {}]
  %s7 = inlined_call_operand.vmem [shape: bf16[2,32,32], index: 7, kind: input, shape index: {}]
  %s8 = inlined_call_operand.vmem [shape: f32[2,1,32], index: 8, kind: input, shape index: {}]
  %s9 = inlined_call_operand.vmem [shape: bf16[2,32,32], index: 9, kind: input, shape index: {}]
  %s10 = inlined_call_operand.vmem [shape: f32[2,1,32], index: 10, kind: input, shape index: {}]
  %s11 = inlined_call_operand.vmem [shape: bf16[2,32,32], index: 11, kind: input, shape index: {}]
  %s12 = inlined_call_operand.vmem [shape: f32[2,1,32], index: 12, kind: input, shape index: {}]
  %s13 = inlined_call_operand.vmem [shape: bf16[2,32,32], index: 13, kind: input, shape index: {}]
  %s14 = inlined_call_operand.vmem [shape: f32[2,1,32], index: 14, kind: input, shape index: {}]
  %s15 = inlined_call_operand.vmem [shape: bf16[2,32,2048], index: 15, kind: input, shape index: {}]
  %s16 = inlined_call_operand.vmem [shape: f32[2,1,2048], index: 16, kind: input, shape index: {}]
  %s17 = inlined_call_operand.vmem [shape: bf16[2,2048,32], index: 17, kind: input, shape index: {}]
  %s18 = inlined_call_operand.vmem [shape: f32[2,1,32], index: 18, kind: input, shape index: {}]
  %s19 = inlined_call_operand.vmem [shape: f32[2,1,32], index: 19, kind: input, shape index: {}]
  %s20 = inlined_call_operand.vmem [shape: f32[2,1,32], index: 20, kind: input, shape index: {}]
  %s21 = inlined_call_operand.vmem [shape: f32[2,1,32], index: 21, kind: input, shape index: {}]
  %s22 = inlined_call_operand.vmem [shape: f32[2,1,32], index: 22, kind: input, shape index: {}]
  %s23 = inlined_call_operand.vmem [shape: f32[2,1,32], index: 23, kind: input, shape index: {}]
  %s24 = inlined_call_operand.vmem [shape: f32[2,1,32], index: 24, kind: input, shape index: {}]
  %s25 = inlined_call_operand.hbm [shape: f32[2,8,32], index: 25, kind: output, shape index: {}]
  %s26 = sld [smem:[#allocation0]]
  $region141: #{tpu_custom_call.1} parent=0
    _
  %s28 = ssub.s32 1, %s26
  %s29 = scalar_select 0, %s28, %s26
  $region1: #{tpu_custom_call.1} parent=0
    #allocation4 [shape = 'u8[8192]{0}', space=vmem, size = 0x2000, scoped, tag = 'output window, operand 0, single buffered']
    #allocation5 [shape = 's32[2]{0}', space=sflag, size = 0x8, scoped, tag = 'scoped memory for tpu_custom_call.1']
    %30 = vsyncpa [#allocation5], 0
    loop: start=0, step=1, limit=4
    $region2: #{tpu_custom_call.1} parent=1 // loop_pre_header
      _
    $region3: #{tpu_custom_call.1} parent=1 // loop_header
      %s32 = sphi 0, %s36
      %p33 = scmp.ge.s32.totalorder %s32, 4
      %s39 = sphi 0, %s51
      %s40 = sphi 0, %s47
      %s41 = sphi 0, %s39
      %s42 = sphi 0, %s40
      %s43 = sphi 0, %s41
      %s44 = sphi 0, %s42
      %s54 = sphi 0, %s56
      %s57 = sphi 0, %s54
      %s58 = sphi 0, %s57
      %s74 = sphi 0, %s58
      %s80 = sphi 0, %s82
      %s83 = sphi 0, %s80
      %s84 = sphi 0, %s83
      %s100 = sphi 0, %s84
      %s104 = sphi 0, %s104
      %s106 = sphi 0, %s104
      %s107 = sphi 0, %s106
      %s121 = sphi 0, %s107
      %s125 = sphi 0, %s125
      %s127 = sphi 0, %s125
      %s128 = sphi 0, %s127
      %s142 = sphi 0, %s128
      %s146 = sphi 0, %s146
      %s148 = sphi 0, %s146
      %s149 = sphi 0, %s148
      %s163 = sphi 0, %s149
      %s169 = sphi 0, %s171
      %s172 = sphi 0, %s169
      %s173 = sphi 0, %s172
      %s189 = sphi 0, %s173
      %s195 = sphi 0, %s197
      %s198 = sphi 0, %s195
      %s199 = sphi 0, %s198
      %s215 = sphi 0, %s199
      %s221 = sphi 0, %s223
      %s224 = sphi 0, %s221
      %s225 = sphi 0, %s224
      %s241 = sphi 0, %s225
      %s247 = sphi 0, %s249
      %s250 = sphi 0, %s247
      %s251 = sphi 0, %s250
      %s267 = sphi 0, %s251
      %s273 = sphi 0, %s275
      %s276 = sphi 0, %s273
      %s277 = sphi 0, %s276
      %s293 = sphi 0, %s277
      %s299 = sphi 0, %s301
      %s302 = sphi 0, %s299
      %s303 = sphi 0, %s302
      %s319 = sphi 0, %s303
      %s325 = sphi 0, %s327
      %s328 = sphi 0, %s325
      %s329 = sphi 0, %s328
      %s345 = sphi 0, %s329
      %s351 = sphi 0, %s353
      %s354 = sphi 0, %s351
      %s355 = sphi 0, %s354
      %s371 = sphi 0, %s355
      %s377 = sphi 0, %s379
      %s380 = sphi 0, %s377
      %s381 = sphi 0, %s380
      %s397 = sphi 0, %s381
      %s403 = sphi 0, %s405
      %s406 = sphi 0, %s403
      %s407 = sphi 0, %s406
      %s423 = sphi 0, %s407
      %s429 = sphi 0, %s431
      %s432 = sphi 0, %s429
      %s433 = sphi 0, %s432
      %s449 = sphi 0, %s433
      %s455 = sphi 0, %s457
      %s458 = sphi 0, %s455
      %s459 = sphi 0, %s458
      %s475 = sphi 0, %s459
      %s481 = sphi 0, %s483
      %s484 = sphi 0, %s481
      %s485 = sphi 0, %s484
      %s501 = sphi 0, %s485
      %s507 = sphi 0, %s509
      %s510 = sphi 0, %s507
      %s511 = sphi 0, %s510
      %s527 = sphi 0, %s511
      %s533 = sphi 0, %s535
      %s536 = sphi 0, %s533
      %s537 = sphi 0, %s536
      %s553 = sphi 0, %s537
      %s559 = sphi 0, %s561
      %s562 = sphi 0, %s559
      %s563 = sphi 0, %s562
      %s579 = sphi 0, %s563
      %s585 = sphi 0, %s587
      %s588 = sphi 0, %s585
      %s589 = sphi 0, %s588
      %s605 = sphi 0, %s589
      %s611 = sphi 0, %s613
      %s614 = sphi 0, %s611
      %s615 = sphi 0, %s614
      %s631 = sphi 0, %s615
      %s637 = sphi 0, %s639
      %s640 = sphi 0, %s637
      %s641 = sphi 0, %s640
      %s657 = sphi 0, %s641
      %s663 = sphi 0, %s665
      %s666 = sphi 0, %s663
      %s667 = sphi 0, %s666
      %s683 = sphi 0, %s667
      %s689 = sphi 0, %s691
      %s692 = sphi 0, %s689
      %s693 = sphi 0, %s692
      %s709 = sphi 0, %s693
    $region4: #{tpu_custom_call.1} parent=1 // loop_header_branch
      %35 = sbr.rel (%p33) target = $region8
    $region5: #{tpu_custom_call.1} parent=1 // loop_body
      %s37 = ssub.s32 %s32, 1
      %s38 = ssub.s32 %s32, 2
      %s45 = sadd.s32 1, %s40
      %p46 = scmp.ge.s32.totalorder %s45, 2
      %s47 = scalar_select %p46, 0, %s45
      %s48 = sadd.s32 1, %s39
      %s49 = scalar_select %p46, %s48, %s39
      %p50 = scmp.ge.s32.totalorder %s49, 1
      %s51 = scalar_select %p50, 0, %s49
      %s52 = ssub.s32 %s39, %s51
      %p53 = scmp.eq.s32.totalorder %s52, 0
      %s55 = sadd.s32 %s54, 1
      %s56 = scalar_select %p53, %s54, %s55
      %p59 = pneg %p53
      %p60 = scmp.eq.s32.totalorder %s32, 1
      %p61 = por %p59, %p60
      %p62 = scmp.ne.s32.totalorder %s54, %s57
      %p63 = scmp.eq.s32.totalorder %s32, 0
      %p64 = por %p62, %p63
      %p65 = scmp.ne.s32.totalorder %s54, %s57
      %p66 = scmp.eq.s32.totalorder %s37, 1
      %p67 = por %p65, %p66
      %p68 = scmp.ne.s32.totalorder %s57, %s58
      %p69 = scmp.eq.s32.totalorder %s37, 0
      %p70 = por %p68, %p69
      %p71 = scmp.ne.s32.totalorder %s57, %s58
      %p72 = scmp.eq.s32.totalorder %s38, 1
      %p73 = por %p71, %p72
      %p75 = scmp.ne.s32.totalorder %s58, %s74
      %p76 = scmp.eq.s32.totalorder %s38, 0
      %p77 = por %p75, %p76
      %s78 = ssub.s32 %s39, %s51
      %p79 = scmp.eq.s32.totalorder %s78, 0
      %s81 = sadd.s32 %s80, 1
      %s82 = scalar_select %p79, %s80, %s81
      %p85 = pneg %p79
      %p86 = scmp.eq.s32.totalorder %s32, 1
      %p87 = por %p85, %p86
      %p88 = scmp.ne.s32.totalorder %s80, %s83
      %p89 = scmp.eq.s32.totalorder %s32, 0
      %p90 = por %p88, %p89
      %p91 = scmp.ne.s32.totalorder %s80, %s83
      %p92 = scmp.eq.s32.totalorder %s37, 1
      %p93 = por %p91, %p92
      %p94 = scmp.ne.s32.totalorder %s83, %s84
      %p95 = scmp.eq.s32.totalorder %s37, 0
      %p96 = por %p94, %p95
      %p97 = scmp.ne.s32.totalorder %s83, %s84
      %p98 = scmp.eq.s32.totalorder %s38, 1
      %p99 = por %p97, %p98
      %p101 = scmp.ne.s32.totalorder %s84, %s100
      %p102 = scmp.eq.s32.totalorder %s38, 0
      %p103 = por %p101, %p102
      %s105 = sadd.s32 %s104, 1
      %p108 = scmp.eq.s32.totalorder %s32, 1
      %p109 = scmp.ne.s32.totalorder %s104, %s106
      %p110 = scmp.eq.s32.totalorder %s32, 0
      %p111 = por %p109, %p110
      %p112 = scmp.ne.s32.totalorder %s104, %s106
      %p113 = scmp.eq.s32.totalorder %s37, 1
      %p114 = por %p112, %p113
      %p115 = scmp.ne.s32.totalorder %s106, %s107
      %p116 = scmp.eq.s32.totalorder %s37, 0
      %p117 = por %p115, %p116
      %p118 = scmp.ne.s32.totalorder %s106, %s107
      %p119 = scmp.eq.s32.totalorder %s38, 1
      %p120 = por %p118, %p119
      %p122 = scmp.ne.s32.totalorder %s107, %s121
      %p123 = scmp.eq.s32.totalorder %s38, 0
      %p124 = por %p122, %p123
      %s126 = sadd.s32 %s125, 1
      %p129 = scmp.eq.s32.totalorder %s32, 1
      %p130 = scmp.ne.s32.totalorder %s125, %s127
      %p131 = scmp.eq.s32.totalorder %s32, 0
      %p132 = por %p130, %p131
      %p133 = scmp.ne.s32.totalorder %s125, %s127
      %p134 = scmp.eq.s32.totalorder %s37, 1
      %p135 = por %p133, %p134
      %p136 = scmp.ne.s32.totalorder %s127, %s128
      %p137 = scmp.eq.s32.totalorder %s37, 0
      %p138 = por %p136, %p137
      %p139 = scmp.ne.s32.totalorder %s127, %s128
      %p140 = scmp.eq.s32.totalorder %s38, 1
      %p141 = por %p139, %p140
      %p143 = scmp.ne.s32.totalorder %s128, %s142
      %p144 = scmp.eq.s32.totalorder %s38, 0
      %p145 = por %p143, %p144
      %s147 = sadd.s32 %s146, 1
      %p150 = scmp.eq.s32.totalorder %s32, 1
      %p151 = scmp.ne.s32.totalorder %s146, %s148
      %p152 = scmp.eq.s32.totalorder %s32, 0
      %p153 = por %p151, %p152
      %p154 = scmp.ne.s32.totalorder %s146, %s148
      %p155 = scmp.eq.s32.totalorder %s37, 1
      %p156 = por %p154, %p155
      %p157 = scmp.ne.s32.totalorder %s148, %s149
      %p158 = scmp.eq.s32.totalorder %s37, 0
      %p159 = por %p157, %p158
      %p160 = scmp.ne.s32.totalorder %s148, %s149
      %p161 = scmp.eq.s32.totalorder %s38, 1
      %p162 = por %p160, %p161
      %p164 = scmp.ne.s32.totalorder %s149, %s163
      %p165 = scmp.eq.s32.totalorder %s38, 0
      %p166 = por %p164, %p165
      %s167 = ssub.s32 %s40, %s47
      %p168 = scmp.eq.s32.totalorder %s167, 0
      %s170 = sadd.s32 %s169, 1
      %s171 = scalar_select %p168, %s169, %s170
      %p174 = pneg %p168
      %p175 = scmp.eq.s32.totalorder %s32, 1
      %p176 = por %p174, %p175
      %p177 = scmp.ne.s32.totalorder %s169, %s172
      %p178 = scmp.eq.s32.totalorder %s32, 0
      %p179 = por %p177, %p178
      %p180 = scmp.ne.s32.totalorder %s169, %s172
      %p181 = scmp.eq.s32.totalorder %s37, 1
      %p182 = por %p180, %p181
      %p183 = scmp.ne.s32.totalorder %s172, %s173
      %p184 = scmp.eq.s32.totalorder %s37, 0
      %p185 = por %p183, %p184
      %p186 = scmp.ne.s32.totalorder %s172, %s173
      %p187 = scmp.eq.s32.totalorder %s38, 1
      %p188 = por %p186, %p187
      %p190 = scmp.ne.s32.totalorder %s173, %s189
      %p191 = scmp.eq.s32.totalorder %s38, 0
      %p192 = por %p190, %p191
      %s193 = ssub.s32 %s40, %s47
      %p194 = scmp.eq.s32.totalorder %s193, 0
      %s196 = sadd.s32 %s195, 1
      %s197 = scalar_select %p194, %s195, %s196
      %p200 = pneg %p194
      %p201 = scmp.eq.s32.totalorder %s32, 1
      %p202 = por %p200, %p201
      %p203 = scmp.ne.s32.totalorder %s195, %s198
      %p204 = scmp.eq.s32.totalorder %s32, 0
      %p205 = por %p203, %p204
      %p206 = scmp.ne.s32.totalorder %s195, %s198
      %p207 = scmp.eq.s32.totalorder %s37, 1
      %p208 = por %p206, %p207
      %p209 = scmp.ne.s32.totalorder %s198, %s199
      %p210 = scmp.eq.s32.totalorder %s37, 0
      %p211 = por %p209, %p210
      %p212 = scmp.ne.s32.totalorder %s198, %s199
      %p213 = scmp.eq.s32.totalorder %s38, 1
      %p214 = por %p212, %p213
      %p216 = scmp.ne.s32.totalorder %s199, %s215
      %p217 = scmp.eq.s32.totalorder %s38, 0
      %p218 = por %p216, %p217
      %s219 = ssub.s32 %s40, %s47
      %p220 = scmp.eq.s32.totalorder %s219, 0
      %s222 = sadd.s32 %s221, 1
      %s223 = scalar_select %p220, %s221, %s222
      %p226 = pneg %p220
      %p227 = scmp.eq.s32.totalorder %s32, 1
      %p228 = por %p226, %p227
      %p229 = scmp.ne.s32.totalorder %s221, %s224
      %p230 = scmp.eq.s32.totalorder %s32, 0
      %p231 = por %p229, %p230
      %p232 = scmp.ne.s32.totalorder %s221, %s224
      %p233 = scmp.eq.s32.totalorder %s37, 1
      %p234 = por %p232, %p233
      %p235 = scmp.ne.s32.totalorder %s224, %s225
      %p236 = scmp.eq.s32.totalorder %s37, 0
      %p237 = por %p235, %p236
      %p238 = scmp.ne.s32.totalorder %s224, %s225
      %p239 = scmp.eq.s32.totalorder %s38, 1
      %p240 = por %p238, %p239
      %p242 = scmp.ne.s32.totalorder %s225, %s241
      %p243 = scmp.eq.s32.totalorder %s38, 0
      %p244 = por %p242, %p243
      %s245 = ssub.s32 %s40, %s47
      %p246 = scmp.eq.s32.totalorder %s245, 0
      %s248 = sadd.s32 %s247, 1
      %s249 = scalar_select %p246, %s247, %s248
      %p252 = pneg %p246
      %p253 = scmp.eq.s32.totalorder %s32, 1
      %p254 = por %p252, %p253
      %p255 = scmp.ne.s32.totalorder %s247, %s250
      %p256 = scmp.eq.s32.totalorder %s32, 0
      %p257 = por %p255, %p256
      %p258 = scmp.ne.s32.totalorder %s247, %s250
      %p259 = scmp.eq.s32.totalorder %s37, 1
      %p260 = por %p258, %p259
      %p261 = scmp.ne.s32.totalorder %s250, %s251
      %p262 = scmp.eq.s32.totalorder %s37, 0
      %p263 = por %p261, %p262
      %p264 = scmp.ne.s32.totalorder %s250, %s251
      %p265 = scmp.eq.s32.totalorder %s38, 1
      %p266 = por %p264, %p265
      %p268 = scmp.ne.s32.totalorder %s251, %s267
      %p269 = scmp.eq.s32.totalorder %s38, 0
      %p270 = por %p268, %p269
      %s271 = ssub.s32 %s40, %s47
      %p272 = scmp.eq.s32.totalorder %s271, 0
      %s274 = sadd.s32 %s273, 1
      %s275 = scalar_select %p272, %s273, %s274
      %p278 = pneg %p272
      %p279 = scmp.eq.s32.totalorder %s32, 1
      %p280 = por %p278, %p279
      %p281 = scmp.ne.s32.totalorder %s273, %s276
      %p282 = scmp.eq.s32.totalorder %s32, 0
      %p283 = por %p281, %p282
      %p284 = scmp.ne.s32.totalorder %s273, %s276
      %p285 = scmp.eq.s32.totalorder %s37, 1
      %p286 = por %p284, %p285
      %p287 = scmp.ne.s32.totalorder %s276, %s277
      %p288 = scmp.eq.s32.totalorder %s37, 0
      %p289 = por %p287, %p288
      %p290 = scmp.ne.s32.totalorder %s276, %s277
      %p291 = scmp.eq.s32.totalorder %s38, 1
      %p292 = por %p290, %p291
      %p294 = scmp.ne.s32.totalorder %s277, %s293
      %p295 = scmp.eq.s32.totalorder %s38, 0
      %p296 = por %p294, %p295
      %s297 = ssub.s32 %s40, %s47
      %p298 = scmp.eq.s32.totalorder %s297, 0
      %s300 = sadd.s32 %s299, 1
      %s301 = scalar_select %p298, %s299, %s300
      %p304 = pneg %p298
      %p305 = scmp.eq.s32.totalorder %s32, 1
      %p306 = por %p304, %p305
      %p307 = scmp.ne.s32.totalorder %s299, %s302
      %p308 = scmp.eq.s32.totalorder %s32, 0
      %p309 = por %p307, %p308
      %p310 = scmp.ne.s32.totalorder %s299, %s302
      %p311 = scmp.eq.s32.totalorder %s37, 1
      %p312 = por %p310, %p311
      %p313 = scmp.ne.s32.totalorder %s302, %s303
      %p314 = scmp.eq.s32.totalorder %s37, 0
      %p315 = por %p313, %p314
      %p316 = scmp.ne.s32.totalorder %s302, %s303
      %p317 = scmp.eq.s32.totalorder %s38, 1
      %p318 = por %p316, %p317
      %p320 = scmp.ne.s32.totalorder %s303, %s319
      %p321 = scmp.eq.s32.totalorder %s38, 0
      %p322 = por %p320, %p321
      %s323 = ssub.s32 %s40, %s47
      %p324 = scmp.eq.s32.totalorder %s323, 0
      %s326 = sadd.s32 %s325, 1
      %s327 = scalar_select %p324, %s325, %s326
      %p330 = pneg %p324
      %p331 = scmp.eq.s32.totalorder %s32, 1
      %p332 = por %p330, %p331
      %p333 = scmp.ne.s32.totalorder %s325, %s328
      %p334 = scmp.eq.s32.totalorder %s32, 0
      %p335 = por %p333, %p334
      %p336 = scmp.ne.s32.totalorder %s325, %s328
      %p337 = scmp.eq.s32.totalorder %s37, 1
      %p338 = por %p336, %p337
      %p339 = scmp.ne.s32.totalorder %s328, %s329
      %p340 = scmp.eq.s32.totalorder %s37, 0
      %p341 = por %p339, %p340
      %p342 = scmp.ne.s32.totalorder %s328, %s329
      %p343 = scmp.eq.s32.totalorder %s38, 1
      %p344 = por %p342, %p343
      %p346 = scmp.ne.s32.totalorder %s329, %s345
      %p347 = scmp.eq.s32.totalorder %s38, 0
      %p348 = por %p346, %p347
      %s349 = ssub.s32 %s40, %s47
      %p350 = scmp.eq.s32.totalorder %s349, 0
      %s352 = sadd.s32 %s351, 1
      %s353 = scalar_select %p350, %s351, %s352
      %p356 = pneg %p350
      %p357 = scmp.eq.s32.totalorder %s32, 1
      %p358 = por %p356, %p357
      %p359 = scmp.ne.s32.totalorder %s351, %s354
      %p360 = scmp.eq.s32.totalorder %s32, 0
      %p361 = por %p359, %p360
      %p362 = scmp.ne.s32.totalorder %s351, %s354
      %p363 = scmp.eq.s32.totalorder %s37, 1
      %p364 = por %p362, %p363
      %p365 = scmp.ne.s32.totalorder %s354, %s355
      %p366 = scmp.eq.s32.totalorder %s37, 0
      %p367 = por %p365, %p366
      %p368 = scmp.ne.s32.totalorder %s354, %s355
      %p369 = scmp.eq.s32.totalorder %s38, 1
      %p370 = por %p368, %p369
      %p372 = scmp.ne.s32.totalorder %s355, %s371
      %p373 = scmp.eq.s32.totalorder %s38, 0
      %p374 = por %p372, %p373
      %s375 = ssub.s32 %s40, %s47
      %p376 = scmp.eq.s32.totalorder %s375, 0
      %s378 = sadd.s32 %s377, 1
      %s379 = scalar_select %p376, %s377, %s378
      %p382 = pneg %p376
      %p383 = scmp.eq.s32.totalorder %s32, 1
      %p384 = por %p382, %p383
      %p385 = scmp.ne.s32.totalorder %s377, %s380
      %p386 = scmp.eq.s32.totalorder %s32, 0
      %p387 = por %p385, %p386
      %p388 = scmp.ne.s32.totalorder %s377, %s380
      %p389 = scmp.eq.s32.totalorder %s37, 1
      %p390 = por %p388, %p389
      %p391 = scmp.ne.s32.totalorder %s380, %s381
      %p392 = scmp.eq.s32.totalorder %s37, 0
      %p393 = por %p391, %p392
      %p394 = scmp.ne.s32.totalorder %s380, %s381
      %p395 = scmp.eq.s32.totalorder %s38, 1
      %p396 = por %p394, %p395
      %p398 = scmp.ne.s32.totalorder %s381, %s397
      %p399 = scmp.eq.s32.totalorder %s38, 0
      %p400 = por %p398, %p399
      %s401 = ssub.s32 %s40, %s47
      %p402 = scmp.eq.s32.totalorder %s401, 0
      %s404 = sadd.s32 %s403, 1
      %s405 = scalar_select %p402, %s403, %s404
      %p408 = pneg %p402
      %p409 = scmp.eq.s32.totalorder %s32, 1
      %p410 = por %p408, %p409
      %p411 = scmp.ne.s32.totalorder %s403, %s406
      %p412 = scmp.eq.s32.totalorder %s32, 0
      %p413 = por %p411, %p412
      %p414 = scmp.ne.s32.totalorder %s403, %s406
      %p415 = scmp.eq.s32.totalorder %s37, 1
      %p416 = por %p414, %p415
      %p417 = scmp.ne.s32.totalorder %s406, %s407
      %p418 = scmp.eq.s32.totalorder %s37, 0
      %p419 = por %p417, %p418
      %p420 = scmp.ne.s32.totalorder %s406, %s407
      %p421 = scmp.eq.s32.totalorder %s38, 1
      %p422 = por %p420, %p421
      %p424 = scmp.ne.s32.totalorder %s407, %s423
      %p425 = scmp.eq.s32.totalorder %s38, 0
      %p426 = por %p424, %p425
      %s427 = ssub.s32 %s40, %s47
      %p428 = scmp.eq.s32.totalorder %s427, 0
      %s430 = sadd.s32 %s429, 1
      %s431 = scalar_select %p428, %s429, %s430
      %p434 = pneg %p428
      %p435 = scmp.eq.s32.totalorder %s32, 1
      %p436 = por %p434, %p435
      %p437 = scmp.ne.s32.totalorder %s429, %s432
      %p438 = scmp.eq.s32.totalorder %s32, 0
      %p439 = por %p437, %p438
      %p440 = scmp.ne.s32.totalorder %s429, %s432
      %p441 = scmp.eq.s32.totalorder %s37, 1
      %p442 = por %p440, %p441
      %p443 = scmp.ne.s32.totalorder %s432, %s433
      %p444 = scmp.eq.s32.totalorder %s37, 0
      %p445 = por %p443, %p444
      %p446 = scmp.ne.s32.totalorder %s432, %s433
      %p447 = scmp.eq.s32.totalorder %s38, 1
      %p448 = por %p446, %p447
      %p450 = scmp.ne.s32.totalorder %s433, %s449
      %p451 = scmp.eq.s32.totalorder %s38, 0
      %p452 = por %p450, %p451
      %s453 = ssub.s32 %s40, %s47
      %p454 = scmp.eq.s32.totalorder %s453, 0
      %s456 = sadd.s32 %s455, 1
      %s457 = scalar_select %p454, %s455, %s456
      %p460 = pneg %p454
      %p461 = scmp.eq.s32.totalorder %s32, 1
      %p462 = por %p460, %p461
      %p463 = scmp.ne.s32.totalorder %s455, %s458
      %p464 = scmp.eq.s32.totalorder %s32, 0
      %p465 = por %p463, %p464
      %p466 = scmp.ne.s32.totalorder %s455, %s458
      %p467 = scmp.eq.s32.totalorder %s37, 1
      %p468 = por %p466, %p467
      %p469 = scmp.ne.s32.totalorder %s458, %s459
      %p470 = scmp.eq.s32.totalorder %s37, 0
      %p471 = por %p469, %p470
      %p472 = scmp.ne.s32.totalorder %s458, %s459
      %p473 = scmp.eq.s32.totalorder %s38, 1
      %p474 = por %p472, %p473
      %p476 = scmp.ne.s32.totalorder %s459, %s475
      %p477 = scmp.eq.s32.totalorder %s38, 0
      %p478 = por %p476, %p477
      %s479 = ssub.s32 %s40, %s47
      %p480 = scmp.eq.s32.totalorder %s479, 0
      %s482 = sadd.s32 %s481, 1
      %s483 = scalar_select %p480, %s481, %s482
      %p486 = pneg %p480
      %p487 = scmp.eq.s32.totalorder %s32, 1
      %p488 = por %p486, %p487
      %p489 = scmp.ne.s32.totalorder %s481, %s484
      %p490 = scmp.eq.s32.totalorder %s32, 0
      %p491 = por %p489, %p490
      %p492 = scmp.ne.s32.totalorder %s481, %s484
      %p493 = scmp.eq.s32.totalorder %s37, 1
      %p494 = por %p492, %p493
      %p495 = scmp.ne.s32.totalorder %s484, %s485
      %p496 = scmp.eq.s32.totalorder %s37, 0
      %p497 = por %p495, %p496
      %p498 = scmp.ne.s32.totalorder %s484, %s485
      %p499 = scmp.eq.s32.totalorder %s38, 1
      %p500 = por %p498, %p499
      %p502 = scmp.ne.s32.totalorder %s485, %s501
      %p503 = scmp.eq.s32.totalorder %s38, 0
      %p504 = por %p502, %p503
      %s505 = ssub.s32 %s40, %s47
      %p506 = scmp.eq.s32.totalorder %s505, 0
      %s508 = sadd.s32 %s507, 1
      %s509 = scalar_select %p506, %s507, %s508
      %p512 = pneg %p506
      %p513 = scmp.eq.s32.totalorder %s32, 1
      %p514 = por %p512, %p513
      %p515 = scmp.ne.s32.totalorder %s507, %s510
      %p516 = scmp.eq.s32.totalorder %s32, 0
      %p517 = por %p515, %p516
      %p518 = scmp.ne.s32.totalorder %s507, %s510
      %p519 = scmp.eq.s32.totalorder %s37, 1
      %p520 = por %p518, %p519
      %p521 = scmp.ne.s32.totalorder %s510, %s511
      %p522 = scmp.eq.s32.totalorder %s37, 0
      %p523 = por %p521, %p522
      %p524 = scmp.ne.s32.totalorder %s510, %s511
      %p525 = scmp.eq.s32.totalorder %s38, 1
      %p526 = por %p524, %p525
      %p528 = scmp.ne.s32.totalorder %s511, %s527
      %p529 = scmp.eq.s32.totalorder %s38, 0
      %p530 = por %p528, %p529
      %s531 = ssub.s32 %s40, %s47
      %p532 = scmp.eq.s32.totalorder %s531, 0
      %s534 = sadd.s32 %s533, 1
      %s535 = scalar_select %p532, %s533, %s534
      %p538 = pneg %p532
      %p539 = scmp.eq.s32.totalorder %s32, 1
      %p540 = por %p538, %p539
      %p541 = scmp.ne.s32.totalorder %s533, %s536
      %p542 = scmp.eq.s32.totalorder %s32, 0
      %p543 = por %p541, %p542
      %p544 = scmp.ne.s32.totalorder %s533, %s536
      %p545 = scmp.eq.s32.totalorder %s37, 1
      %p546 = por %p544, %p545
      %p547 = scmp.ne.s32.totalorder %s536, %s537
      %p548 = scmp.eq.s32.totalorder %s37, 0
      %p549 = por %p547, %p548
      %p550 = scmp.ne.s32.totalorder %s536, %s537
      %p551 = scmp.eq.s32.totalorder %s38, 1
      %p552 = por %p550, %p551
      %p554 = scmp.ne.s32.totalorder %s537, %s553
      %p555 = scmp.eq.s32.totalorder %s38, 0
      %p556 = por %p554, %p555
      %s557 = ssub.s32 %s40, %s47
      %p558 = scmp.eq.s32.totalorder %s557, 0
      %s560 = sadd.s32 %s559, 1
      %s561 = scalar_select %p558, %s559, %s560
      %p564 = pneg %p558
      %p565 = scmp.eq.s32.totalorder %s32, 1
      %p566 = por %p564, %p565
      %p567 = scmp.ne.s32.totalorder %s559, %s562
      %p568 = scmp.eq.s32.totalorder %s32, 0
      %p569 = por %p567, %p568
      %p570 = scmp.ne.s32.totalorder %s559, %s562
      %p571 = scmp.eq.s32.totalorder %s37, 1
      %p572 = por %p570, %p571
      %p573 = scmp.ne.s32.totalorder %s562, %s563
      %p574 = scmp.eq.s32.totalorder %s37, 0
      %p575 = por %p573, %p574
      %p576 = scmp.ne.s32.totalorder %s562, %s563
      %p577 = scmp.eq.s32.totalorder %s38, 1
      %p578 = por %p576, %p577
      %p580 = scmp.ne.s32.totalorder %s563, %s579
      %p581 = scmp.eq.s32.totalorder %s38, 0
      %p582 = por %p580, %p581
      %s583 = ssub.s32 %s40, %s47
      %p584 = scmp.eq.s32.totalorder %s583, 0
      %s586 = sadd.s32 %s585, 1
      %s587 = scalar_select %p584, %s585, %s586
      %p590 = pneg %p584
      %p591 = scmp.eq.s32.totalorder %s32, 1
      %p592 = por %p590, %p591
      %p593 = scmp.ne.s32.totalorder %s585, %s588
      %p594 = scmp.eq.s32.totalorder %s32, 0
      %p595 = por %p593, %p594
      %p596 = scmp.ne.s32.totalorder %s585, %s588
      %p597 = scmp.eq.s32.totalorder %s37, 1
      %p598 = por %p596, %p597
      %p599 = scmp.ne.s32.totalorder %s588, %s589
      %p600 = scmp.eq.s32.totalorder %s37, 0
      %p601 = por %p599, %p600
      %p602 = scmp.ne.s32.totalorder %s588, %s589
      %p603 = scmp.eq.s32.totalorder %s38, 1
      %p604 = por %p602, %p603
      %p606 = scmp.ne.s32.totalorder %s589, %s605
      %p607 = scmp.eq.s32.totalorder %s38, 0
      %p608 = por %p606, %p607
      %s609 = ssub.s32 %s40, %s47
      %p610 = scmp.eq.s32.totalorder %s609, 0
      %s612 = sadd.s32 %s611, 1
      %s613 = scalar_select %p610, %s611, %s612
      %p616 = pneg %p610
      %p617 = scmp.eq.s32.totalorder %s32, 1
      %p618 = por %p616, %p617
      %p619 = scmp.ne.s32.totalorder %s611, %s614
      %p620 = scmp.eq.s32.totalorder %s32, 0
      %p621 = por %p619, %p620
      %p622 = scmp.ne.s32.totalorder %s611, %s614
      %p623 = scmp.eq.s32.totalorder %s37, 1
      %p624 = por %p622, %p623
      %p625 = scmp.ne.s32.totalorder %s614, %s615
      %p626 = scmp.eq.s32.totalorder %s37, 0
      %p627 = por %p625, %p626
      %p628 = scmp.ne.s32.totalorder %s614, %s615
      %p629 = scmp.eq.s32.totalorder %s38, 1
      %p630 = por %p628, %p629
      %p632 = scmp.ne.s32.totalorder %s615, %s631
      %p633 = scmp.eq.s32.totalorder %s38, 0
      %p634 = por %p632, %p633
      %s635 = ssub.s32 %s40, %s47
      %p636 = scmp.eq.s32.totalorder %s635, 0
      %s638 = sadd.s32 %s637, 1
      %s639 = scalar_select %p636, %s637, %s638
      %p642 = pneg %p636
      %p643 = scmp.eq.s32.totalorder %s32, 1
      %p644 = por %p642, %p643
      %p645 = scmp.ne.s32.totalorder %s637, %s640
      %p646 = scmp.eq.s32.totalorder %s32, 0
      %p647 = por %p645, %p646
      %p648 = scmp.ne.s32.totalorder %s637, %s640
      %p649 = scmp.eq.s32.totalorder %s37, 1
      %p650 = por %p648, %p649
      %p651 = scmp.ne.s32.totalorder %s640, %s641
      %p652 = scmp.eq.s32.totalorder %s37, 0
      %p653 = por %p651, %p652
      %p654 = scmp.ne.s32.totalorder %s640, %s641
      %p655 = scmp.eq.s32.totalorder %s38, 1
      %p656 = por %p654, %p655
      %p658 = scmp.ne.s32.totalorder %s641, %s657
      %p659 = scmp.eq.s32.totalorder %s38, 0
      %p660 = por %p658, %p659
      %s661 = ssub.s32 %s40, %s47
      %p662 = scmp.eq.s32.totalorder %s661, 0
      %s664 = sadd.s32 %s663, 1
      %s665 = scalar_select %p662, %s663, %s664
      %p668 = pneg %p662
      %p669 = scmp.eq.s32.totalorder %s32, 1
      %p670 = por %p668, %p669
      %p671 = scmp.ne.s32.totalorder %s663, %s666
      %p672 = scmp.eq.s32.totalorder %s32, 0
      %p673 = por %p671, %p672
      %p674 = scmp.ne.s32.totalorder %s663, %s666
      %p675 = scmp.eq.s32.totalorder %s37, 1
      %p676 = por %p674, %p675
      %p677 = scmp.ne.s32.totalorder %s666, %s667
      %p678 = scmp.eq.s32.totalorder %s37, 0
      %p679 = por %p677, %p678
      %p680 = scmp.ne.s32.totalorder %s666, %s667
      %p681 = scmp.eq.s32.totalorder %s38, 1
      %p682 = por %p680, %p681
      %p684 = scmp.ne.s32.totalorder %s667, %s683
      %p685 = scmp.eq.s32.totalorder %s38, 0
      %p686 = por %p684, %p685
      %s687 = ssub.s32 %s39, %s51
      %p688 = scmp.eq.s32.totalorder %s687, 0
      %s690 = sadd.s32 %s689, 1
      %s691 = scalar_select %p688, %s689, %s690
      %p694 = pneg %p688
      %p695 = scmp.eq.s32.totalorder %s32, 1
      %p696 = por %p694, %p695
      %p697 = scmp.ne.s32.totalorder %s689, %s692
      %p698 = scmp.eq.s32.totalorder %s32, 0
      %p699 = por %p697, %p698
      %p700 = scmp.ne.s32.totalorder %s689, %s692
      %p701 = scmp.eq.s32.totalorder %s37, 1
      %p702 = por %p700, %p701
      %p703 = scmp.ne.s32.totalorder %s692, %s693
      %p704 = scmp.eq.s32.totalorder %s37, 0
      %p705 = por %p703, %p704
      %p706 = scmp.ne.s32.totalorder %s692, %s693
      %p707 = scmp.eq.s32.totalorder %s38, 1
      %p708 = por %p706, %p707
      %p710 = scmp.ne.s32.totalorder %s693, %s709
      %p711 = scmp.eq.s32.totalorder %s38, 0
      %p712 = por %p710, %p711
      %p713 = scmp.le.s32.totalorder 1, %s32
      %p714 = scmp.lt.s32.totalorder %s32, 3
      %p715 = pnand %p713, %p714
      %p716 = pneg %p715
      // Predicated region
      $region9: #{tpu_custom_call.1} parent=5 // pred_check
        _
      $region10: #{tpu_custom_call.1} parent=5 // pred_check_branch
        %718 = sbr.rel (%p715) target = $region12
      $region11: #{tpu_custom_call.1} parent=5 // pred_region
        %s719 = ssub.s32 %s32, 1
        // Predicated region
        $region13: #{tpu_custom_call.1} parent=11 // pred_check
          %p720 = pneg %p70
        $region14: #{tpu_custom_call.1} parent=11 // pred_check_branch
          %722 = sbr.rel (%p720) target = $region16
        $region15: #{tpu_custom_call.1} parent=11 // pred_region
          %s723 = smul.u32 2, %s41
          %p724 = scmp.lt.s32.totalorder %s723, 1
          %s725 = scalar_select %p724, %s723, 1
          %s726 = scalar_lea.vmem %s0, %s725
          %s727 = smul.u32 2, %s41
        $region16: #{tpu_custom_call.1} parent=11 // pred_fallthru
          _
        // Predicated region
        $region17: #{tpu_custom_call.1} parent=11 // pred_check
          %p728 = pneg %p96
        $region18: #{tpu_custom_call.1} parent=11 // pred_check_branch
          %730 = sbr.rel (%p728) target = $region20
        $region19: #{tpu_custom_call.1} parent=11 // pred_region
          %s731 = smul.u32 2, %s41
          %p732 = scmp.lt.s32.totalorder %s731, 1
          %s733 = scalar_select %p732, %s731, 1
          %s734 = smul.addr %s733, 8
          %s735 = scalar_lea.vmem %s1, %s734
          %s736 = smul.u32 2, %s41
        $region20: #{tpu_custom_call.1} parent=11 // pred_fallthru
          _
        // Predicated region
        $region21: #{tpu_custom_call.1} parent=11 // pred_check
          %p737 = pneg %p117
        $region22: #{tpu_custom_call.1} parent=11 // pred_check_branch
          %739 = sbr.rel (%p737) target = $region24
        $region23: #{tpu_custom_call.1} parent=11 // pred_region
          _
        $region24: #{tpu_custom_call.1} parent=11 // pred_fallthru
          _
        // Predicated region
        $region25: #{tpu_custom_call.1} parent=11 // pred_check
          %p740 = pneg %p138
        $region26: #{tpu_custom_call.1} parent=11 // pred_check_branch
          %742 = sbr.rel (%p740) target = $region28
        $region27: #{tpu_custom_call.1} parent=11 // pred_region
          _
        $region28: #{tpu_custom_call.1} parent=11 // pred_fallthru
          _
        // Predicated region
        $region29: #{tpu_custom_call.1} parent=11 // pred_check
          %p743 = pneg %p159
        $region30: #{tpu_custom_call.1} parent=11 // pred_check_branch
          %745 = sbr.rel (%p743) target = $region32
        $region31: #{tpu_custom_call.1} parent=11 // pred_region
          _
        $region32: #{tpu_custom_call.1} parent=11 // pred_fallthru
          _
      $region12: #{tpu_custom_call.1} parent=5 // pred_fallthru
        _
      %p746 = scmp.lt.s32.totalorder %s32, 2
      // Predicated region
      $region33: #{tpu_custom_call.1} parent=5 // pred_check
        %p747 = pneg %p746
      $region34: #{tpu_custom_call.1} parent=5 // pred_check_branch
        %749 = sbr.rel (%p747) target = $region36
      $region35: #{tpu_custom_call.1} parent=5 // pred_region
        // Predicated region
        $region37: #{tpu_custom_call.1} parent=35 // pred_check
          %p750 = pneg %p179
        $region38: #{tpu_custom_call.1} parent=35 // pred_check_branch
          %752 = sbr.rel (%p750) target = $region40
        $region39: #{tpu_custom_call.1} parent=35 // pred_region
          %p753 = scmp.lt.s32.totalorder %s40, 1
          %s754 = scalar_select %p753, %s40, 1
          %s755 = smul.addr %s754, 4
          %s756 = smul.addr %s755, 4
          %s757 = scalar_lea.vmem %s5, %s756
        $region40: #{tpu_custom_call.1} parent=35 // pred_fallthru
          _
        // Predicated region
        $region41: #{tpu_custom_call.1} parent=35 // pred_check
          %p758 = pneg %p205
        $region42: #{tpu_custom_call.1} parent=35 // pred_check_branch
          %760 = sbr.rel (%p758) target = $region44
        $region43: #{tpu_custom_call.1} parent=35 // pred_region
          %p761 = scmp.lt.s32.totalorder %s40, 1
          %s762 = scalar_select %p761, %s40, 1
          %s763 = scalar_lea.vmem %s6, %s762
        $region44: #{tpu_custom_call.1} parent=35 // pred_fallthru
          _
        // Predicated region
        $region45: #{tpu_custom_call.1} parent=35 // pred_check
          %p764 = pneg %p231
        $region46: #{tpu_custom_call.1} parent=35 // pred_check_branch
          %766 = sbr.rel (%p764) target = $region48
        $region47: #{tpu_custom_call.1} parent=35 // pred_region
          %p767 = scmp.lt.s32.totalorder %s40, 1
          %s768 = scalar_select %p767, %s40, 1
          %s769 = smul.addr %s768, 4
          %s770 = smul.addr %s769, 4
          %s771 = scalar_lea.vmem %s7, %s770
        $region48: #{tpu_custom_call.1} parent=35 // pred_fallthru
          _
        // Predicated region
        $region49: #{tpu_custom_call.1} parent=35 // pred_check
          %p772 = pneg %p257
        $region50: #{tpu_custom_call.1} parent=35 // pred_check_branch
          %774 = sbr.rel (%p772) target = $region52
        $region51: #{tpu_custom_call.1} parent=35 // pred_region
          %p775 = scmp.lt.s32.totalorder %s40, 1
          %s776 = scalar_select %p775, %s40, 1
          %s777 = scalar_lea.vmem %s8, %s776
        $region52: #{tpu_custom_call.1} parent=35 // pred_fallthru
          _
        // Predicated region
        $region53: #{tpu_custom_call.1} parent=35 // pred_check
          %p778 = pneg %p283
        $region54: #{tpu_custom_call.1} parent=35 // pred_check_branch
          %780 = sbr.rel (%p778) target = $region56
        $region55: #{tpu_custom_call.1} parent=35 // pred_region
          %p781 = scmp.lt.s32.totalorder %s40, 1
          %s782 = scalar_select %p781, %s40, 1
          %s783 = smul.addr %s782, 4
          %s784 = smul.addr %s783, 4
          %s785 = scalar_lea.vmem %s9, %s784
        $region56: #{tpu_custom_call.1} parent=35 // pred_fallthru
          _
        // Predicated region
        $region57: #{tpu_custom_call.1} parent=35 // pred_check
          %p786 = pneg %p309
        $region58: #{tpu_custom_call.1} parent=35 // pred_check_branch
          %788 = sbr.rel (%p786) target = $region60
        $region59: #{tpu_custom_call.1} parent=35 // pred_region
          %p789 = scmp.lt.s32.totalorder %s40, 1
          %s790 = scalar_select %p789, %s40, 1
          %s791 = scalar_lea.vmem %s10, %s790
        $region60: #{tpu_custom_call.1} parent=35 // pred_fallthru
          _
        // Predicated region
        $region61: #{tpu_custom_call.1} parent=35 // pred_check
          %p792 = pneg %p335
        $region62: #{tpu_custom_call.1} parent=35 // pred_check_branch
          %794 = sbr.rel (%p792) target = $region64
        $region63: #{tpu_custom_call.1} parent=35 // pred_region
          %p795 = scmp.lt.s32.totalorder %s40, 1
          %s796 = scalar_select %p795, %s40, 1
          %s797 = smul.addr %s796, 4
          %s798 = smul.addr %s797, 4
          %s799 = scalar_lea.vmem %s11, %s798
        $region64: #{tpu_custom_call.1} parent=35 // pred_fallthru
          _
        // Predicated region
        $region65: #{tpu_custom_call.1} parent=35 // pred_check
          %p800 = pneg %p361
        $region66: #{tpu_custom_call.1} parent=35 // pred_check_branch
          %802 = sbr.rel (%p800) target = $region68
        $region67: #{tpu_custom_call.1} parent=35 // pred_region
          %p803 = scmp.lt.s32.totalorder %s40, 1
          %s804 = scalar_select %p803, %s40, 1
          %s805 = scalar_lea.vmem %s12, %s804
        $region68: #{tpu_custom_call.1} parent=35 // pred_fallthru
          _
        // Predicated region
        $region69: #{tpu_custom_call.1} parent=35 // pred_check
          %p806 = pneg %p387
        $region70: #{tpu_custom_call.1} parent=35 // pred_check_branch
          %808 = sbr.rel (%p806) target = $region72
        $region71: #{tpu_custom_call.1} parent=35 // pred_region
          %p809 = scmp.lt.s32.totalorder %s40, 1
          %s810 = scalar_select %p809, %s40, 1
          %s811 = smul.addr %s810, 4
          %s812 = smul.addr %s811, 4
          %s813 = scalar_lea.vmem %s13, %s812
        $region72: #{tpu_custom_call.1} parent=35 // pred_fallthru
          _
        // Predicated region
        $region73: #{tpu_custom_call.1} parent=35 // pred_check
          %p814 = pneg %p413
        $region74: #{tpu_custom_call.1} parent=35 // pred_check_branch
          %816 = sbr.rel (%p814) target = $region76
        $region75: #{tpu_custom_call.1} parent=35 // pred_region
          %p817 = scmp.lt.s32.totalorder %s40, 1
          %s818 = scalar_select %p817, %s40, 1
          %s819 = scalar_lea.vmem %s14, %s818
        $region76: #{tpu_custom_call.1} parent=35 // pred_fallthru
          _
        // Predicated region
        $region77: #{tpu_custom_call.1} parent=35 // pred_check
          %p820 = pneg %p439
        $region78: #{tpu_custom_call.1} parent=35 // pred_check_branch
          %822 = sbr.rel (%p820) target = $region80
        $region79: #{tpu_custom_call.1} parent=35 // pred_region
          %p823 = scmp.lt.s32.totalorder %s40, 1
          %s824 = scalar_select %p823, %s40, 1
          %s825 = smul.addr %s824, 64
          %s826 = smul.addr %s825, 4
          %s827 = scalar_lea.vmem %s15, %s826
        $region80: #{tpu_custom_call.1} parent=35 // pred_fallthru
          _
        // Predicated region
        $region81: #{tpu_custom_call.1} parent=35 // pred_check
          %p828 = pneg %p465
        $region82: #{tpu_custom_call.1} parent=35 // pred_check_branch
          %830 = sbr.rel (%p828) target = $region84
        $region83: #{tpu_custom_call.1} parent=35 // pred_region
          %p831 = scmp.lt.s32.totalorder %s40, 1
          %s832 = scalar_select %p831, %s40, 1
          %s833 = smul.addr %s832, 16
          %s834 = scalar_lea.vmem %s16, %s833
        $region84: #{tpu_custom_call.1} parent=35 // pred_fallthru
          _
        // Predicated region
        $region85: #{tpu_custom_call.1} parent=35 // pred_check
          %p835 = pneg %p491
        $region86: #{tpu_custom_call.1} parent=35 // pred_check_branch
          %837 = sbr.rel (%p835) target = $region88
        $region87: #{tpu_custom_call.1} parent=35 // pred_region
          %p838 = scmp.lt.s32.totalorder %s40, 1
          %s839 = scalar_select %p838, %s40, 1
          %s840 = smul.addr %s839, 256
          %s841 = smul.addr %s840, 4
          %s842 = scalar_lea.vmem %s17, %s841
        $region88: #{tpu_custom_call.1} parent=35 // pred_fallthru
          _
        // Predicated region
        $region89: #{tpu_custom_call.1} parent=35 // pred_check
          %p843 = pneg %p517
        $region90: #{tpu_custom_call.1} parent=35 // pred_check_branch
          %845 = sbr.rel (%p843) target = $region92
        $region91: #{tpu_custom_call.1} parent=35 // pred_region
          %p846 = scmp.lt.s32.totalorder %s40, 1
          %s847 = scalar_select %p846, %s40, 1
          %s848 = scalar_lea.vmem %s18, %s847
        $region92: #{tpu_custom_call.1} parent=35 // pred_fallthru
          _
        // Predicated region
        $region93: #{tpu_custom_call.1} parent=35 // pred_check
          %p849 = pneg %p543
        $region94: #{tpu_custom_call.1} parent=35 // pred_check_branch
          %851 = sbr.rel (%p849) target = $region96
        $region95: #{tpu_custom_call.1} parent=35 // pred_region
          %p852 = scmp.lt.s32.totalorder %s40, 1
          %s853 = scalar_select %p852, %s40, 1
          %s854 = scalar_lea.vmem %s19, %s853
        $region96: #{tpu_custom_call.1} parent=35 // pred_fallthru
          _
        // Predicated region
        $region97: #{tpu_custom_call.1} parent=35 // pred_check
          %p855 = pneg %p569
        $region98: #{tpu_custom_call.1} parent=35 // pred_check_branch
          %857 = sbr.rel (%p855) target = $region100
        $region99: #{tpu_custom_call.1} parent=35 // pred_region
          %p858 = scmp.lt.s32.totalorder %s40, 1
          %s859 = scalar_select %p858, %s40, 1
          %s860 = scalar_lea.vmem %s20, %s859
        $region100: #{tpu_custom_call.1} parent=35 // pred_fallthru
          _
        // Predicated region
        $region101: #{tpu_custom_call.1} parent=35 // pred_check
          %p861 = pneg %p595
        $region102: #{tpu_custom_call.1} parent=35 // pred_check_branch
          %863 = sbr.rel (%p861) target = $region104
        $region103: #{tpu_custom_call.1} parent=35 // pred_region
          %p864 = scmp.lt.s32.totalorder %s40, 1
          %s865 = scalar_select %p864, %s40, 1
          %s866 = scalar_lea.vmem %s21, %s865
        $region104: #{tpu_custom_call.1} parent=35 // pred_fallthru
          _
        // Predicated region
        $region105: #{tpu_custom_call.1} parent=35 // pred_check
          %p867 = pneg %p621
        $region106: #{tpu_custom_call.1} parent=35 // pred_check_branch
          %869 = sbr.rel (%p867) target = $region108
        $region107: #{tpu_custom_call.1} parent=35 // pred_region
          %p870 = scmp.lt.s32.totalorder %s40, 1
          %s871 = scalar_select %p870, %s40, 1
          %s872 = scalar_lea.vmem %s22, %s871
        $region108: #{tpu_custom_call.1} parent=35 // pred_fallthru
          _
        // Predicated region
        $region109: #{tpu_custom_call.1} parent=35 // pred_check
          %p873 = pneg %p647
        $region110: #{tpu_custom_call.1} parent=35 // pred_check_branch
          %875 = sbr.rel (%p873) target = $region112
        $region111: #{tpu_custom_call.1} parent=35 // pred_region
          %p876 = scmp.lt.s32.totalorder %s40, 1
          %s877 = scalar_select %p876, %s40, 1
          %s878 = scalar_lea.vmem %s23, %s877
        $region112: #{tpu_custom_call.1} parent=35 // pred_fallthru
          _
        // Predicated region
        $region113: #{tpu_custom_call.1} parent=35 // pred_check
          %p879 = pneg %p673
        $region114: #{tpu_custom_call.1} parent=35 // pred_check_branch
          %881 = sbr.rel (%p879) target = $region116
        $region115: #{tpu_custom_call.1} parent=35 // pred_region
          %p882 = scmp.lt.s32.totalorder %s40, 1
          %s883 = scalar_select %p882, %s40, 1
          %s884 = scalar_lea.vmem %s24, %s883
        $region116: #{tpu_custom_call.1} parent=35 // pred_fallthru
          _
      $region36: #{tpu_custom_call.1} parent=5 // pred_fallthru
        _
      %p885 = scmp.le.s32.totalorder 1, %s32
      %p886 = scmp.lt.s32.totalorder %s32, 3
      %p887 = pnand %p885, %p886
      %p888 = pneg %p887
      // Predicated region
      $region117: #{tpu_custom_call.1} parent=5 // pred_check
        _
      $region118: #{tpu_custom_call.1} parent=5 // pred_check_branch
        %890 = sbr.rel (%p887) target = $region120
      $region119: #{tpu_custom_call.1} parent=5 // pred_region
        %s891 = ssub.s32 %s32, 1
        %s892 = smul.u32 2, %s41
        %p893 = scmp.lt.s32.totalorder %s892, 1
        %s894 = scalar_select %p893, %s892, 1
        %s895 = scalar_lea.vmem %s0, %s894
        %p896 = pneg %p70
        %p897 = pneg %p67
        %s898 = smul.u32 2, %s41
        %p899 = scmp.lt.s32.totalorder %s898, 1
        %s900 = scalar_select %p899, %s898, 1
        %s901 = smul.addr %s900, 8
        %s902 = scalar_lea.vmem %s1, %s901
        %p903 = pneg %p96
        %p904 = pneg %p93
        %p905 = pneg %p117
        %p906 = pneg %p114
        %p907 = pneg %p138
        %p908 = pneg %p135
        %p909 = pneg %p159
        %p910 = pneg %p156
        %p911 = scmp.lt.s32.totalorder %s42, 1
        %s912 = scalar_select %p911, %s42, 1
        %s913 = smul.addr %s912, 4
        %s914 = smul.addr %s913, 4
        %s915 = scalar_lea.vmem %s5, %s914
        %p916 = pneg %p185
        %p917 = pneg %p182
        %p918 = scmp.lt.s32.totalorder %s42, 1
        %s919 = scalar_select %p918, %s42, 1
        %s920 = scalar_lea.vmem %s6, %s919
        %p921 = pneg %p211
        %p922 = pneg %p208
        %p923 = scmp.lt.s32.totalorder %s42, 1
        %s924 = scalar_select %p923, %s42, 1
        %s925 = smul.addr %s924, 4
        %s926 = smul.addr %s925, 4
        %s927 = scalar_lea.vmem %s7, %s926
        %p928 = pneg %p237
        %p929 = pneg %p234
        %p930 = scmp.lt.s32.totalorder %s42, 1
        %s931 = scalar_select %p930, %s42, 1
        %s932 = scalar_lea.vmem %s8, %s931
        %p933 = pneg %p263
        %p934 = pneg %p260
        %p935 = scmp.lt.s32.totalorder %s42, 1
        %s936 = scalar_select %p935, %s42, 1
        %s937 = smul.addr %s936, 4
        %s938 = smul.addr %s937, 4
        %s939 = scalar_lea.vmem %s9, %s938
        %p940 = pneg %p289
        %p941 = pneg %p286
        %p942 = scmp.lt.s32.totalorder %s42, 1
        %s943 = scalar_select %p942, %s42, 1
        %s944 = scalar_lea.vmem %s10, %s943
        %p945 = pneg %p315
        %p946 = pneg %p312
        %p947 = scmp.lt.s32.totalorder %s42, 1
        %s948 = scalar_select %p947, %s42, 1
        %s949 = smul.addr %s948, 4
        %s950 = smul.addr %s949, 4
        %s951 = scalar_lea.vmem %s11, %s950
        %p952 = pneg %p341
        %p953 = pneg %p338
        %p954 = scmp.lt.s32.totalorder %s42, 1
        %s955 = scalar_select %p954, %s42, 1
        %s956 = scalar_lea.vmem %s12, %s955
        %p957 = pneg %p367
        %p958 = pneg %p364
        %p959 = scmp.lt.s32.totalorder %s42, 1
        %s960 = scalar_select %p959, %s42, 1
        %s961 = smul.addr %s960, 4
        %s962 = smul.addr %s961, 4
        %s963 = scalar_lea.vmem %s13, %s962
        %p964 = pneg %p393
        %p965 = pneg %p390
        %p966 = scmp.lt.s32.totalorder %s42, 1
        %s967 = scalar_select %p966, %s42, 1
        %s968 = scalar_lea.vmem %s14, %s967
        %p969 = pneg %p419
        %p970 = pneg %p416
        %p971 = scmp.lt.s32.totalorder %s42, 1
        %s972 = scalar_select %p971, %s42, 1
        %s973 = smul.addr %s972, 64
        %s974 = smul.addr %s973, 4
        %s975 = scalar_lea.vmem %s15, %s974
        %p976 = pneg %p445
        %p977 = pneg %p442
        %p978 = scmp.lt.s32.totalorder %s42, 1
        %s979 = scalar_select %p978, %s42, 1
        %s980 = smul.addr %s979, 16
        %s981 = scalar_lea.vmem %s16, %s980
        %p982 = pneg %p471
        %p983 = pneg %p468
        %p984 = scmp.lt.s32.totalorder %s42, 1
        %s985 = scalar_select %p984, %s42, 1
        %s986 = smul.addr %s985, 256
        %s987 = smul.addr %s986, 4
        %s988 = scalar_lea.vmem %s17, %s987
        %p989 = pneg %p497
        %p990 = pneg %p494
        %p991 = scmp.lt.s32.totalorder %s42, 1
        %s992 = scalar_select %p991, %s42, 1
        %s993 = scalar_lea.vmem %s18, %s992
        %p994 = pneg %p523
        %p995 = pneg %p520
        %p996 = scmp.lt.s32.totalorder %s42, 1
        %s997 = scalar_select %p996, %s42, 1
        %s998 = scalar_lea.vmem %s19, %s997
        %p999 = pneg %p549
        %p1000 = pneg %p546
        %p1001 = scmp.lt.s32.totalorder %s42, 1
        %s1002 = scalar_select %p1001, %s42, 1
        %s1003 = scalar_lea.vmem %s20, %s1002
        %p1004 = pneg %p575
        %p1005 = pneg %p572
        %p1006 = scmp.lt.s32.totalorder %s42, 1
        %s1007 = scalar_select %p1006, %s42, 1
        %s1008 = scalar_lea.vmem %s21, %s1007
        %p1009 = pneg %p601
        %p1010 = pneg %p598
        %p1011 = scmp.lt.s32.totalorder %s42, 1
        %s1012 = scalar_select %p1011, %s42, 1
        %s1013 = scalar_lea.vmem %s22, %s1012
        %p1014 = pneg %p627
        %p1015 = pneg %p624
        %p1016 = scmp.lt.s32.totalorder %s42, 1
        %s1017 = scalar_select %p1016, %s42, 1
        %s1018 = scalar_lea.vmem %s23, %s1017
        %p1019 = pneg %p653
        %p1020 = pneg %p650
        %p1021 = scmp.lt.s32.totalorder %s42, 1
        %s1022 = scalar_select %p1021, %s42, 1
        %s1023 = scalar_lea.vmem %s24, %s1022
        %p1024 = pneg %p679
        %p1025 = pneg %p676
        %p1026 = pneg %p705
        %p1027 = pneg %p702
        %s1028 = smul.u32 2, %s41
        %p1029 = scmp.lt.s32.totalorder %s1028, 1
        %s1030 = scalar_select %p1029, %s1028, 1
        %s1031 = scalar_lea.vmem %s0, %s1030
        %s1032 = smul.u32 2, %s41
        %s1033 = smul.u32 2, %s41
        %p1034 = scmp.lt.s32.totalorder %s1033, 1
        %s1035 = scalar_select %p1034, %s1033, 1
        %s1036 = smul.addr %s1035, 8
        %s1037 = scalar_lea.vmem %s1, %s1036
        %s1038 = smul.u32 2, %s41
        %p1039 = scmp.lt.s32.totalorder %s42, 1
        %s1040 = scalar_select %p1039, %s42, 1
        %s1041 = smul.addr %s1040, 4
        %s1042 = smul.addr %s1041, 4
        %s1043 = scalar_lea.vmem %s5, %s1042
        %p1044 = scmp.lt.s32.totalorder %s42, 1
        %s1045 = scalar_select %p1044, %s42, 1
        %s1046 = scalar_lea.vmem %s6, %s1045
        %p1047 = scmp.lt.s32.totalorder %s42, 1
        %s1048 = scalar_select %p1047, %s42, 1
        %s1049 = smul.addr %s1048, 4
        %s1050 = smul.addr %s1049, 4
        %s1051 = scalar_lea.vmem %s7, %s1050
        %p1052 = scmp.lt.s32.totalorder %s42, 1
        %s1053 = scalar_select %p1052, %s42, 1
        %s1054 = scalar_lea.vmem %s8, %s1053
        %p1055 = scmp.lt.s32.totalorder %s42, 1
        %s1056 = scalar_select %p1055, %s42, 1
        %s1057 = smul.addr %s1056, 4
        %s1058 = smul.addr %s1057, 4
        %s1059 = scalar_lea.vmem %s9, %s1058
        %p1060 = scmp.lt.s32.totalorder %s42, 1
        %s1061 = scalar_select %p1060, %s42, 1
        %s1062 = scalar_lea.vmem %s10, %s1061
        %p1063 = scmp.lt.s32.totalorder %s42, 1
        %s1064 = scalar_select %p1063, %s42, 1
        %s1065 = smul.addr %s1064, 4
        %s1066 = smul.addr %s1065, 4
        %s1067 = scalar_lea.vmem %s11, %s1066
        %p1068 = scmp.lt.s32.totalorder %s42, 1
        %s1069 = scalar_select %p1068, %s42, 1
        %s1070 = scalar_lea.vmem %s12, %s1069
        %p1071 = scmp.lt.s32.totalorder %s42, 1
        %s1072 = scalar_select %p1071, %s42, 1
        %s1073 = smul.addr %s1072, 4
        %s1074 = smul.addr %s1073, 4
        %s1075 = scalar_lea.vmem %s13, %s1074
        %p1076 = scmp.lt.s32.totalorder %s42, 1
        %s1077 = scalar_select %p1076, %s42, 1
        %s1078 = scalar_lea.vmem %s14, %s1077
        %p1079 = scmp.lt.s32.totalorder %s42, 1
        %s1080 = scalar_select %p1079, %s42, 1
        %s1081 = smul.addr %s1080, 64
        %s1082 = smul.addr %s1081, 4
        %s1083 = scalar_lea.vmem %s15, %s1082
        %p1084 = scmp.lt.s32.totalorder %s42, 1
        %s1085 = scalar_select %p1084, %s42, 1
        %s1086 = smul.addr %s1085, 16
        %s1087 = scalar_lea.vmem %s16, %s1086
        %p1088 = scmp.lt.s32.totalorder %s42, 1
        %s1089 = scalar_select %p1088, %s42, 1
        %s1090 = smul.addr %s1089, 256
        %s1091 = smul.addr %s1090, 4
        %s1092 = scalar_lea.vmem %s17, %s1091
        %p1093 = scmp.lt.s32.totalorder %s42, 1
        %s1094 = scalar_select %p1093, %s42, 1
        %s1095 = scalar_lea.vmem %s18, %s1094
        %p1096 = scmp.lt.s32.totalorder %s42, 1
        %s1097 = scalar_select %p1096, %s42, 1
        %s1098 = scalar_lea.vmem %s19, %s1097
        %p1099 = scmp.lt.s32.totalorder %s42, 1
        %s1100 = scalar_select %p1099, %s42, 1
        %s1101 = scalar_lea.vmem %s20, %s1100
        %p1102 = scmp.lt.s32.totalorder %s42, 1
        %s1103 = scalar_select %p1102, %s42, 1
        %s1104 = scalar_lea.vmem %s21, %s1103
        %p1105 = scmp.lt.s32.totalorder %s42, 1
        %s1106 = scalar_select %p1105, %s42, 1
        %s1107 = scalar_lea.vmem %s22, %s1106
        %p1108 = scmp.lt.s32.totalorder %s42, 1
        %s1109 = scalar_select %p1108, %s42, 1
        %s1110 = scalar_lea.vmem %s23, %s1109
        %p1111 = scmp.lt.s32.totalorder %s42, 1
        %s1112 = scalar_select %p1111, %s42, 1
        %s1113 = scalar_lea.vmem %s24, %s1112
        %s1114 = smul.u32 2, %s41
        %p1116 = scmp.eq.s32.totalorder %s42, 0
        // Predicated region
        $region121: #{tpu_custom_call.1} parent=119 // pred_check
          %p1117 = pneg %p1116
        $region122: #{tpu_custom_call.1} parent=119 // pred_check_branch
          %1119 = sbr.rel (%p1117) target = $region124
        $region123: #{tpu_custom_call.1} parent=119 // pred_region
          %v1120 = vld [vmem:[%s1031] sm:$0x1]
          %v1121 = vld [vmem:[%s1031 + $0x1] sm:$0x1]
          %v1122 = vld [vmem:[%s3] sm:$0xf]
          %v1123 = vld [vmem:[%s3 + $0x4] sm:$0xf]
          %v1124 = vld [vmem:[%s3 + $0x8] sm:$0xf]
          %v1125 = vld [vmem:[%s3 + $0xc] sm:$0xf]
          %v1126 = vpack.c.bf16 %v1120, %v1120
          %v1127 = vpack.c.bf16 %v1121, %v1121
          %v1128 = vld [vmem:[%s4] sm:$0x1]
          %v1130 = vlaneseq
          %v1131 = vshrl.u32 %v1130, 7
          %v1132 = vsub.s32 0, %v1131
          %v1133 = vrot.slane %v1128, %v1132
          %v1137 = vunpack.c.l.b16 %v1126
          %v1138 = vunpack.c.l.b16 %v1127
          %v1139 = vrot.slane %v1138, 7
          %vm1140 = vcmask 1041409
          %v1141 = vsel %vm1140, %v1139, %v1137
          %v1142 = vpack.c.b16 %v1141, %v1141
          %v1147 = vunpack.c.l.b16 %v1122
          %v1148 = vunpack.c.l.b16 %v1123
          %v1149 = vunpack.c.l.b16 %v1124
          %v1150 = vunpack.c.l.b16 %v1125
          %v1151 = vpack.c.b16 %v1148, %v1147
          %v1152 = vpack.c.b16 %v1150, %v1149
          %vm1155 = vcmask 261120
          %v1157 = vsel %vm1155, %v1142, 0
          %1159 = vmatprep.subr.bf16.mxu0 0
          %1160 = vmatpush1.bf16.msra.mxu0 %v1151
          %1161 = vmatprep.subr.bf16.mxu0 0
          %1162 = vmatpush1.bf16.msra.mxu0 %v1152
          %1163 = vmatprep.subr.bf16.mxu0 0
          %1164 = vmatpush1.bf16.msra.mxu0 0
          %1165 = vmatprep.subr.bf16.mxu0 0
          %1166 = vmatpush1.bf16.msra.mxu0 0
          %1167 = vmatprep.subr.bf16.mxu0 0
          %1168 = vmatpush1.bf16.msra.mxu0 0
          %1169 = vmatprep.subr.bf16.mxu0 0
          %1170 = vmatpush1.bf16.msra.mxu0 0
          %1171 = vmatprep.subr.bf16.mxu0 0
          %1172 = vmatpush1.bf16.msra.mxu0 0
          %1173 = vmatprep.subr.bf16.mxu0 0
          %1174 = vmatpush1.bf16.msra.mxu0 0
          %1175 = vmatprep.subr.bf16.mxu0 0
          %1176 = vmatpush1.bf16.msra.mxu0 0
          %1177 = vmatprep.subr.bf16.mxu0 0
          %1178 = vmatpush1.bf16.msra.mxu0 0
          %1179 = vmatprep.subr.bf16.mxu0 0
          %1180 = vmatpush1.bf16.msra.mxu0 0
          %1181 = vmatprep.subr.bf16.mxu0 0
          %1182 = vmatpush1.bf16.msra.mxu0 0
          %1183 = vmatprep.subr.bf16.mxu0 0
          %1184 = vmatpush1.bf16.msra.mxu0 0
          %1185 = vmatprep.subr.bf16.mxu0 0
          %1186 = vmatpush1.bf16.msra.mxu0 0
          %1187 = vmatprep.subr.bf16.mxu0 0
          %1188 = vmatpush1.bf16.msra.mxu0 0
          %1189 = vmatprep.subr.bf16.mxu0 0
          %1190 = vmatpush1.bf16.msra.mxu0 0
          %1191 = vmatprep.mubr.bf16.mxu0 0
          %1192 = vmatmul.mubr.bf16.gmra.mrb[0].mxu0 %v1157
          %v1193 = vpop.f32.mrb[0].mxu0
          %v1194 = vadd.f32 %v1133, %v1193
          %v1195 = vpop.f32.mrb[0].mxu0
          %v1196 = vpop.f32.mrb[0].mxu0
          %v1197 = vpop.f32.mrb[0].mxu0
          %1198 = vdwg.mxu0
          %vm1199 = vcmask 254976
          %1200 = vst.msk [vmem:[#allocation3] sm:$0x3] %vm1199, %v1194
          %v1201 = vld [vmem:[%s1037] sm:$0xff]
          %v1202 = vld [vmem:[%s1037 + $0x8] sm:$0xff]
          %v1203 = vld [vmem:[%s2] sm:$0xff]
          %v1204 = vadd.f32 %v1201, %v1203
          %v1205 = vadd.f32 %v1202, %v1203
          %1206 = vst.msk [vmem:[#allocation2] sm:$0xff] %vm1155, %v1204
          %1207 = vst.msk [vmem:[#allocation2 + $0x8] sm:$0xff] %vm1155, %v1205
        $region124: #{tpu_custom_call.1} parent=119 // pred_fallthru
          _
        %v1208 = vld [vmem:[#allocation2] sm:$0xff]
        %v1209 = vld [vmem:[#allocation2 + $0x8] sm:$0xff]
        %v1210 = vld [vmem:[#allocation3] sm:$0x3]
        %v1211 = vlaneseq
        %v1212 = vshrl.u32 %v1211, 7
        %v1213 = vlaneseq
        %v1214 = vand.u32 %v1213, 127
        %vm1215 = vcmp.le.s32.totalorder %v1214, %v1212
        %v1216 = vsel %vm1215, 0.0, -1e+09
        %v1217 = vpack.c.bf16 %v1209, %v1208
        %v1218 = vld [vmem:[%s1043] sm:$0xf]
        %v1219 = vld [vmem:[%s1043 + $0x4] sm:$0xf]
        %v1220 = vld [vmem:[%s1043 + $0x8] sm:$0xf]
        %v1221 = vld [vmem:[%s1043 + $0xc] sm:$0xf]
        %v1222 = vld [vmem:[%s1046] sm:$0x1]
        %v1224 = vlaneseq
        %v1225 = vshrl.u32 %v1224, 7
        %v1226 = vsub.s32 0, %v1225
        %v1227 = vrot.slane %v1222, %v1226
        %v1233 = vunpack.c.l.b16 %v1218
        %v1234 = vunpack.c.l.b16 %v1219
        %v1235 = vunpack.c.l.b16 %v1220
        %v1236 = vunpack.c.l.b16 %v1221
        %v1237 = vpack.c.b16 %v1234, %v1233
        %v1238 = vpack.c.b16 %v1236, %v1235
        %vm1241 = vcmask 261120
        %v1243 = vsel %vm1241, %v1217, 0
        %1245 = vmatprep.subr.bf16.mxu0 0
        %1246 = vmatpush1.bf16.msra.mxu0 %v1237
        %1247 = vmatprep.subr.bf16.mxu0 0
        %1248 = vmatpush1.bf16.msra.mxu0 %v1238
        %1249 = vmatprep.subr.bf16.mxu0 0
        %1250 = vmatpush1.bf16.msra.mxu0 0
        %1251 = vmatprep.subr.bf16.mxu0 0
        %1252 = vmatpush1.bf16.msra.mxu0 0
        %1253 = vmatprep.subr.bf16.mxu0 0
        %1254 = vmatpush1.bf16.msra.mxu0 0
        %1255 = vmatprep.subr.bf16.mxu0 0
        %1256 = vmatpush1.bf16.msra.mxu0 0
        %1257 = vmatprep.subr.bf16.mxu0 0
        %1258 = vmatpush1.bf16.msra.mxu0 0
        %1259 = vmatprep.subr.bf16.mxu0 0
        %1260 = vmatpush1.bf16.msra.mxu0 0
        %1261 = vmatprep.subr.bf16.mxu0 0
        %1262 = vmatpush1.bf16.msra.mxu0 0
        %1263 = vmatprep.subr.bf16.mxu0 0
        %1264 = vmatpush1.bf16.msra.mxu0 0
        %1265 = vmatprep.subr.bf16.mxu0 0
        %1266 = vmatpush1.bf16.msra.mxu0 0
        %1267 = vmatprep.subr.bf16.mxu0 0
        %1268 = vmatpush1.bf16.msra.mxu0 0
        %1269 = vmatprep.subr.bf16.mxu0 0
        %1270 = vmatpush1.bf16.msra.mxu0 0
        %1271 = vmatprep.subr.bf16.mxu0 0
        %1272 = vmatpush1.bf16.msra.mxu0 0
        %1273 = vmatprep.subr.bf16.mxu0 0
        %1274 = vmatpush1.bf16.msra.mxu0 0
        %1275 = vmatprep.subr.bf16.mxu0 0
        %1276 = vmatpush1.bf16.msra.mxu0 0
        %1277 = vmatprep.mubr.bf16.mxu0 0
        %1278 = vmatmul.mubr.bf16.gmra.mrb[0].mxu0 %v1243
        %v1279 = vpop.f32.mrb[0].mxu0
        %v1280 = vadd.f32 %v1227, %v1279
        %v1281 = vpop.f32.mrb[0].mxu0
        %v1282 = vpop.f32.mrb[0].mxu0
        %v1283 = vadd.f32 %v1227, %v1282
        %v1284 = vpop.f32.mrb[0].mxu0
        %1285 = vdwg.mxu0
        %v1286 = vld [vmem:[%s1051] sm:$0xf]
        %v1287 = vld [vmem:[%s1051 + $0x4] sm:$0xf]
        %v1288 = vld [vmem:[%s1051 + $0x8] sm:$0xf]
        %v1289 = vld [vmem:[%s1051 + $0xc] sm:$0xf]
        %v1290 = vld [vmem:[%s1054] sm:$0x1]
        %v1292 = vlaneseq
        %v1293 = vshrl.u32 %v1292, 7
        %v1294 = vsub.s32 0, %v1293
        %v1295 = vrot.slane %v1290, %v1294
        %v1301 = vunpack.c.l.b16 %v1286
        %v1302 = vunpack.c.l.b16 %v1287
        %v1303 = vunpack.c.l.b16 %v1288
        %v1304 = vunpack.c.l.b16 %v1289
        %v1305 = vpack.c.b16 %v1302, %v1301
        %v1306 = vpack.c.b16 %v1304, %v1303
        %1309 = vmatprep.subr.bf16.mxu0 0
        %1310 = vmatpush1.bf16.msra.mxu0 %v1305
        %1311 = vmatprep.subr.bf16.mxu0 0
        %1312 = vmatpush1.bf16.msra.mxu0 %v1306
        %1313 = vmatprep.subr.bf16.mxu0 0
        %1314 = vmatpush1.bf16.msra.mxu0 0
        %1315 = vmatprep.subr.bf16.mxu0 0
        %1316 = vmatpush1.bf16.msra.mxu0 0
        %1317 = vmatprep.subr.bf16.mxu0 0
        %1318 = vmatpush1.bf16.msra.mxu0 0
        %1319 = vmatprep.subr.bf16.mxu0 0
        %1320 = vmatpush1.bf16.msra.mxu0 0
        %1321 = vmatprep.subr.bf16.mxu0 0
        %1322 = vmatpush1.bf16.msra.mxu0 0
        %1323 = vmatprep.subr.bf16.mxu0 0
        %1324 = vmatpush1.bf16.msra.mxu0 0
        %1325 = vmatprep.subr.bf16.mxu0 0
        %1326 = vmatpush1.bf16.msra.mxu0 0
        %1327 = vmatprep.subr.bf16.mxu0 0
        %1328 = vmatpush1.bf16.msra.mxu0 0
        %1329 = vmatprep.subr.bf16.mxu0 0
        %1330 = vmatpush1.bf16.msra.mxu0 0
        %1331 = vmatprep.subr.bf16.mxu0 0
        %1332 = vmatpush1.bf16.msra.mxu0 0
        %1333 = vmatprep.subr.bf16.mxu0 0
        %1334 = vmatpush1.bf16.msra.mxu0 0
        %1335 = vmatprep.subr.bf16.mxu0 0
        %1336 = vmatpush1.bf16.msra.mxu0 0
        %1337 = vmatprep.subr.bf16.mxu0 0
        %1338 = vmatpush1.bf16.msra.mxu0 0
        %1339 = vmatprep.subr.bf16.mxu0 0
        %1340 = vmatpush1.bf16.msra.mxu0 0
        %1341 = vmatprep.mubr.bf16.mxu0 0
        %1342 = vmatmul.mubr.bf16.gmra.mrb[0].mxu0 %v1243
        %v1343 = vpop.f32.mrb[0].mxu0
        %v1344 = vadd.f32 %v1295, %v1343
        %v1345 = vpop.f32.mrb[0].mxu0
        %v1346 = vpop.f32.mrb[0].mxu0
        %v1347 = vadd.f32 %v1295, %v1346
        %v1348 = vpop.f32.mrb[0].mxu0
        %1349 = vdwg.mxu0
        %v1350 = vld [vmem:[%s1059] sm:$0xf]
        %v1351 = vld [vmem:[%s1059 + $0x4] sm:$0xf]
        %v1352 = vld [vmem:[%s1059 + $0x8] sm:$0xf]
        %v1353 = vld [vmem:[%s1059 + $0xc] sm:$0xf]
        %v1354 = vld [vmem:[%s1062] sm:$0x1]
        %v1356 = vlaneseq
        %v1357 = vshrl.u32 %v1356, 7
        %v1358 = vsub.s32 0, %v1357
        %v1359 = vrot.slane %v1354, %v1358
        %v1365 = vunpack.c.l.b16 %v1350
        %v1366 = vunpack.c.l.b16 %v1351
        %v1367 = vunpack.c.l.b16 %v1352
        %v1368 = vunpack.c.l.b16 %v1353
        %v1369 = vpack.c.b16 %v1366, %v1365
        %v1370 = vpack.c.b16 %v1368, %v1367
        %1373 = vmatprep.subr.bf16.mxu0 0
        %1374 = vmatpush1.bf16.msra.mxu0 %v1369
        %1375 = vmatprep.subr.bf16.mxu0 0
        %1376 = vmatpush1.bf16.msra.mxu0 %v1370
        %1377 = vmatprep.subr.bf16.mxu0 0
        %1378 = vmatpush1.bf16.msra.mxu0 0
        %1379 = vmatprep.subr.bf16.mxu0 0
        %1380 = vmatpush1.bf16.msra.mxu0 0
        %1381 = vmatprep.subr.bf16.mxu0 0
        %1382 = vmatpush1.bf16.msra.mxu0 0
        %1383 = vmatprep.subr.bf16.mxu0 0
        %1384 = vmatpush1.bf16.msra.mxu0 0
        %1385 = vmatprep.subr.bf16.mxu0 0
        %1386 = vmatpush1.bf16.msra.mxu0 0
        %1387 = vmatprep.subr.bf16.mxu0 0
        %1388 = vmatpush1.bf16.msra.mxu0 0
        %1389 = vmatprep.subr.bf16.mxu0 0
        %1390 = vmatpush1.bf16.msra.mxu0 0
        %1391 = vmatprep.subr.bf16.mxu0 0
        %1392 = vmatpush1.bf16.msra.mxu0 0
        %1393 = vmatprep.subr.bf16.mxu0 0
        %1394 = vmatpush1.bf16.msra.mxu0 0
        %1395 = vmatprep.subr.bf16.mxu0 0
        %1396 = vmatpush1.bf16.msra.mxu0 0
        %1397 = vmatprep.subr.bf16.mxu0 0
        %1398 = vmatpush1.bf16.msra.mxu0 0
        %1399 = vmatprep.subr.bf16.mxu0 0
        %1400 = vmatpush1.bf16.msra.mxu0 0
        %1401 = vmatprep.subr.bf16.mxu0 0
        %1402 = vmatpush1.bf16.msra.mxu0 0
        %1403 = vmatprep.subr.bf16.mxu0 0
        %1404 = vmatpush1.bf16.msra.mxu0 0
        %1405 = vmatprep.mubr.bf16.mxu0 0
        %1406 = vmatmul.mubr.bf16.gmra.mrb[0].mxu0 %v1243
        %v1407 = vpop.f32.mrb[0].mxu0
        %v1408 = vadd.f32 %v1359, %v1407
        %v1409 = vpop.f32.mrb[0].mxu0
        %v1410 = vpop.f32.mrb[0].mxu0
        %v1411 = vadd.f32 %v1359, %v1410
        %v1412 = vpop.f32.mrb[0].mxu0
        %1413 = vdwg.mxu0
        %v1414 = vpack.c.bf16 %v1280, %v1280
        %v1415 = vpack.c.bf16 %v1283, %v1283
        %v1416 = vpack.c.bf16 %v1344, %v1344
        %v1417 = vpack.c.bf16 %v1347, %v1347
        %v1418 = vpack.c.bf16 %v1408, %v1408
        %v1419 = vpack.c.bf16 %v1411, %v1411
        %vm1420 = vcmask 64512
        %v1422 = vsel %vm1420, %v1414, 0
        %v1425 = vsel %vm1420, %v1416, 0
        %1427 = vmatprep.subr.bf16.mxu0 0
        %1428 = vmatpush1.bf16.xpose.msra.mxu0 %v1425
        %1429 = vmatprep.subr.bf16.mxu0 0
        %1430 = vmatpush1.bf16.xpose.msra.mxu0 0
        %1431 = vmatprep.subr.bf16.mxu0 0
        %1432 = vmatpush1.bf16.xpose.msra.mxu0 0
        %1433 = vmatprep.subr.bf16.mxu0 0
        %1434 = vmatpush1.bf16.xpose.msra.mxu0 0
        %1435 = vmatprep.subr.bf16.mxu0 0
        %1436 = vmatpush1.bf16.xpose.msra.mxu0 0
        %1437 = vmatprep.subr.bf16.mxu0 0
        %1438 = vmatpush1.bf16.xpose.msra.mxu0 0
        %1439 = vmatprep.subr.bf16.mxu0 0
        %1440 = vmatpush1.bf16.xpose.msra.mxu0 0
        %1441 = vmatprep.subr.bf16.mxu0 0
        %1442 = vmatpush1.bf16.xpose.msra.mxu0 0
        %1443 = vmatprep.subr.bf16.mxu0 0
        %1444 = vmatpush1.bf16.xpose.msra.mxu0 0
        %1445 = vmatprep.subr.bf16.mxu0 0
        %1446 = vmatpush1.bf16.xpose.msra.mxu0 0
        %1447 = vmatprep.subr.bf16.mxu0 0
        %1448 = vmatpush1.bf16.xpose.msra.mxu0 0
        %1449 = vmatprep.subr.bf16.mxu0 0
        %1450 = vmatpush1.bf16.xpose.msra.mxu0 0
        %1451 = vmatprep.subr.bf16.mxu0 0
        %1452 = vmatpush1.bf16.xpose.msra.mxu0 0
        %1453 = vmatprep.subr.bf16.mxu0 0
        %1454 = vmatpush1.bf16.xpose.msra.mxu0 0
        %1455 = vmatprep.subr.bf16.mxu0 0
        %1456 = vmatpush1.bf16.xpose.msra.mxu0 0
        %1457 = vmatprep.subr.bf16.mxu0 0
        %1458 = vmatpush1.bf16.xpose.msra.mxu0 0
        %1459 = vmatprep.mubr.bf16.mxu0 0
        %1460 = vmatmul.mubr.bf16.gmra.mrb[0].mxu0 %v1422
        %v1461 = vpop.f32.mrb[0].mxu0
        %v1462 = vadd.f32 0.0, %v1461
        %v1463 = vpop.f32.mrb[0].mxu0
        %v1464 = vpop.f32.mrb[0].mxu0
        %v1465 = vpop.f32.mrb[0].mxu0
        %1466 = vdwg.mxu0
        %v1468 = vsel %vm1420, %v1415, 0
        %v1471 = vsel %vm1420, %v1417, 0
        %1473 = vmatprep.subr.bf16.mxu0 0
        %1474 = vmatpush1.bf16.xpose.msra.mxu0 %v1471
        %1475 = vmatprep.subr.bf16.mxu0 0
        %1476 = vmatpush1.bf16.xpose.msra.mxu0 0
        %1477 = vmatprep.subr.bf16.mxu0 0
        %1478 = vmatpush1.bf16.xpose.msra.mxu0 0
        %1479 = vmatprep.subr.bf16.mxu0 0
        %1480 = vmatpush1.bf16.xpose.msra.mxu0 0
        %1481 = vmatprep.subr.bf16.mxu0 0
        %1482 = vmatpush1.bf16.xpose.msra.mxu0 0
        %1483 = vmatprep.subr.bf16.mxu0 0
        %1484 = vmatpush1.bf16.xpose.msra.mxu0 0
        %1485 = vmatprep.subr.bf16.mxu0 0
        %1486 = vmatpush1.bf16.xpose.msra.mxu0 0
        %1487 = vmatprep.subr.bf16.mxu0 0
        %1488 = vmatpush1.bf16.xpose.msra.mxu0 0
        %1489 = vmatprep.subr.bf16.mxu0 0
        %1490 = vmatpush1.bf16.xpose.msra.mxu0 0
        %1491 = vmatprep.subr.bf16.mxu0 0
        %1492 = vmatpush1.bf16.xpose.msra.mxu0 0
        %1493 = vmatprep.subr.bf16.mxu0 0
        %1494 = vmatpush1.bf16.xpose.msra.mxu0 0
        %1495 = vmatprep.subr.bf16.mxu0 0
        %1496 = vmatpush1.bf16.xpose.msra.mxu0 0
        %1497 = vmatprep.subr.bf16.mxu0 0
        %1498 = vmatpush1.bf16.xpose.msra.mxu0 0
        %1499 = vmatprep.subr.bf16.mxu0 0
        %1500 = vmatpush1.bf16.xpose.msra.mxu0 0
        %1501 = vmatprep.subr.bf16.mxu0 0
        %1502 = vmatpush1.bf16.xpose.msra.mxu0 0
        %1503 = vmatprep.subr.bf16.mxu0 0
        %1504 = vmatpush1.bf16.xpose.msra.mxu0 0
        %1505 = vmatprep.mubr.bf16.mxu0 0
        %1506 = vmatmul.mubr.bf16.gmra.mrb[0].mxu0 %v1468
        %v1507 = vpop.f32.mrb[0].mxu0
        %v1508 = vadd.f32 0.0, %v1507
        %v1509 = vpop.f32.mrb[0].mxu0
        %v1510 = vpop.f32.mrb[0].mxu0
        %v1511 = vpop.f32.mrb[0].mxu0
        %1512 = vdwg.mxu0
        %v1513 = vmul.f32 %v1462, 0.35355338
        %v1514 = vmul.f32 %v1508, 0.35355338
        %v1515 = vadd.f32 %v1513, %v1216
        %v1516 = vadd.f32 %v1514, %v1216
        %v1517 = vsel %vm1420, %v1515, -inf
        %1518 = vmax.xlane.f32.xlu0 %v1517
        %v1519 = vpop.xlane.xlu0 %1518
        %v1520 = vsel %vm1420, %v1516, -inf
        %1521 = vmax.xlane.f32.xlu0 %v1520
        %v1522 = vpop.xlane.xlu0 %1521
        %v1523 = vsub.f32 %v1515, %v1519
        %v1524 = vsub.f32 %v1516, %v1522
        %v1525 = vmul.f32 %v1523, 1.442695
        %v1526 = vpow.pop %v1525
        %v1527 = vmul.f32 %v1524, 1.442695
        %v1528 = vpow.pop %v1527
        %v1529 = vsel %vm1420, %v1526, 0.0
        %1530 = vadd.xlane.f32.xlu0 %v1529
        %v1531 = vpop.xlane.xlu0 %1530
        %v1532 = vsel %vm1420, %v1528, 0.0
        %1533 = vadd.xlane.f32.xlu0 %v1532
        %v1534 = vpop.xlane.xlu0 %1533
        %v1535 = vrcp.pop %v1531
        %v1536 = vrcp.pop %v1534
        %v1537 = vmul.f32 %v1526, %v1535
        %v1538 = vmul.f32 %v1528, %v1536
        %v1539 = vpack.c.bf16 %v1537, %v1537
        %v1540 = vpack.c.bf16 %v1538, %v1538
        %v1542 = vsel %vm1420, %v1539, 0
        %vm1544 = vcmask 1043456
        %v1546 = vsel %vm1544, %v1418, 0
        %1548 = vmatprep.subr.bf16.mxu0 0
        %1549 = vmatpush1.bf16.msra.mxu0 %v1546
        %1550 = vmatprep.subr.bf16.mxu0 0
        %1551 = vmatpush1.bf16.msra.mxu0 0
        %1552 = vmatprep.subr.bf16.mxu0 0
        %1553 = vmatpush1.bf16.msra.mxu0 0
        %1554 = vmatprep.subr.bf16.mxu0 0
        %1555 = vmatpush1.bf16.msra.mxu0 0
        %1556 = vmatprep.subr.bf16.mxu0 0
        %1557 = vmatpush1.bf16.msra.mxu0 0
        %1558 = vmatprep.subr.bf16.mxu0 0
        %1559 = vmatpush1.bf16.msra.mxu0 0
        %1560 = vmatprep.subr.bf16.mxu0 0
        %1561 = vmatpush1.bf16.msra.mxu0 0
        %1562 = vmatprep.subr.bf16.mxu0 0
        %1563 = vmatpush1.bf16.msra.mxu0 0
        %1564 = vmatprep.subr.bf16.mxu0 0
        %1565 = vmatpush1.bf16.msra.mxu0 0
        %1566 = vmatprep.subr.bf16.mxu0 0
        %1567 = vmatpush1.bf16.msra.mxu0 0
        %1568 = vmatprep.subr.bf16.mxu0 0
        %1569 = vmatpush1.bf16.msra.mxu0 0
        %1570 = vmatprep.subr.bf16.mxu0 0
        %1571 = vmatpush1.bf16.msra.mxu0 0
        %1572 = vmatprep.subr.bf16.mxu0 0
        %1573 = vmatpush1.bf16.msra.mxu0 0
        %1574 = vmatprep.subr.bf16.mxu0 0
        %1575 = vmatpush1.bf16.msra.mxu0 0
        %1576 = vmatprep.subr.bf16.mxu0 0
        %1577 = vmatpush1.bf16.msra.mxu0 0
        %1578 = vmatprep.subr.bf16.mxu0 0
        %1579 = vmatpush1.bf16.msra.mxu0 0
        %1580 = vmatprep.mubr.bf16.mxu0 0
        %1581 = vmatmul.mubr.bf16.gmra.mrb[0].mxu0 %v1542
        %v1582 = vpop.f32.mrb[0].mxu0
        %v1583 = vadd.f32 0.0, %v1582
        %v1584 = vpop.f32.mrb[0].mxu0
        %v1585 = vpop.f32.mrb[0].mxu0
        %v1586 = vpop.f32.mrb[0].mxu0
        %1587 = vdwg.mxu0
        %v1589 = vsel %vm1420, %v1540, 0
        %v1592 = vsel %vm1544, %v1419, 0
        %1594 = vmatprep.subr.bf16.mxu0 0
        %1595 = vmatpush1.bf16.msra.mxu0 %v1592
        %1596 = vmatprep.subr.bf16.mxu0 0
        %1597 = vmatpush1.bf16.msra.mxu0 0
        %1598 = vmatprep.subr.bf16.mxu0 0
        %1599 = vmatpush1.bf16.msra.mxu0 0
        %1600 = vmatprep.subr.bf16.mxu0 0
        %1601 = vmatpush1.bf16.msra.mxu0 0
        %1602 = vmatprep.subr.bf16.mxu0 0
        %1603 = vmatpush1.bf16.msra.mxu0 0
        %1604 = vmatprep.subr.bf16.mxu0 0
        %1605 = vmatpush1.bf16.msra.mxu0 0
        %1606 = vmatprep.subr.bf16.mxu0 0
        %1607 = vmatpush1.bf16.msra.mxu0 0
        %1608 = vmatprep.subr.bf16.mxu0 0
        %1609 = vmatpush1.bf16.msra.mxu0 0
        %1610 = vmatprep.subr.bf16.mxu0 0
        %1611 = vmatpush1.bf16.msra.mxu0 0
        %1612 = vmatprep.subr.bf16.mxu0 0
        %1613 = vmatpush1.bf16.msra.mxu0 0
        %1614 = vmatprep.subr.bf16.mxu0 0
        %1615 = vmatpush1.bf16.msra.mxu0 0
        %1616 = vmatprep.subr.bf16.mxu0 0
        %1617 = vmatpush1.bf16.msra.mxu0 0
        %1618 = vmatprep.subr.bf16.mxu0 0
        %1619 = vmatpush1.bf16.msra.mxu0 0
        %1620 = vmatprep.subr.bf16.mxu0 0
        %1621 = vmatpush1.bf16.msra.mxu0 0
        %1622 = vmatprep.subr.bf16.mxu0 0
        %1623 = vmatpush1.bf16.msra.mxu0 0
        %1624 = vmatprep.subr.bf16.mxu0 0
        %1625 = vmatpush1.bf16.msra.mxu0 0
        %1626 = vmatprep.mubr.bf16.mxu0 0
        %1627 = vmatmul.mubr.bf16.gmra.mrb[0].mxu0 %v1589
        %v1628 = vpop.f32.mrb[0].mxu0
        %v1629 = vadd.f32 0.0, %v1628
        %v1630 = vpop.f32.mrb[0].mxu0
        %v1631 = vpop.f32.mrb[0].mxu0
        %v1632 = vpop.f32.mrb[0].mxu0
        %1633 = vdwg.mxu0
        %1635 = vrot.lane.b32.xlu0 %v1414, 120
        %v1636 = vpop.permute.xlu0 %1635
        %1638 = vrot.lane.b32.xlu0 %v1416, 120
        %v1639 = vpop.permute.xlu0 %1638
        %v1641 = vsel %vm1420, %v1636, 0
        %v1644 = vsel %vm1420, %v1639, 0
        %1646 = vmatprep.subr.bf16.mxu0 0
        %1647 = vmatpush1.bf16.xpose.msra.mxu0 %v1644
        %1648 = vmatprep.subr.bf16.mxu0 0
        %1649 = vmatpush1.bf16.xpose.msra.mxu0 0
        %1650 = vmatprep.subr.bf16.mxu0 0
        %1651 = vmatpush1.bf16.xpose.msra.mxu0 0
        %1652 = vmatprep.subr.bf16.mxu0 0
        %1653 = vmatpush1.bf16.xpose.msra.mxu0 0
        %1654 = vmatprep.subr.bf16.mxu0 0
        %1655 = vmatpush1.bf16.xpose.msra.mxu0 0
        %1656 = vmatprep.subr.bf16.mxu0 0
        %1657 = vmatpush1.bf16.xpose.msra.mxu0 0
        %1658 = vmatprep.subr.bf16.mxu0 0
        %1659 = vmatpush1.bf16.xpose.msra.mxu0 0
        %1660 = vmatprep.subr.bf16.mxu0 0
        %1661 = vmatpush1.bf16.xpose.msra.mxu0 0
        %1662 = vmatprep.subr.bf16.mxu0 0
        %1663 = vmatpush1.bf16.xpose.msra.mxu0 0
        %1664 = vmatprep.subr.bf16.mxu0 0
        %1665 = vmatpush1.bf16.xpose.msra.mxu0 0
        %1666 = vmatprep.subr.bf16.mxu0 0
        %1667 = vmatpush1.bf16.xpose.msra.mxu0 0
        %1668 = vmatprep.subr.bf16.mxu0 0
        %1669 = vmatpush1.bf16.xpose.msra.mxu0 0
        %1670 = vmatprep.subr.bf16.mxu0 0
        %1671 = vmatpush1.bf16.xpose.msra.mxu0 0
        %1672 = vmatprep.subr.bf16.mxu0 0
        %1673 = vmatpush1.bf16.xpose.msra.mxu0 0
        %1674 = vmatprep.subr.bf16.mxu0 0
        %1675 = vmatpush1.bf16.xpose.msra.mxu0 0
        %1676 = vmatprep.subr.bf16.mxu0 0
        %1677 = vmatpush1.bf16.xpose.msra.mxu0 0
        %1678 = vmatprep.mubr.bf16.mxu0 0
        %1679 = vmatmul.mubr.bf16.gmra.mrb[0].mxu0 %v1641
        %v1680 = vpop.f32.mrb[0].mxu0
        %v1681 = vadd.f32 0.0, %v1680
        %v1682 = vpop.f32.mrb[0].mxu0
        %v1683 = vpop.f32.mrb[0].mxu0
        %v1684 = vpop.f32.mrb[0].mxu0
        %1685 = vdwg.mxu0
        %1687 = vrot.lane.b32.xlu0 %v1415, 120
        %v1688 = vpop.permute.xlu0 %1687
        %1690 = vrot.lane.b32.xlu0 %v1417, 120
        %v1691 = vpop.permute.xlu0 %1690
        %v1693 = vsel %vm1420, %v1688, 0
        %v1696 = vsel %vm1420, %v1691, 0
        %1698 = vmatprep.subr.bf16.mxu0 0
        %1699 = vmatpush1.bf16.xpose.msra.mxu0 %v1696
        %1700 = vmatprep.subr.bf16.mxu0 0
        %1701 = vmatpush1.bf16.xpose.msra.mxu0 0
        %1702 = vmatprep.subr.bf16.mxu0 0
        %1703 = vmatpush1.bf16.xpose.msra.mxu0 0
        %1704 = vmatprep.subr.bf16.mxu0 0
        %1705 = vmatpush1.bf16.xpose.msra.mxu0 0
        %1706 = vmatprep.subr.bf16.mxu0 0
        %1707 = vmatpush1.bf16.xpose.msra.mxu0 0
        %1708 = vmatprep.subr.bf16.mxu0 0
        %1709 = vmatpush1.bf16.xpose.msra.mxu0 0
        %1710 = vmatprep.subr.bf16.mxu0 0
        %1711 = vmatpush1.bf16.xpose.msra.mxu0 0
        %1712 = vmatprep.subr.bf16.mxu0 0
        %1713 = vmatpush1.bf16.xpose.msra.mxu0 0
        %1714 = vmatprep.subr.bf16.mxu0 0
        %1715 = vmatpush1.bf16.xpose.msra.mxu0 0
        %1716 = vmatprep.subr.bf16.mxu0 0
        %1717 = vmatpush1.bf16.xpose.msra.mxu0 0
        %1718 = vmatprep.subr.bf16.mxu0 0
        %1719 = vmatpush1.bf16.xpose.msra.mxu0 0
        %1720 = vmatprep.subr.bf16.mxu0 0
        %1721 = vmatpush1.bf16.xpose.msra.mxu0 0
        %1722 = vmatprep.subr.bf16.mxu0 0
        %1723 = vmatpush1.bf16.xpose.msra.mxu0 0
        %1724 = vmatprep.subr.bf16.mxu0 0
        %1725 = vmatpush1.bf16.xpose.msra.mxu0 0
        %1726 = vmatprep.subr.bf16.mxu0 0
        %1727 = vmatpush1.bf16.xpose.msra.mxu0 0
        %1728 = vmatprep.subr.bf16.mxu0 0
        %1729 = vmatpush1.bf16.xpose.msra.mxu0 0
        %1730 = vmatprep.mubr.bf16.mxu0 0
        %1731 = vmatmul.mubr.bf16.gmra.mrb[0].mxu0 %v1693
        %v1732 = vpop.f32.mrb[0].mxu0
        %v1733 = vadd.f32 0.0, %v1732
        %v1734 = vpop.f32.mrb[0].mxu0
        %v1735 = vpop.f32.mrb[0].mxu0
        %v1736 = vpop.f32.mrb[0].mxu0
        %1737 = vdwg.mxu0
        %v1738 = vmul.f32 %v1681, 0.35355338
        %v1739 = vmul.f32 %v1733, 0.35355338
        %v1740 = vadd.f32 %v1738, %v1216
        %v1741 = vadd.f32 %v1739, %v1216
        %v1742 = vsel %vm1420, %v1740, -inf
        %1743 = vmax.xlane.f32.xlu0 %v1742
        %v1744 = vpop.xlane.xlu0 %1743
        %v1745 = vsel %vm1420, %v1741, -inf
        %1746 = vmax.xlane.f32.xlu0 %v1745
        %v1747 = vpop.xlane.xlu0 %1746
        %v1748 = vsub.f32 %v1740, %v1744
        %v1749 = vsub.f32 %v1741, %v1747
        %v1750 = vmul.f32 %v1748, 1.442695
        %v1751 = vpow.pop %v1750
        %v1752 = vmul.f32 %v1749, 1.442695
        %v1753 = vpow.pop %v1752
        %v1754 = vsel %vm1420, %v1751, 0.0
        %1755 = vadd.xlane.f32.xlu0 %v1754
        %v1756 = vpop.xlane.xlu0 %1755
        %v1757 = vsel %vm1420, %v1753, 0.0
        %1758 = vadd.xlane.f32.xlu0 %v1757
        %v1759 = vpop.xlane.xlu0 %1758
        %v1760 = vrcp.pop %v1756
        %v1761 = vrcp.pop %v1759
        %v1762 = vmul.f32 %v1751, %v1760
        %v1763 = vmul.f32 %v1753, %v1761
        %v1764 = vpack.c.bf16 %v1762, %v1762
        %v1765 = vpack.c.bf16 %v1763, %v1763
        %1767 = vrot.lane.b32.xlu0 %v1418, 120
        %v1768 = vpop.permute.xlu0 %1767
        %v1770 = vsel %vm1420, %v1764, 0
        %v1773 = vsel %vm1544, %v1768, 0
        %1775 = vmatprep.subr.bf16.mxu0 0
        %1776 = vmatpush1.bf16.msra.mxu0 %v1773
        %1777 = vmatprep.subr.bf16.mxu0 0
        %1778 = vmatpush1.bf16.msra.mxu0 0
        %1779 = vmatprep.subr.bf16.mxu0 0
        %1780 = vmatpush1.bf16.msra.mxu0 0
        %1781 = vmatprep.subr.bf16.mxu0 0
        %1782 = vmatpush1.bf16.msra.mxu0 0
        %1783 = vmatprep.subr.bf16.mxu0 0
        %1784 = vmatpush1.bf16.msra.mxu0 0
        %1785 = vmatprep.subr.bf16.mxu0 0
        %1786 = vmatpush1.bf16.msra.mxu0 0
        %1787 = vmatprep.subr.bf16.mxu0 0
        %1788 = vmatpush1.bf16.msra.mxu0 0
        %1789 = vmatprep.subr.bf16.mxu0 0
        %1790 = vmatpush1.bf16.msra.mxu0 0
        %1791 = vmatprep.subr.bf16.mxu0 0
        %1792 = vmatpush1.bf16.msra.mxu0 0
        %1793 = vmatprep.subr.bf16.mxu0 0
        %1794 = vmatpush1.bf16.msra.mxu0 0
        %1795 = vmatprep.subr.bf16.mxu0 0
        %1796 = vmatpush1.bf16.msra.mxu0 0
        %1797 = vmatprep.subr.bf16.mxu0 0
        %1798 = vmatpush1.bf16.msra.mxu0 0
        %1799 = vmatprep.subr.bf16.mxu0 0
        %1800 = vmatpush1.bf16.msra.mxu0 0
        %1801 = vmatprep.subr.bf16.mxu0 0
        %1802 = vmatpush1.bf16.msra.mxu0 0
        %1803 = vmatprep.subr.bf16.mxu0 0
        %1804 = vmatpush1.bf16.msra.mxu0 0
        %1805 = vmatprep.subr.bf16.mxu0 0
        %1806 = vmatpush1.bf16.msra.mxu0 0
        %1807 = vmatprep.mubr.bf16.mxu0 0
        %1808 = vmatmul.mubr.bf16.gmra.mrb[0].mxu0 %v1770
        %v1809 = vpop.f32.mrb[0].mxu0
        %v1810 = vadd.f32 0.0, %v1809
        %v1811 = vpop.f32.mrb[0].mxu0
        %v1812 = vpop.f32.mrb[0].mxu0
        %v1813 = vpop.f32.mrb[0].mxu0
        %1814 = vdwg.mxu0
        %1816 = vrot.lane.b32.xlu0 %v1419, 120
        %v1817 = vpop.permute.xlu0 %1816
        %v1819 = vsel %vm1420, %v1765, 0
        %v1822 = vsel %vm1544, %v1817, 0
        %1824 = vmatprep.subr.bf16.mxu0 0
        %1825 = vmatpush1.bf16.msra.mxu0 %v1822
        %1826 = vmatprep.subr.bf16.mxu0 0
        %1827 = vmatpush1.bf16.msra.mxu0 0
        %1828 = vmatprep.subr.bf16.mxu0 0
        %1829 = vmatpush1.bf16.msra.mxu0 0
        %1830 = vmatprep.subr.bf16.mxu0 0
        %1831 = vmatpush1.bf16.msra.mxu0 0
        %1832 = vmatprep.subr.bf16.mxu0 0
        %1833 = vmatpush1.bf16.msra.mxu0 0
        %1834 = vmatprep.subr.bf16.mxu0 0
        %1835 = vmatpush1.bf16.msra.mxu0 0
        %1836 = vmatprep.subr.bf16.mxu0 0
        %1837 = vmatpush1.bf16.msra.mxu0 0
        %1838 = vmatprep.subr.bf16.mxu0 0
        %1839 = vmatpush1.bf16.msra.mxu0 0
        %1840 = vmatprep.subr.bf16.mxu0 0
        %1841 = vmatpush1.bf16.msra.mxu0 0
        %1842 = vmatprep.subr.bf16.mxu0 0
        %1843 = vmatpush1.bf16.msra.mxu0 0
        %1844 = vmatprep.subr.bf16.mxu0 0
        %1845 = vmatpush1.bf16.msra.mxu0 0
        %1846 = vmatprep.subr.bf16.mxu0 0
        %1847 = vmatpush1.bf16.msra.mxu0 0
        %1848 = vmatprep.subr.bf16.mxu0 0
        %1849 = vmatpush1.bf16.msra.mxu0 0
        %1850 = vmatprep.subr.bf16.mxu0 0
        %1851 = vmatpush1.bf16.msra.mxu0 0
        %1852 = vmatprep.subr.bf16.mxu0 0
        %1853 = vmatpush1.bf16.msra.mxu0 0
        %1854 = vmatprep.subr.bf16.mxu0 0
        %1855 = vmatpush1.bf16.msra.mxu0 0
        %1856 = vmatprep.mubr.bf16.mxu0 0
        %1857 = vmatmul.mubr.bf16.gmra.mrb[0].mxu0 %v1819
        %v1858 = vpop.f32.mrb[0].mxu0
        %v1859 = vadd.f32 0.0, %v1858
        %v1860 = vpop.f32.mrb[0].mxu0
        %v1861 = vpop.f32.mrb[0].mxu0
        %v1862 = vpop.f32.mrb[0].mxu0
        %1863 = vdwg.mxu0
        %1864 = vrot.lane.b32.xlu0 %v1414, 112
        %v1865 = vpop.permute.xlu0 %1864
        %1866 = vrot.lane.b32.xlu0 %v1416, 112
        %v1867 = vpop.permute.xlu0 %1866
        %v1869 = vsel %vm1420, %v1865, 0
        %v1872 = vsel %vm1420, %v1867, 0
        %1874 = vmatprep.subr.bf16.mxu0 0
        %1875 = vmatpush1.bf16.xpose.msra.mxu0 %v1872
        %1876 = vmatprep.subr.bf16.mxu0 0
        %1877 = vmatpush1.bf16.xpose.msra.mxu0 0
        %1878 = vmatprep.subr.bf16.mxu0 0
        %1879 = vmatpush1.bf16.xpose.msra.mxu0 0
        %1880 = vmatprep.subr.bf16.mxu0 0
        %1881 = vmatpush1.bf16.xpose.msra.mxu0 0
        %1882 = vmatprep.subr.bf16.mxu0 0
        %1883 = vmatpush1.bf16.xpose.msra.mxu0 0
        %1884 = vmatprep.subr.bf16.mxu0 0
        %1885 = vmatpush1.bf16.xpose.msra.mxu0 0
        %1886 = vmatprep.subr.bf16.mxu0 0
        %1887 = vmatpush1.bf16.xpose.msra.mxu0 0
        %1888 = vmatprep.subr.bf16.mxu0 0
        %1889 = vmatpush1.bf16.xpose.msra.mxu0 0
        %1890 = vmatprep.subr.bf16.mxu0 0
        %1891 = vmatpush1.bf16.xpose.msra.mxu0 0
        %1892 = vmatprep.subr.bf16.mxu0 0
        %1893 = vmatpush1.bf16.xpose.msra.mxu0 0
        %1894 = vmatprep.subr.bf16.mxu0 0
        %1895 = vmatpush1.bf16.xpose.msra.mxu0 0
        %1896 = vmatprep.subr.bf16.mxu0 0
        %1897 = vmatpush1.bf16.xpose.msra.mxu0 0
        %1898 = vmatprep.subr.bf16.mxu0 0
        %1899 = vmatpush1.bf16.xpose.msra.mxu0 0
        %1900 = vmatprep.subr.bf16.mxu0 0
        %1901 = vmatpush1.bf16.xpose.msra.mxu0 0
        %1902 = vmatprep.subr.bf16.mxu0 0
        %1903 = vmatpush1.bf16.xpose.msra.mxu0 0
        %1904 = vmatprep.subr.bf16.mxu0 0
        %1905 = vmatpush1.bf16.xpose.msra.mxu0 0
        %1906 = vmatprep.mubr.bf16.mxu0 0
        %1907 = vmatmul.mubr.bf16.gmra.mrb[0].mxu0 %v1869
        %v1908 = vpop.f32.mrb[0].mxu0
        %v1909 = vadd.f32 0.0, %v1908
        %v1910 = vpop.f32.mrb[0].mxu0
        %v1911 = vpop.f32.mrb[0].mxu0
        %v1912 = vpop.f32.mrb[0].mxu0
        %1913 = vdwg.mxu0
        %1914 = vrot.lane.b32.xlu0 %v1415, 112
        %v1915 = vpop.permute.xlu0 %1914
        %1916 = vrot.lane.b32.xlu0 %v1417, 112
        %v1917 = vpop.permute.xlu0 %1916
        %v1919 = vsel %vm1420, %v1915, 0
        %v1922 = vsel %vm1420, %v1917, 0
        %1924 = vmatprep.subr.bf16.mxu0 0
        %1925 = vmatpush1.bf16.xpose.msra.mxu0 %v1922
        %1926 = vmatprep.subr.bf16.mxu0 0
        %1927 = vmatpush1.bf16.xpose.msra.mxu0 0
        %1928 = vmatprep.subr.bf16.mxu0 0
        %1929 = vmatpush1.bf16.xpose.msra.mxu0 0
        %1930 = vmatprep.subr.bf16.mxu0 0
        %1931 = vmatpush1.bf16.xpose.msra.mxu0 0
        %1932 = vmatprep.subr.bf16.mxu0 0
        %1933 = vmatpush1.bf16.xpose.msra.mxu0 0
        %1934 = vmatprep.subr.bf16.mxu0 0
        %1935 = vmatpush1.bf16.xpose.msra.mxu0 0
        %1936 = vmatprep.subr.bf16.mxu0 0
        %1937 = vmatpush1.bf16.xpose.msra.mxu0 0
        %1938 = vmatprep.subr.bf16.mxu0 0
        %1939 = vmatpush1.bf16.xpose.msra.mxu0 0
        %1940 = vmatprep.subr.bf16.mxu0 0
        %1941 = vmatpush1.bf16.xpose.msra.mxu0 0
        %1942 = vmatprep.subr.bf16.mxu0 0
        %1943 = vmatpush1.bf16.xpose.msra.mxu0 0
        %1944 = vmatprep.subr.bf16.mxu0 0
        %1945 = vmatpush1.bf16.xpose.msra.mxu0 0
        %1946 = vmatprep.subr.bf16.mxu0 0
        %1947 = vmatpush1.bf16.xpose.msra.mxu0 0
        %1948 = vmatprep.subr.bf16.mxu0 0
        %1949 = vmatpush1.bf16.xpose.msra.mxu0 0
        %1950 = vmatprep.subr.bf16.mxu0 0
        %1951 = vmatpush1.bf16.xpose.msra.mxu0 0
        %1952 = vmatprep.subr.bf16.mxu0 0
        %1953 = vmatpush1.bf16.xpose.msra.mxu0 0
        %1954 = vmatprep.subr.bf16.mxu0 0
        %1955 = vmatpush1.bf16.xpose.msra.mxu0 0
        %1956 = vmatprep.mubr.bf16.mxu0 0
        %1957 = vmatmul.mubr.bf16.gmra.mrb[0].mxu0 %v1919
        %v1958 = vpop.f32.mrb[0].mxu0
        %v1959 = vadd.f32 0.0, %v1958
        %v1960 = vpop.f32.mrb[0].mxu0
        %v1961 = vpop.f32.mrb[0].mxu0
        %v1962 = vpop.f32.mrb[0].mxu0
        %1963 = vdwg.mxu0
        %v1964 = vmul.f32 %v1909, 0.35355338
        %v1965 = vmul.f32 %v1959, 0.35355338
        %v1966 = vadd.f32 %v1964, %v1216
        %v1967 = vadd.f32 %v1965, %v1216
        %v1968 = vsel %vm1420, %v1966, -inf
        %1969 = vmax.xlane.f32.xlu0 %v1968
        %v1970 = vpop.xlane.xlu0 %1969
        %v1971 = vsel %vm1420, %v1967, -inf
        %1972 = vmax.xlane.f32.xlu0 %v1971
        %v1973 = vpop.xlane.xlu0 %1972
        %v1974 = vsub.f32 %v1966, %v1970
        %v1975 = vsub.f32 %v1967, %v1973
        %v1976 = vmul.f32 %v1974, 1.442695
        %v1977 = vpow.pop %v1976
        %v1978 = vmul.f32 %v1975, 1.442695
        %v1979 = vpow.pop %v1978
        %v1980 = vsel %vm1420, %v1977, 0.0
        %1981 = vadd.xlane.f32.xlu0 %v1980
        %v1982 = vpop.xlane.xlu0 %1981
        %v1983 = vsel %vm1420, %v1979, 0.0
        %1984 = vadd.xlane.f32.xlu0 %v1983
        %v1985 = vpop.xlane.xlu0 %1984
        %v1986 = vrcp.pop %v1982
        %v1987 = vrcp.pop %v1985
        %v1988 = vmul.f32 %v1977, %v1986
        %v1989 = vmul.f32 %v1979, %v1987
        %v1990 = vpack.c.bf16 %v1988, %v1988
        %v1991 = vpack.c.bf16 %v1989, %v1989
        %1992 = vrot.lane.b32.xlu0 %v1418, 112
        %v1993 = vpop.permute.xlu0 %1992
        %v1995 = vsel %vm1420, %v1990, 0
        %v1998 = vsel %vm1544, %v1993, 0
        %2000 = vmatprep.subr.bf16.mxu0 0
        %2001 = vmatpush1.bf16.msra.mxu0 %v1998
        %2002 = vmatprep.subr.bf16.mxu0 0
        %2003 = vmatpush1.bf16.msra.mxu0 0
        %2004 = vmatprep.subr.bf16.mxu0 0
        %2005 = vmatpush1.bf16.msra.mxu0 0
        %2006 = vmatprep.subr.bf16.mxu0 0
        %2007 = vmatpush1.bf16.msra.mxu0 0
        %2008 = vmatprep.subr.bf16.mxu0 0
        %2009 = vmatpush1.bf16.msra.mxu0 0
        %2010 = vmatprep.subr.bf16.mxu0 0
        %2011 = vmatpush1.bf16.msra.mxu0 0
        %2012 = vmatprep.subr.bf16.mxu0 0
        %2013 = vmatpush1.bf16.msra.mxu0 0
        %2014 = vmatprep.subr.bf16.mxu0 0
        %2015 = vmatpush1.bf16.msra.mxu0 0
        %2016 = vmatprep.subr.bf16.mxu0 0
        %2017 = vmatpush1.bf16.msra.mxu0 0
        %2018 = vmatprep.subr.bf16.mxu0 0
        %2019 = vmatpush1.bf16.msra.mxu0 0
        %2020 = vmatprep.subr.bf16.mxu0 0
        %2021 = vmatpush1.bf16.msra.mxu0 0
        %2022 = vmatprep.subr.bf16.mxu0 0
        %2023 = vmatpush1.bf16.msra.mxu0 0
        %2024 = vmatprep.subr.bf16.mxu0 0
        %2025 = vmatpush1.bf16.msra.mxu0 0
        %2026 = vmatprep.subr.bf16.mxu0 0
        %2027 = vmatpush1.bf16.msra.mxu0 0
        %2028 = vmatprep.subr.bf16.mxu0 0
        %2029 = vmatpush1.bf16.msra.mxu0 0
        %2030 = vmatprep.subr.bf16.mxu0 0
        %2031 = vmatpush1.bf16.msra.mxu0 0
        %2032 = vmatprep.mubr.bf16.mxu0 0
        %2033 = vmatmul.mubr.bf16.gmra.mrb[0].mxu0 %v1995
        %v2034 = vpop.f32.mrb[0].mxu0
        %v2035 = vadd.f32 0.0, %v2034
        %v2036 = vpop.f32.mrb[0].mxu0
        %v2037 = vpop.f32.mrb[0].mxu0
        %v2038 = vpop.f32.mrb[0].mxu0
        %2039 = vdwg.mxu0
        %2040 = vrot.lane.b32.xlu0 %v1419, 112
        %v2041 = vpop.permute.xlu0 %2040
        %v2043 = vsel %vm1420, %v1991, 0
        %v2046 = vsel %vm1544, %v2041, 0
        %2048 = vmatprep.subr.bf16.mxu0 0
        %2049 = vmatpush1.bf16.msra.mxu0 %v2046
        %2050 = vmatprep.subr.bf16.mxu0 0
        %2051 = vmatpush1.bf16.msra.mxu0 0
        %2052 = vmatprep.subr.bf16.mxu0 0
        %2053 = vmatpush1.bf16.msra.mxu0 0
        %2054 = vmatprep.subr.bf16.mxu0 0
        %2055 = vmatpush1.bf16.msra.mxu0 0
        %2056 = vmatprep.subr.bf16.mxu0 0
        %2057 = vmatpush1.bf16.msra.mxu0 0
        %2058 = vmatprep.subr.bf16.mxu0 0
        %2059 = vmatpush1.bf16.msra.mxu0 0
        %2060 = vmatprep.subr.bf16.mxu0 0
        %2061 = vmatpush1.bf16.msra.mxu0 0
        %2062 = vmatprep.subr.bf16.mxu0 0
        %2063 = vmatpush1.bf16.msra.mxu0 0
        %2064 = vmatprep.subr.bf16.mxu0 0
        %2065 = vmatpush1.bf16.msra.mxu0 0
        %2066 = vmatprep.subr.bf16.mxu0 0
        %2067 = vmatpush1.bf16.msra.mxu0 0
        %2068 = vmatprep.subr.bf16.mxu0 0
        %2069 = vmatpush1.bf16.msra.mxu0 0
        %2070 = vmatprep.subr.bf16.mxu0 0
        %2071 = vmatpush1.bf16.msra.mxu0 0
        %2072 = vmatprep.subr.bf16.mxu0 0
        %2073 = vmatpush1.bf16.msra.mxu0 0
        %2074 = vmatprep.subr.bf16.mxu0 0
        %2075 = vmatpush1.bf16.msra.mxu0 0
        %2076 = vmatprep.subr.bf16.mxu0 0
        %2077 = vmatpush1.bf16.msra.mxu0 0
        %2078 = vmatprep.subr.bf16.mxu0 0
        %2079 = vmatpush1.bf16.msra.mxu0 0
        %2080 = vmatprep.mubr.bf16.mxu0 0
        %2081 = vmatmul.mubr.bf16.gmra.mrb[0].mxu0 %v2043
        %v2082 = vpop.f32.mrb[0].mxu0
        %v2083 = vadd.f32 0.0, %v2082
        %v2084 = vpop.f32.mrb[0].mxu0
        %v2085 = vpop.f32.mrb[0].mxu0
        %v2086 = vpop.f32.mrb[0].mxu0
        %2087 = vdwg.mxu0
        %2088 = vrot.lane.b32.xlu0 %v1414, 104
        %v2089 = vpop.permute.xlu0 %2088
        %2090 = vrot.lane.b32.xlu0 %v1416, 104
        %v2091 = vpop.permute.xlu0 %2090
        %v2093 = vsel %vm1420, %v2089, 0
        %v2096 = vsel %vm1420, %v2091, 0
        %2098 = vmatprep.subr.bf16.mxu0 0
        %2099 = vmatpush1.bf16.xpose.msra.mxu0 %v2096
        %2100 = vmatprep.subr.bf16.mxu0 0
        %2101 = vmatpush1.bf16.xpose.msra.mxu0 0
        %2102 = vmatprep.subr.bf16.mxu0 0
        %2103 = vmatpush1.bf16.xpose.msra.mxu0 0
        %2104 = vmatprep.subr.bf16.mxu0 0
        %2105 = vmatpush1.bf16.xpose.msra.mxu0 0
        %2106 = vmatprep.subr.bf16.mxu0 0
        %2107 = vmatpush1.bf16.xpose.msra.mxu0 0
        %2108 = vmatprep.subr.bf16.mxu0 0
        %2109 = vmatpush1.bf16.xpose.msra.mxu0 0
        %2110 = vmatprep.subr.bf16.mxu0 0
        %2111 = vmatpush1.bf16.xpose.msra.mxu0 0
        %2112 = vmatprep.subr.bf16.mxu0 0
        %2113 = vmatpush1.bf16.xpose.msra.mxu0 0
        %2114 = vmatprep.subr.bf16.mxu0 0
        %2115 = vmatpush1.bf16.xpose.msra.mxu0 0
        %2116 = vmatprep.subr.bf16.mxu0 0
        %2117 = vmatpush1.bf16.xpose.msra.mxu0 0
        %2118 = vmatprep.subr.bf16.mxu0 0
        %2119 = vmatpush1.bf16.xpose.msra.mxu0 0
        %2120 = vmatprep.subr.bf16.mxu0 0
        %2121 = vmatpush1.bf16.xpose.msra.mxu0 0
        %2122 = vmatprep.subr.bf16.mxu0 0
        %2123 = vmatpush1.bf16.xpose.msra.mxu0 0
        %2124 = vmatprep.subr.bf16.mxu0 0
        %2125 = vmatpush1.bf16.xpose.msra.mxu0 0
        %2126 = vmatprep.subr.bf16.mxu0 0
        %2127 = vmatpush1.bf16.xpose.msra.mxu0 0
        %2128 = vmatprep.subr.bf16.mxu0 0
        %2129 = vmatpush1.bf16.xpose.msra.mxu0 0
        %2130 = vmatprep.mubr.bf16.mxu0 0
        %2131 = vmatmul.mubr.bf16.gmra.mrb[0].mxu0 %v2093
        %v2132 = vpop.f32.mrb[0].mxu0
        %v2133 = vadd.f32 0.0, %v2132
        %v2134 = vpop.f32.mrb[0].mxu0
        %v2135 = vpop.f32.mrb[0].mxu0
        %v2136 = vpop.f32.mrb[0].mxu0
        %2137 = vdwg.mxu0
        %2138 = vrot.lane.b32.xlu0 %v1415, 104
        %v2139 = vpop.permute.xlu0 %2138
        %2140 = vrot.lane.b32.xlu0 %v1417, 104
        %v2141 = vpop.permute.xlu0 %2140
        %v2143 = vsel %vm1420, %v2139, 0
        %v2146 = vsel %vm1420, %v2141, 0
        %2148 = vmatprep.subr.bf16.mxu0 0
        %2149 = vmatpush1.bf16.xpose.msra.mxu0 %v2146
        %2150 = vmatprep.subr.bf16.mxu0 0
        %2151 = vmatpush1.bf16.xpose.msra.mxu0 0
        %2152 = vmatprep.subr.bf16.mxu0 0
        %2153 = vmatpush1.bf16.xpose.msra.mxu0 0
        %2154 = vmatprep.subr.bf16.mxu0 0
        %2155 = vmatpush1.bf16.xpose.msra.mxu0 0
        %2156 = vmatprep.subr.bf16.mxu0 0
        %2157 = vmatpush1.bf16.xpose.msra.mxu0 0
        %2158 = vmatprep.subr.bf16.mxu0 0
        %2159 = vmatpush1.bf16.xpose.msra.mxu0 0
        %2160 = vmatprep.subr.bf16.mxu0 0
        %2161 = vmatpush1.bf16.xpose.msra.mxu0 0
        %2162 = vmatprep.subr.bf16.mxu0 0
        %2163 = vmatpush1.bf16.xpose.msra.mxu0 0
        %2164 = vmatprep.subr.bf16.mxu0 0
        %2165 = vmatpush1.bf16.xpose.msra.mxu0 0
        %2166 = vmatprep.subr.bf16.mxu0 0
        %2167 = vmatpush1.bf16.xpose.msra.mxu0 0
        %2168 = vmatprep.subr.bf16.mxu0 0
        %2169 = vmatpush1.bf16.xpose.msra.mxu0 0
        %2170 = vmatprep.subr.bf16.mxu0 0
        %2171 = vmatpush1.bf16.xpose.msra.mxu0 0
        %2172 = vmatprep.subr.bf16.mxu0 0
        %2173 = vmatpush1.bf16.xpose.msra.mxu0 0
        %2174 = vmatprep.subr.bf16.mxu0 0
        %2175 = vmatpush1.bf16.xpose.msra.mxu0 0
        %2176 = vmatprep.subr.bf16.mxu0 0
        %2177 = vmatpush1.bf16.xpose.msra.mxu0 0
        %2178 = vmatprep.subr.bf16.mxu0 0
        %2179 = vmatpush1.bf16.xpose.msra.mxu0 0
        %2180 = vmatprep.mubr.bf16.mxu0 0
        %2181 = vmatmul.mubr.bf16.gmra.mrb[0].mxu0 %v2143
        %v2182 = vpop.f32.mrb[0].mxu0
        %v2183 = vadd.f32 0.0, %v2182
        %v2184 = vpop.f32.mrb[0].mxu0
        %v2185 = vpop.f32.mrb[0].mxu0
        %v2186 = vpop.f32.mrb[0].mxu0
        %2187 = vdwg.mxu0
        %v2188 = vmul.f32 %v2133, 0.35355338
        %v2189 = vmul.f32 %v2183, 0.35355338
        %v2190 = vadd.f32 %v2188, %v1216
        %v2191 = vadd.f32 %v2189, %v1216
        %v2192 = vsel %vm1420, %v2190, -inf
        %2193 = vmax.xlane.f32.xlu0 %v2192
        %v2194 = vpop.xlane.xlu0 %2193
        %v2195 = vsel %vm1420, %v2191, -inf
        %2196 = vmax.xlane.f32.xlu0 %v2195
        %v2197 = vpop.xlane.xlu0 %2196
        %v2198 = vsub.f32 %v2190, %v2194
        %v2199 = vsub.f32 %v2191, %v2197
        %v2200 = vmul.f32 %v2198, 1.442695
        %v2201 = vpow.pop %v2200
        %v2202 = vmul.f32 %v2199, 1.442695
        %v2203 = vpow.pop %v2202
        %v2204 = vsel %vm1420, %v2201, 0.0
        %2205 = vadd.xlane.f32.xlu0 %v2204
        %v2206 = vpop.xlane.xlu0 %2205
        %v2207 = vsel %vm1420, %v2203, 0.0
        %2208 = vadd.xlane.f32.xlu0 %v2207
        %v2209 = vpop.xlane.xlu0 %2208
        %v2210 = vrcp.pop %v2206
        %v2211 = vrcp.pop %v2209
        %v2212 = vmul.f32 %v2201, %v2210
        %v2213 = vmul.f32 %v2203, %v2211
        %v2214 = vpack.c.bf16 %v2212, %v2212
        %v2215 = vpack.c.bf16 %v2213, %v2213
        %2216 = vrot.lane.b32.xlu0 %v1418, 104
        %v2217 = vpop.permute.xlu0 %2216
        %v2219 = vsel %vm1420, %v2214, 0
        %v2222 = vsel %vm1544, %v2217, 0
        %2224 = vmatprep.subr.bf16.mxu0 0
        %2225 = vmatpush1.bf16.msra.mxu0 %v2222
        %2226 = vmatprep.subr.bf16.mxu0 0
        %2227 = vmatpush1.bf16.msra.mxu0 0
        %2228 = vmatprep.subr.bf16.mxu0 0
        %2229 = vmatpush1.bf16.msra.mxu0 0
        %2230 = vmatprep.subr.bf16.mxu0 0
        %2231 = vmatpush1.bf16.msra.mxu0 0
        %2232 = vmatprep.subr.bf16.mxu0 0
        %2233 = vmatpush1.bf16.msra.mxu0 0
        %2234 = vmatprep.subr.bf16.mxu0 0
        %2235 = vmatpush1.bf16.msra.mxu0 0
        %2236 = vmatprep.subr.bf16.mxu0 0
        %2237 = vmatpush1.bf16.msra.mxu0 0
        %2238 = vmatprep.subr.bf16.mxu0 0
        %2239 = vmatpush1.bf16.msra.mxu0 0
        %2240 = vmatprep.subr.bf16.mxu0 0
        %2241 = vmatpush1.bf16.msra.mxu0 0
        %2242 = vmatprep.subr.bf16.mxu0 0
        %2243 = vmatpush1.bf16.msra.mxu0 0
        %2244 = vmatprep.subr.bf16.mxu0 0
        %2245 = vmatpush1.bf16.msra.mxu0 0
        %2246 = vmatprep.subr.bf16.mxu0 0
        %2247 = vmatpush1.bf16.msra.mxu0 0
        %2248 = vmatprep.subr.bf16.mxu0 0
        %2249 = vmatpush1.bf16.msra.mxu0 0
        %2250 = vmatprep.subr.bf16.mxu0 0
        %2251 = vmatpush1.bf16.msra.mxu0 0
        %2252 = vmatprep.subr.bf16.mxu0 0
        %2253 = vmatpush1.bf16.msra.mxu0 0
        %2254 = vmatprep.subr.bf16.mxu0 0
        %2255 = vmatpush1.bf16.msra.mxu0 0
        %2256 = vmatprep.mubr.bf16.mxu0 0
        %2257 = vmatmul.mubr.bf16.gmra.mrb[0].mxu0 %v2219
        %v2258 = vpop.f32.mrb[0].mxu0
        %v2259 = vadd.f32 0.0, %v2258
        %v2260 = vpop.f32.mrb[0].mxu0
        %v2261 = vpop.f32.mrb[0].mxu0
        %v2262 = vpop.f32.mrb[0].mxu0
        %2263 = vdwg.mxu0
        %2264 = vrot.lane.b32.xlu0 %v1419, 104
        %v2265 = vpop.permute.xlu0 %2264
        %v2267 = vsel %vm1420, %v2215, 0
        %v2270 = vsel %vm1544, %v2265, 0
        %2272 = vmatprep.subr.bf16.mxu0 0
        %2273 = vmatpush1.bf16.msra.mxu0 %v2270
        %2274 = vmatprep.subr.bf16.mxu0 0
        %2275 = vmatpush1.bf16.msra.mxu0 0
        %2276 = vmatprep.subr.bf16.mxu0 0
        %2277 = vmatpush1.bf16.msra.mxu0 0
        %2278 = vmatprep.subr.bf16.mxu0 0
        %2279 = vmatpush1.bf16.msra.mxu0 0
        %2280 = vmatprep.subr.bf16.mxu0 0
        %2281 = vmatpush1.bf16.msra.mxu0 0
        %2282 = vmatprep.subr.bf16.mxu0 0
        %2283 = vmatpush1.bf16.msra.mxu0 0
        %2284 = vmatprep.subr.bf16.mxu0 0
        %2285 = vmatpush1.bf16.msra.mxu0 0
        %2286 = vmatprep.subr.bf16.mxu0 0
        %2287 = vmatpush1.bf16.msra.mxu0 0
        %2288 = vmatprep.subr.bf16.mxu0 0
        %2289 = vmatpush1.bf16.msra.mxu0 0
        %2290 = vmatprep.subr.bf16.mxu0 0
        %2291 = vmatpush1.bf16.msra.mxu0 0
        %2292 = vmatprep.subr.bf16.mxu0 0
        %2293 = vmatpush1.bf16.msra.mxu0 0
        %2294 = vmatprep.subr.bf16.mxu0 0
        %2295 = vmatpush1.bf16.msra.mxu0 0
        %2296 = vmatprep.subr.bf16.mxu0 0
        %2297 = vmatpush1.bf16.msra.mxu0 0
        %2298 = vmatprep.subr.bf16.mxu0 0
        %2299 = vmatpush1.bf16.msra.mxu0 0
        %2300 = vmatprep.subr.bf16.mxu0 0
        %2301 = vmatpush1.bf16.msra.mxu0 0
        %2302 = vmatprep.subr.bf16.mxu0 0
        %2303 = vmatpush1.bf16.msra.mxu0 0
        %2304 = vmatprep.mubr.bf16.mxu0 0
        %2305 = vmatmul.mubr.bf16.gmra.mrb[0].mxu0 %v2267
        %v2306 = vpop.f32.mrb[0].mxu0
        %v2307 = vadd.f32 0.0, %v2306
        %v2308 = vpop.f32.mrb[0].mxu0
        %v2309 = vpop.f32.mrb[0].mxu0
        %v2310 = vpop.f32.mrb[0].mxu0
        %2311 = vdwg.mxu0
        %2314 = vrot.lane.b32.xlu0 %v1810, 8
        %v2315 = vpop.permute.xlu0 %2314
        %2316 = vrot.lane.b32.xlu0 %v1859, 8
        %v2317 = vpop.permute.xlu0 %2316
        %2322 = vrot.lane.b32.xlu0 %v2035, 16
        %v2323 = vpop.permute.xlu0 %2322
        %2324 = vrot.lane.b32.xlu0 %v2083, 16
        %v2325 = vpop.permute.xlu0 %2324
        %2330 = vrot.lane.b32.xlu0 %v2259, 24
        %v2331 = vpop.permute.xlu0 %2330
        %2332 = vrot.lane.b32.xlu0 %v2307, 24
        %v2333 = vpop.permute.xlu0 %2332
        %v2336 = vsel %vm1420, %v1583, %v2315
        %v2337 = vsel %vm1420, %v1629, %v2317
        %vm2338 = vcmask 130048
        %v2339 = vsel %vm2338, %v2336, %v2323
        %v2340 = vsel %vm2338, %v2337, %v2325
        %vm2341 = vcmask 195584
        %v2342 = vsel %vm2341, %v2339, %v2331
        %v2343 = vsel %vm2341, %v2340, %v2333
        %v2344 = vld [vmem:[%s1067] sm:$0xf]
        %v2345 = vld [vmem:[%s1067 + $0x4] sm:$0xf]
        %v2346 = vld [vmem:[%s1067 + $0x8] sm:$0xf]
        %v2347 = vld [vmem:[%s1067 + $0xc] sm:$0xf]
        %v2348 = vpack.c.bf16 %v2343, %v2342
        %v2349 = vld [vmem:[%s1070] sm:$0x1]
        %v2351 = vlaneseq
        %v2352 = vshrl.u32 %v2351, 7
        %v2353 = vsub.s32 0, %v2352
        %v2354 = vrot.slane %v2349, %v2353
        %v2360 = vunpack.c.l.b16 %v2344
        %v2361 = vunpack.c.l.b16 %v2345
        %v2362 = vunpack.c.l.b16 %v2346
        %v2363 = vunpack.c.l.b16 %v2347
        %v2364 = vpack.c.b16 %v2361, %v2360
        %v2365 = vpack.c.b16 %v2363, %v2362
        %v2369 = vsel %vm1241, %v2348, 0
        %2371 = vmatprep.subr.bf16.mxu0 0
        %2372 = vmatpush1.bf16.msra.mxu0 %v2364
        %2373 = vmatprep.subr.bf16.mxu0 0
        %2374 = vmatpush1.bf16.msra.mxu0 %v2365
        %2375 = vmatprep.subr.bf16.mxu0 0
        %2376 = vmatpush1.bf16.msra.mxu0 0
        %2377 = vmatprep.subr.bf16.mxu0 0
        %2378 = vmatpush1.bf16.msra.mxu0 0
        %2379 = vmatprep.subr.bf16.mxu0 0
        %2380 = vmatpush1.bf16.msra.mxu0 0
        %2381 = vmatprep.subr.bf16.mxu0 0
        %2382 = vmatpush1.bf16.msra.mxu0 0
        %2383 = vmatprep.subr.bf16.mxu0 0
        %2384 = vmatpush1.bf16.msra.mxu0 0
        %2385 = vmatprep.subr.bf16.mxu0 0
        %2386 = vmatpush1.bf16.msra.mxu0 0
        %2387 = vmatprep.subr.bf16.mxu0 0
        %2388 = vmatpush1.bf16.msra.mxu0 0
        %2389 = vmatprep.subr.bf16.mxu0 0
        %2390 = vmatpush1.bf16.msra.mxu0 0
        %2391 = vmatprep.subr.bf16.mxu0 0
        %2392 = vmatpush1.bf16.msra.mxu0 0
        %2393 = vmatprep.subr.bf16.mxu0 0
        %2394 = vmatpush1.bf16.msra.mxu0 0
        %2395 = vmatprep.subr.bf16.mxu0 0
        %2396 = vmatpush1.bf16.msra.mxu0 0
        %2397 = vmatprep.subr.bf16.mxu0 0
        %2398 = vmatpush1.bf16.msra.mxu0 0
        %2399 = vmatprep.subr.bf16.mxu0 0
        %2400 = vmatpush1.bf16.msra.mxu0 0
        %2401 = vmatprep.subr.bf16.mxu0 0
        %2402 = vmatpush1.bf16.msra.mxu0 0
        %2403 = vmatprep.mubr.bf16.mxu0 0
        %2404 = vmatmul.mubr.bf16.gmra.mrb[0].mxu0 %v2369
        %v2405 = vpop.f32.mrb[0].mxu0
        %v2406 = vadd.f32 %v2354, %v2405
        %v2407 = vpop.f32.mrb[0].mxu0
        %v2408 = vpop.f32.mrb[0].mxu0
        %v2409 = vadd.f32 %v2354, %v2408
        %v2410 = vpop.f32.mrb[0].mxu0
        %2411 = vdwg.mxu0
        %v2412 = vadd.f32 %v1208, %v2406
        %v2413 = vadd.f32 %v1209, %v2409
        %v2414 = vld [vmem:[%s1098] sm:$0x1]
        %v2415 = vld [vmem:[%s1101] sm:$0x1]
        %v2416 = vsel %vm1241, %v2412, 0.0
        %2417 = vadd.xlane.f32.xlu0 %v2416
        %v2418 = vpop.xlane.xlu0 %2417
        %v2419 = vsel %vm1241, %v2413, 0.0
        %2420 = vadd.xlane.f32.xlu0 %v2419
        %v2421 = vpop.xlane.xlu0 %2420
        %v2422 = vrcp.pop 32.0
        %v2423 = vmul.f32 %v2418, %v2422
        %v2424 = vmul.f32 %v2421, %v2422
        %v2425 = vsub.f32 %v2412, %v2423
        %v2426 = vsub.f32 %v2413, %v2424
        %v2427 = vmul.f32 %v2425, %v2425
        %v2428 = vmul.f32 %v2426, %v2426
        %v2429 = vsel %vm1241, %v2427, 0.0
        %2430 = vadd.xlane.f32.xlu0 %v2429
        %v2431 = vpop.xlane.xlu0 %2430
        %v2432 = vsel %vm1241, %v2428, 0.0
        %2433 = vadd.xlane.f32.xlu0 %v2432
        %v2434 = vpop.xlane.xlu0 %2433
        %v2435 = vmul.f32 %v2431, %v2422
        %v2436 = vmul.f32 %v2434, %v2422
        %v2437 = vadd.f32 %v2435, 1e-05
        %v2438 = vadd.f32 %v2436, 1e-05
        %v2439 = vrsqrt.pop %v2437
        %v2440 = vrsqrt.pop %v2438
        %v2441 = vmul.f32 %v2425, %v2439
        %v2442 = vmul.f32 %v2426, %v2440
        %v2444 = vlaneseq
        %v2445 = vshrl.u32 %v2444, 7
        %v2446 = vsub.s32 0, %v2445
        %v2447 = vrot.slane %v2414, %v2446
        %v2449 = vmul.f32 %v2441, %v2447
        %v2450 = vmul.f32 %v2442, %v2447
        %v2452 = vlaneseq
        %v2453 = vshrl.u32 %v2452, 7
        %v2454 = vsub.s32 0, %v2453
        %v2455 = vrot.slane %v2415, %v2454
        %v2457 = vadd.f32 %v2449, %v2455
        %v2458 = vadd.f32 %v2450, %v2455
        %v2459 = vld [vmem:[%s1075] sm:$0xf]
        %v2460 = vld [vmem:[%s1075 + $0x4] sm:$0xf]
        %v2461 = vld [vmem:[%s1075 + $0x8] sm:$0xf]
        %v2462 = vld [vmem:[%s1075 + $0xc] sm:$0xf]
        %v2463 = vpack.c.bf16 %v1210, %v1210
        %v2464 = vld [vmem:[%s1078] sm:$0x1]
        %v2466 = vlaneseq
        %v2467 = vshrl.u32 %v2466, 7
        %v2468 = vsub.s32 0, %v2467
        %v2469 = vrot.slane %v2464, %v2468
        %v2475 = vunpack.c.l.b16 %v2459
        %v2476 = vunpack.c.l.b16 %v2460
        %v2477 = vunpack.c.l.b16 %v2461
        %v2478 = vunpack.c.l.b16 %v2462
        %v2479 = vpack.c.b16 %v2476, %v2475
        %v2480 = vpack.c.b16 %v2478, %v2477
        %v2484 = vsel %vm1241, %v2463, 0
        %2486 = vmatprep.subr.bf16.mxu0 0
        %2487 = vmatpush1.bf16.msra.mxu0 %v2479
        %2488 = vmatprep.subr.bf16.mxu0 0
        %2489 = vmatpush1.bf16.msra.mxu0 %v2480
        %2490 = vmatprep.subr.bf16.mxu0 0
        %2491 = vmatpush1.bf16.msra.mxu0 0
        %2492 = vmatprep.subr.bf16.mxu0 0
        %2493 = vmatpush1.bf16.msra.mxu0 0
        %2494 = vmatprep.subr.bf16.mxu0 0
        %2495 = vmatpush1.bf16.msra.mxu0 0
        %2496 = vmatprep.subr.bf16.mxu0 0
        %2497 = vmatpush1.bf16.msra.mxu0 0
        %2498 = vmatprep.subr.bf16.mxu0 0
        %2499 = vmatpush1.bf16.msra.mxu0 0
        %2500 = vmatprep.subr.bf16.mxu0 0
        %2501 = vmatpush1.bf16.msra.mxu0 0
        %2502 = vmatprep.subr.bf16.mxu0 0
        %2503 = vmatpush1.bf16.msra.mxu0 0
        %2504 = vmatprep.subr.bf16.mxu0 0
        %2505 = vmatpush1.bf16.msra.mxu0 0
        %2506 = vmatprep.subr.bf16.mxu0 0
        %2507 = vmatpush1.bf16.msra.mxu0 0
        %2508 = vmatprep.subr.bf16.mxu0 0
        %2509 = vmatpush1.bf16.msra.mxu0 0
        %2510 = vmatprep.subr.bf16.mxu0 0
        %2511 = vmatpush1.bf16.msra.mxu0 0
        %2512 = vmatprep.subr.bf16.mxu0 0
        %2513 = vmatpush1.bf16.msra.mxu0 0
        %2514 = vmatprep.subr.bf16.mxu0 0
        %2515 = vmatpush1.bf16.msra.mxu0 0
        %2516 = vmatprep.subr.bf16.mxu0 0
        %2517 = vmatpush1.bf16.msra.mxu0 0
        %2518 = vmatprep.mubr.bf16.mxu0 0
        %2519 = vmatmul.mubr.bf16.gmra.mrb[0].mxu0 %v2484
        %v2520 = vpop.f32.mrb[0].mxu0
        %v2521 = vadd.f32 %v2469, %v2520
        %v2522 = vpop.f32.mrb[0].mxu0
        %v2523 = vpop.f32.mrb[0].mxu0
        %v2524 = vpop.f32.mrb[0].mxu0
        %2525 = vdwg.mxu0
        %v2528 = vunpack.c.l.s4 1966171168
        %v2529 = vunpack.c.0.s8 %v2528
        %v2530 = vlaneseq
        %v2531 = vshrl.u32 %v2530, 7
        %v2532 = vsub.s32 %v2529, %v2531
        %v2533 = vrot.slane %v2521, %v2532
        %v2534 = vcombine.high %v2533, %v2533
        %v2536 = vunpack.c.l.s4 1966171168
        %v2537 = vunpack.c.0.s8 %v2536
        %v2538 = vlaneseq
        %v2539 = vshrl.u32 %v2538, 7
        %v2540 = vsub.s32 %v2537, %v2539
        %v2541 = vrot.slane %v2533, %v2540
        %v2543 = vunpack.c.l.s4 1966171168
        %v2544 = vunpack.c.0.s8 %v2543
        %v2545 = vlaneseq
        %v2546 = vshrl.u32 %v2545, 7
        %v2547 = vsub.s32 %v2544, %v2546
        %v2548 = vrot.slane %v2534, %v2547
        %v2549 = vlaneseq
        %v2550 = vshrl.u32 %v2549, 7
        %v2551 = vsub.s32 0, %v2550
        %v2552 = vrot.slane %v2541, %v2551
        %v2553 = vlaneseq
        %v2554 = vshrl.u32 %v2553, 7
        %v2555 = vsub.s32 0, %v2554
        %v2556 = vrot.slane %v2548, %v2555
        %v2559 = vadd.f32 %v2457, %v2552
        %v2560 = vadd.f32 %v2458, %v2556
        %v2561 = vld [vmem:[%s1104] sm:$0x1]
        %v2562 = vld [vmem:[%s1107] sm:$0x1]
        %v2563 = vsel %vm1241, %v2559, 0.0
        %2564 = vadd.xlane.f32.xlu0 %v2563
        %v2565 = vpop.xlane.xlu0 %2564
        %v2566 = vsel %vm1241, %v2560, 0.0
        %2567 = vadd.xlane.f32.xlu0 %v2566
        %v2568 = vpop.xlane.xlu0 %2567
        %v2569 = vmul.f32 %v2565, %v2422
        %v2570 = vmul.f32 %v2568, %v2422
        %v2571 = vsub.f32 %v2559, %v2569
        %v2572 = vsub.f32 %v2560, %v2570
        %v2573 = vmul.f32 %v2571, %v2571
        %v2574 = vmul.f32 %v2572, %v2572
        %v2575 = vsel %vm1241, %v2573, 0.0
        %2576 = vadd.xlane.f32.xlu0 %v2575
        %v2577 = vpop.xlane.xlu0 %2576
        %v2578 = vsel %vm1241, %v2574, 0.0
        %2579 = vadd.xlane.f32.xlu0 %v2578
        %v2580 = vpop.xlane.xlu0 %2579
        %v2581 = vmul.f32 %v2577, %v2422
        %v2582 = vmul.f32 %v2580, %v2422
        %v2583 = vadd.f32 %v2581, 1e-05
        %v2584 = vadd.f32 %v2582, 1e-05
        %v2585 = vrsqrt.pop %v2583
        %v2586 = vrsqrt.pop %v2584
        %v2587 = vmul.f32 %v2571, %v2585
        %v2588 = vmul.f32 %v2572, %v2586
        %v2590 = vlaneseq
        %v2591 = vshrl.u32 %v2590, 7
        %v2592 = vsub.s32 0, %v2591
        %v2593 = vrot.slane %v2561, %v2592
        %v2595 = vmul.f32 %v2587, %v2593
        %v2596 = vmul.f32 %v2588, %v2593
        %v2598 = vlaneseq
        %v2599 = vshrl.u32 %v2598, 7
        %v2600 = vsub.s32 0, %v2599
        %v2601 = vrot.slane %v2562, %v2600
        %v2603 = vadd.f32 %v2595, %v2601
        %v2604 = vadd.f32 %v2596, %v2601
        %v2605 = vld [vmem:[%s1083] sm:$0xff]
        %v2606 = vld [vmem:[%s1083 + $0x8] sm:$0xff]
        %v2607 = vld [vmem:[%s1083 + $0x10] sm:$0xff]
        %v2608 = vld [vmem:[%s1083 + $0x18] sm:$0xff]
        %v2609 = vld [vmem:[%s1083 + $0x20] sm:$0xff]
        %v2610 = vld [vmem:[%s1083 + $0x28] sm:$0xff]
        %v2611 = vld [vmem:[%s1083 + $0x30] sm:$0xff]
        %v2612 = vld [vmem:[%s1083 + $0x38] sm:$0xff]
        %v2613 = vld [vmem:[%s1083 + $0x40] sm:$0xff]
        %v2614 = vld [vmem:[%s1083 + $0x48] sm:$0xff]
        %v2615 = vld [vmem:[%s1083 + $0x50] sm:$0xff]
        %v2616 = vld [vmem:[%s1083 + $0x58] sm:$0xff]
        %v2617 = vld [vmem:[%s1083 + $0x60] sm:$0xff]
        %v2618 = vld [vmem:[%s1083 + $0x68] sm:$0xff]
        %v2619 = vld [vmem:[%s1083 + $0x70] sm:$0xff]
        %v2620 = vld [vmem:[%s1083 + $0x78] sm:$0xff]
        %v2621 = vld [vmem:[%s1083 + $0x80] sm:$0xff]
        %v2622 = vld [vmem:[%s1083 + $0x88] sm:$0xff]
        %v2623 = vld [vmem:[%s1083 + $0x90] sm:$0xff]
        %v2624 = vld [vmem:[%s1083 + $0x98] sm:$0xff]
        %v2625 = vld [vmem:[%s1083 + $0xa0] sm:$0xff]
        %v2626 = vld [vmem:[%s1083 + $0xa8] sm:$0xff]
        %v2627 = vld [vmem:[%s1083 + $0xb0] sm:$0xff]
        %v2628 = vld [vmem:[%s1083 + $0xb8] sm:$0xff]
        %v2629 = vld [vmem:[%s1083 + $0xc0] sm:$0xff]
        %v2630 = vld [vmem:[%s1083 + $0xc8] sm:$0xff]
        %v2631 = vld [vmem:[%s1083 + $0xd0] sm:$0xff]
        %v2632 = vld [vmem:[%s1083 + $0xd8] sm:$0xff]
        %v2633 = vld [vmem:[%s1083 + $0xe0] sm:$0xff]
        %v2634 = vld [vmem:[%s1083 + $0xe8] sm:$0xff]
        %v2635 = vld [vmem:[%s1083 + $0xf0] sm:$0xff]
        %v2636 = vld [vmem:[%s1083 + $0xf8] sm:$0xff]
        %v2637 = vpack.c.bf16 %v2604, %v2603
        %v2638 = vld [vmem:[%s1087] sm:$0xff]
        %v2639 = vld [vmem:[%s1087 + $0x8] sm:$0xff]
        %v2642 = vlaneseq
        %v2643 = vshrl.u32 %v2642, 7
        %v2644 = vsub.s32 0, %v2643
        %v2645 = vrot.slane %v2638, %v2644
        %v2646 = vlaneseq
        %v2647 = vshrl.u32 %v2646, 7
        %v2648 = vsub.s32 1, %v2647
        %v2649 = vrot.slane %v2638, %v2648
        %v2650 = vlaneseq
        %v2651 = vshrl.u32 %v2650, 7
        %v2652 = vsub.s32 2, %v2651
        %v2653 = vrot.slane %v2638, %v2652
        %v2654 = vlaneseq
        %v2655 = vshrl.u32 %v2654, 7
        %v2656 = vsub.s32 3, %v2655
        %v2657 = vrot.slane %v2638, %v2656
        %v2658 = vlaneseq
        %v2659 = vshrl.u32 %v2658, 7
        %v2660 = vsub.s32 4, %v2659
        %v2661 = vrot.slane %v2638, %v2660
        %v2662 = vlaneseq
        %v2663 = vshrl.u32 %v2662, 7
        %v2664 = vsub.s32 5, %v2663
        %v2665 = vrot.slane %v2638, %v2664
        %v2666 = vlaneseq
        %v2667 = vshrl.u32 %v2666, 7
        %v2668 = vsub.s32 6, %v2667
        %v2669 = vrot.slane %v2638, %v2668
        %v2670 = vlaneseq
        %v2671 = vshrl.u32 %v2670, 7
        %v2672 = vsub.s32 7, %v2671
        %v2673 = vrot.slane %v2638, %v2672
        %v2674 = vlaneseq
        %v2675 = vshrl.u32 %v2674, 7
        %v2676 = vsub.s32 0, %v2675
        %v2677 = vrot.slane %v2639, %v2676
        %v2678 = vlaneseq
        %v2679 = vshrl.u32 %v2678, 7
        %v2680 = vsub.s32 1, %v2679
        %v2681 = vrot.slane %v2639, %v2680
        %v2682 = vlaneseq
        %v2683 = vshrl.u32 %v2682, 7
        %v2684 = vsub.s32 2, %v2683
        %v2685 = vrot.slane %v2639, %v2684
        %v2686 = vlaneseq
        %v2687 = vshrl.u32 %v2686, 7
        %v2688 = vsub.s32 3, %v2687
        %v2689 = vrot.slane %v2639, %v2688
        %v2690 = vlaneseq
        %v2691 = vshrl.u32 %v2690, 7
        %v2692 = vsub.s32 4, %v2691
        %v2693 = vrot.slane %v2639, %v2692
        %v2694 = vlaneseq
        %v2695 = vshrl.u32 %v2694, 7
        %v2696 = vsub.s32 5, %v2695
        %v2697 = vrot.slane %v2639, %v2696
        %v2698 = vlaneseq
        %v2699 = vshrl.u32 %v2698, 7
        %v2700 = vsub.s32 6, %v2699
        %v2701 = vrot.slane %v2639, %v2700
        %v2702 = vlaneseq
        %v2703 = vshrl.u32 %v2702, 7
        %v2704 = vsub.s32 7, %v2703
        %v2705 = vrot.slane %v2639, %v2704
        %v2754 = vunpack.c.l.b16 %v2605
        %v2755 = vunpack.c.h.b16 %v2605
        %v2756 = vunpack.c.l.b16 %v2606
        %v2757 = vunpack.c.h.b16 %v2606
        %v2758 = vunpack.c.l.b16 %v2607
        %v2759 = vunpack.c.h.b16 %v2607
        %v2760 = vunpack.c.l.b16 %v2608
        %v2761 = vunpack.c.h.b16 %v2608
        %v2762 = vunpack.c.l.b16 %v2609
        %v2763 = vunpack.c.h.b16 %v2609
        %v2764 = vunpack.c.l.b16 %v2610
        %v2765 = vunpack.c.h.b16 %v2610
        %v2766 = vunpack.c.l.b16 %v2611
        %v2767 = vunpack.c.h.b16 %v2611
        %v2768 = vunpack.c.l.b16 %v2612
        %v2769 = vunpack.c.h.b16 %v2612
        %v2770 = vunpack.c.l.b16 %v2613
        %v2771 = vunpack.c.h.b16 %v2613
        %v2772 = vunpack.c.l.b16 %v2614
        %v2773 = vunpack.c.h.b16 %v2614
        %v2774 = vunpack.c.l.b16 %v2615
        %v2775 = vunpack.c.h.b16 %v2615
        %v2776 = vunpack.c.l.b16 %v2616
        %v2777 = vunpack.c.h.b16 %v2616
        %v2778 = vunpack.c.l.b16 %v2617
        %v2779 = vunpack.c.h.b16 %v2617
        %v2780 = vunpack.c.l.b16 %v2618
        %v2781 = vunpack.c.h.b16 %v2618
        %v2782 = vunpack.c.l.b16 %v2619
        %v2783 = vunpack.c.h.b16 %v2619
        %v2784 = vunpack.c.l.b16 %v2620
        %v2785 = vunpack.c.h.b16 %v2620
        %v2786 = vunpack.c.l.b16 %v2621
        %v2787 = vunpack.c.h.b16 %v2621
        %v2788 = vunpack.c.l.b16 %v2622
        %v2789 = vunpack.c.h.b16 %v2622
        %v2790 = vunpack.c.l.b16 %v2623
        %v2791 = vunpack.c.h.b16 %v2623
        %v2792 = vunpack.c.l.b16 %v2624
        %v2793 = vunpack.c.h.b16 %v2624
        %v2794 = vunpack.c.l.b16 %v2625
        %v2795 = vunpack.c.h.b16 %v2625
        %v2796 = vunpack.c.l.b16 %v2626
        %v2797 = vunpack.c.h.b16 %v2626
        %v2798 = vunpack.c.l.b16 %v2627
        %v2799 = vunpack.c.h.b16 %v2627
        %v2800 = vunpack.c.l.b16 %v2628
        %v2801 = vunpack.c.h.b16 %v2628
        %v2802 = vunpack.c.l.b16 %v2629
        %v2803 = vunpack.c.h.b16 %v2629
        %v2804 = vunpack.c.l.b16 %v2630
        %v2805 = vunpack.c.h.b16 %v2630
        %v2806 = vunpack.c.l.b16 %v2631
        %v2807 = vunpack.c.h.b16 %v2631
        %v2808 = vunpack.c.l.b16 %v2632
        %v2809 = vunpack.c.h.b16 %v2632
        %v2810 = vunpack.c.l.b16 %v2633
        %v2811 = vunpack.c.h.b16 %v2633
        %v2812 = vunpack.c.l.b16 %v2634
        %v2813 = vunpack.c.h.b16 %v2634
        %v2814 = vunpack.c.l.b16 %v2635
        %v2815 = vunpack.c.h.b16 %v2635
        %v2816 = vunpack.c.l.b16 %v2636
        %v2817 = vunpack.c.h.b16 %v2636
        %v2818 = vpack.c.b16 %v2770, %v2754
        %v2819 = vpack.c.b16 %v2771, %v2755
        %v2820 = vpack.c.b16 %v2772, %v2756
        %v2821 = vpack.c.b16 %v2773, %v2757
        %v2822 = vpack.c.b16 %v2774, %v2758
        %v2823 = vpack.c.b16 %v2775, %v2759
        %v2824 = vpack.c.b16 %v2776, %v2760
        %v2825 = vpack.c.b16 %v2777, %v2761
        %v2826 = vpack.c.b16 %v2778, %v2762
        %v2827 = vpack.c.b16 %v2779, %v2763
        %v2828 = vpack.c.b16 %v2780, %v2764
        %v2829 = vpack.c.b16 %v2781, %v2765
        %v2830 = vpack.c.b16 %v2782, %v2766
        %v2831 = vpack.c.b16 %v2783, %v2767
        %v2832 = vpack.c.b16 %v2784, %v2768
        %v2833 = vpack.c.b16 %v2785, %v2769
        %v2834 = vpack.c.b16 %v2802, %v2786
        %v2835 = vpack.c.b16 %v2803, %v2787
        %v2836 = vpack.c.b16 %v2804, %v2788
        %v2837 = vpack.c.b16 %v2805, %v2789
        %v2838 = vpack.c.b16 %v2806, %v2790
        %v2839 = vpack.c.b16 %v2807, %v2791
        %v2840 = vpack.c.b16 %v2808, %v2792
        %v2841 = vpack.c.b16 %v2809, %v2793
        %v2842 = vpack.c.b16 %v2810, %v2794
        %v2843 = vpack.c.b16 %v2811, %v2795
        %v2844 = vpack.c.b16 %v2812, %v2796
        %v2845 = vpack.c.b16 %v2813, %v2797
        %v2846 = vpack.c.b16 %v2814, %v2798
        %v2847 = vpack.c.b16 %v2815, %v2799
        %v2848 = vpack.c.b16 %v2816, %v2800
        %v2849 = vpack.c.b16 %v2817, %v2801
        %v2883 = vsel %vm1241, %v2637, 0
        %2885 = vmatprep.subr.bf16.mxu0 %v2819
        %2886 = vmatpush1.bf16.msra.mxu0 %v2818
        %2887 = vmatprep.subr.bf16.mxu0 %v2835
        %2888 = vmatpush1.bf16.msra.mxu0 %v2834
        %2889 = vmatprep.subr.bf16.mxu0 0
        %2890 = vmatpush1.bf16.msra.mxu0 0
        %2891 = vmatprep.subr.bf16.mxu0 0
        %2892 = vmatpush1.bf16.msra.mxu0 0
        %2893 = vmatprep.subr.bf16.mxu0 0
        %2894 = vmatpush1.bf16.msra.mxu0 0
        %2895 = vmatprep.subr.bf16.mxu0 0
        %2896 = vmatpush1.bf16.msra.mxu0 0
        %2897 = vmatprep.subr.bf16.mxu0 0
        %2898 = vmatpush1.bf16.msra.mxu0 0
        %2899 = vmatprep.subr.bf16.mxu0 0
        %2900 = vmatpush1.bf16.msra.mxu0 0
        %2901 = vmatprep.subr.bf16.mxu0 0
        %2902 = vmatpush1.bf16.msra.mxu0 0
        %2903 = vmatprep.subr.bf16.mxu0 0
        %2904 = vmatpush1.bf16.msra.mxu0 0
        %2905 = vmatprep.subr.bf16.mxu0 0
        %2906 = vmatpush1.bf16.msra.mxu0 0
        %2907 = vmatprep.subr.bf16.mxu0 0
        %2908 = vmatpush1.bf16.msra.mxu0 0
        %2909 = vmatprep.subr.bf16.mxu0 0
        %2910 = vmatpush1.bf16.msra.mxu0 0
        %2911 = vmatprep.subr.bf16.mxu0 0
        %2912 = vmatpush1.bf16.msra.mxu0 0
        %2913 = vmatprep.subr.bf16.mxu0 0
        %2914 = vmatpush1.bf16.msra.mxu0 0
        %2915 = vmatprep.subr.bf16.mxu0 0
        %2916 = vmatpush1.bf16.msra.mxu0 0
        %2917 = vmatprep.mubr.bf16.mxu0 0
        %2918 = vmatmul.mubr.bf16.gmra.mrb[0].mxu0 %v2883
        %v2919 = vpop.f32.mrb[0].mxu0
        %v2920 = vadd.f32 %v2645, %v2919
        %v2921 = vpop.f32.mrb[0].mxu0
        %v2922 = vadd.f32 %v2649, %v2921
        %v2923 = vpop.f32.mrb[0].mxu0
        %v2924 = vadd.f32 %v2645, %v2923
        %v2925 = vpop.f32.mrb[0].mxu0
        %v2926 = vadd.f32 %v2649, %v2925
        %2927 = vdwg.mxu0
        %2928 = vmatprep.subr.bf16.mxu0 %v2821
        %2929 = vmatpush1.bf16.msra.mxu0 %v2820
        %2930 = vmatprep.subr.bf16.mxu0 %v2837
        %2931 = vmatpush1.bf16.msra.mxu0 %v2836
        %2932 = vmatprep.subr.bf16.mxu0 0
        %2933 = vmatpush1.bf16.msra.mxu0 0
        %2934 = vmatprep.subr.bf16.mxu0 0
        %2935 = vmatpush1.bf16.msra.mxu0 0
        %2936 = vmatprep.subr.bf16.mxu0 0
        %2937 = vmatpush1.bf16.msra.mxu0 0
        %2938 = vmatprep.subr.bf16.mxu0 0
        %2939 = vmatpush1.bf16.msra.mxu0 0
        %2940 = vmatprep.subr.bf16.mxu0 0
        %2941 = vmatpush1.bf16.msra.mxu0 0
        %2942 = vmatprep.subr.bf16.mxu0 0
        %2943 = vmatpush1.bf16.msra.mxu0 0
        %2944 = vmatprep.subr.bf16.mxu0 0
        %2945 = vmatpush1.bf16.msra.mxu0 0
        %2946 = vmatprep.subr.bf16.mxu0 0
        %2947 = vmatpush1.bf16.msra.mxu0 0
        %2948 = vmatprep.subr.bf16.mxu0 0
        %2949 = vmatpush1.bf16.msra.mxu0 0
        %2950 = vmatprep.subr.bf16.mxu0 0
        %2951 = vmatpush1.bf16.msra.mxu0 0
        %2952 = vmatprep.subr.bf16.mxu0 0
        %2953 = vmatpush1.bf16.msra.mxu0 0
        %2954 = vmatprep.subr.bf16.mxu0 0
        %2955 = vmatpush1.bf16.msra.mxu0 0
        %2956 = vmatprep.subr.bf16.mxu0 0
        %2957 = vmatpush1.bf16.msra.mxu0 0
        %2958 = vmatprep.subr.bf16.mxu0 0
        %2959 = vmatpush1.bf16.msra.mxu0 0
        %2960 = vmatprep.mubr.bf16.mxu0 0
        %2961 = vmatmul.mubr.bf16.gmra.mrb[0].mxu0 %v2883
        %v2962 = vpop.f32.mrb[0].mxu0
        %v2963 = vadd.f32 %v2653, %v2962
        %v2964 = vpop.f32.mrb[0].mxu0
        %v2965 = vadd.f32 %v2657, %v2964
        %v2966 = vpop.f32.mrb[0].mxu0
        %v2967 = vadd.f32 %v2653, %v2966
        %v2968 = vpop.f32.mrb[0].mxu0
        %v2969 = vadd.f32 %v2657, %v2968
        %2970 = vdwg.mxu0
        %2971 = vmatprep.subr.bf16.mxu0 %v2823
        %2972 = vmatpush1.bf16.msra.mxu0 %v2822
        %2973 = vmatprep.subr.bf16.mxu0 %v2839
        %2974 = vmatpush1.bf16.msra.mxu0 %v2838
        %2975 = vmatprep.subr.bf16.mxu0 0
        %2976 = vmatpush1.bf16.msra.mxu0 0
        %2977 = vmatprep.subr.bf16.mxu0 0
        %2978 = vmatpush1.bf16.msra.mxu0 0
        %2979 = vmatprep.subr.bf16.mxu0 0
        %2980 = vmatpush1.bf16.msra.mxu0 0
        %2981 = vmatprep.subr.bf16.mxu0 0
        %2982 = vmatpush1.bf16.msra.mxu0 0
        %2983 = vmatprep.subr.bf16.mxu0 0
        %2984 = vmatpush1.bf16.msra.mxu0 0
        %2985 = vmatprep.subr.bf16.mxu0 0
        %2986 = vmatpush1.bf16.msra.mxu0 0
        %2987 = vmatprep.subr.bf16.mxu0 0
        %2988 = vmatpush1.bf16.msra.mxu0 0
        %2989 = vmatprep.subr.bf16.mxu0 0
        %2990 = vmatpush1.bf16.msra.mxu0 0
        %2991 = vmatprep.subr.bf16.mxu0 0
        %2992 = vmatpush1.bf16.msra.mxu0 0
        %2993 = vmatprep.subr.bf16.mxu0 0
        %2994 = vmatpush1.bf16.msra.mxu0 0
        %2995 = vmatprep.subr.bf16.mxu0 0
        %2996 = vmatpush1.bf16.msra.mxu0 0
        %2997 = vmatprep.subr.bf16.mxu0 0
        %2998 = vmatpush1.bf16.msra.mxu0 0
        %2999 = vmatprep.subr.bf16.mxu0 0
        %3000 = vmatpush1.bf16.msra.mxu0 0
        %3001 = vmatprep.subr.bf16.mxu0 0
        %3002 = vmatpush1.bf16.msra.mxu0 0
        %3003 = vmatprep.mubr.bf16.mxu0 0
        %3004 = vmatmul.mubr.bf16.gmra.mrb[0].mxu0 %v2883
        %v3005 = vpop.f32.mrb[0].mxu0
        %v3006 = vadd.f32 %v2661, %v3005
        %v3007 = vpop.f32.mrb[0].mxu0
        %v3008 = vadd.f32 %v2665, %v3007
        %v3009 = vpop.f32.mrb[0].mxu0
        %v3010 = vadd.f32 %v2661, %v3009
        %v3011 = vpop.f32.mrb[0].mxu0
        %v3012 = vadd.f32 %v2665, %v3011
        %3013 = vdwg.mxu0
        %3014 = vmatprep.subr.bf16.mxu0 %v2825
        %3015 = vmatpush1.bf16.msra.mxu0 %v2824
        %3016 = vmatprep.subr.bf16.mxu0 %v2841
        %3017 = vmatpush1.bf16.msra.mxu0 %v2840
        %3018 = vmatprep.subr.bf16.mxu0 0
        %3019 = vmatpush1.bf16.msra.mxu0 0
        %3020 = vmatprep.subr.bf16.mxu0 0
        %3021 = vmatpush1.bf16.msra.mxu0 0
        %3022 = vmatprep.subr.bf16.mxu0 0
        %3023 = vmatpush1.bf16.msra.mxu0 0
        %3024 = vmatprep.subr.bf16.mxu0 0
        %3025 = vmatpush1.bf16.msra.mxu0 0
        %3026 = vmatprep.subr.bf16.mxu0 0
        %3027 = vmatpush1.bf16.msra.mxu0 0
        %3028 = vmatprep.subr.bf16.mxu0 0
        %3029 = vmatpush1.bf16.msra.mxu0 0
        %3030 = vmatprep.subr.bf16.mxu0 0
        %3031 = vmatpush1.bf16.msra.mxu0 0
        %3032 = vmatprep.subr.bf16.mxu0 0
        %3033 = vmatpush1.bf16.msra.mxu0 0
        %3034 = vmatprep.subr.bf16.mxu0 0
        %3035 = vmatpush1.bf16.msra.mxu0 0
        %3036 = vmatprep.subr.bf16.mxu0 0
        %3037 = vmatpush1.bf16.msra.mxu0 0
        %3038 = vmatprep.subr.bf16.mxu0 0
        %3039 = vmatpush1.bf16.msra.mxu0 0
        %3040 = vmatprep.subr.bf16.mxu0 0
        %3041 = vmatpush1.bf16.msra.mxu0 0
        %3042 = vmatprep.subr.bf16.mxu0 0
        %3043 = vmatpush1.bf16.msra.mxu0 0
        %3044 = vmatprep.subr.bf16.mxu0 0
        %3045 = vmatpush1.bf16.msra.mxu0 0
        %3046 = vmatprep.mubr.bf16.mxu0 0
        %3047 = vmatmul.mubr.bf16.gmra.mrb[0].mxu0 %v2883
        %v3048 = vpop.f32.mrb[0].mxu0
        %v3049 = vadd.f32 %v2669, %v3048
        %v3050 = vpop.f32.mrb[0].mxu0
        %v3051 = vadd.f32 %v2673, %v3050
        %v3052 = vpop.f32.mrb[0].mxu0
        %v3053 = vadd.f32 %v2669, %v3052
        %v3054 = vpop.f32.mrb[0].mxu0
        %v3055 = vadd.f32 %v2673, %v3054
        %3056 = vdwg.mxu0
        %3057 = vmatprep.subr.bf16.mxu0 %v2827
        %3058 = vmatpush1.bf16.msra.mxu0 %v2826
        %3059 = vmatprep.subr.bf16.mxu0 %v2843
        %3060 = vmatpush1.bf16.msra.mxu0 %v2842
        %3061 = vmatprep.subr.bf16.mxu0 0
        %3062 = vmatpush1.bf16.msra.mxu0 0
        %3063 = vmatprep.subr.bf16.mxu0 0
        %3064 = vmatpush1.bf16.msra.mxu0 0
        %3065 = vmatprep.subr.bf16.mxu0 0
        %3066 = vmatpush1.bf16.msra.mxu0 0
        %3067 = vmatprep.subr.bf16.mxu0 0
        %3068 = vmatpush1.bf16.msra.mxu0 0
        %3069 = vmatprep.subr.bf16.mxu0 0
        %3070 = vmatpush1.bf16.msra.mxu0 0
        %3071 = vmatprep.subr.bf16.mxu0 0
        %3072 = vmatpush1.bf16.msra.mxu0 0
        %3073 = vmatprep.subr.bf16.mxu0 0
        %3074 = vmatpush1.bf16.msra.mxu0 0
        %3075 = vmatprep.subr.bf16.mxu0 0
        %3076 = vmatpush1.bf16.msra.mxu0 0
        %3077 = vmatprep.subr.bf16.mxu0 0
        %3078 = vmatpush1.bf16.msra.mxu0 0
        %3079 = vmatprep.subr.bf16.mxu0 0
        %3080 = vmatpush1.bf16.msra.mxu0 0
        %3081 = vmatprep.subr.bf16.mxu0 0
        %3082 = vmatpush1.bf16.msra.mxu0 0
        %3083 = vmatprep.subr.bf16.mxu0 0
        %3084 = vmatpush1.bf16.msra.mxu0 0
        %3085 = vmatprep.subr.bf16.mxu0 0
        %3086 = vmatpush1.bf16.msra.mxu0 0
        %3087 = vmatprep.subr.bf16.mxu0 0
        %3088 = vmatpush1.bf16.msra.mxu0 0
        %3089 = vmatprep.mubr.bf16.mxu0 0
        %3090 = vmatmul.mubr.bf16.gmra.mrb[0].mxu0 %v2883
        %v3091 = vpop.f32.mrb[0].mxu0
        %v3092 = vadd.f32 %v2677, %v3091
        %v3093 = vpop.f32.mrb[0].mxu0
        %v3094 = vadd.f32 %v2681, %v3093
        %v3095 = vpop.f32.mrb[0].mxu0
        %v3096 = vadd.f32 %v2677, %v3095
        %v3097 = vpop.f32.mrb[0].mxu0
        %v3098 = vadd.f32 %v2681, %v3097
        %3099 = vdwg.mxu0
        %3100 = vmatprep.subr.bf16.mxu0 %v2829
        %3101 = vmatpush1.bf16.msra.mxu0 %v2828
        %3102 = vmatprep.subr.bf16.mxu0 %v2845
        %3103 = vmatpush1.bf16.msra.mxu0 %v2844
        %3104 = vmatprep.subr.bf16.mxu0 0
        %3105 = vmatpush1.bf16.msra.mxu0 0
        %3106 = vmatprep.subr.bf16.mxu0 0
        %3107 = vmatpush1.bf16.msra.mxu0 0
        %3108 = vmatprep.subr.bf16.mxu0 0
        %3109 = vmatpush1.bf16.msra.mxu0 0
        %3110 = vmatprep.subr.bf16.mxu0 0
        %3111 = vmatpush1.bf16.msra.mxu0 0
        %3112 = vmatprep.subr.bf16.mxu0 0
        %3113 = vmatpush1.bf16.msra.mxu0 0
        %3114 = vmatprep.subr.bf16.mxu0 0
        %3115 = vmatpush1.bf16.msra.mxu0 0
        %3116 = vmatprep.subr.bf16.mxu0 0
        %3117 = vmatpush1.bf16.msra.mxu0 0
        %3118 = vmatprep.subr.bf16.mxu0 0
        %3119 = vmatpush1.bf16.msra.mxu0 0
        %3120 = vmatprep.subr.bf16.mxu0 0
        %3121 = vmatpush1.bf16.msra.mxu0 0
        %3122 = vmatprep.subr.bf16.mxu0 0
        %3123 = vmatpush1.bf16.msra.mxu0 0
        %3124 = vmatprep.subr.bf16.mxu0 0
        %3125 = vmatpush1.bf16.msra.mxu0 0
        %3126 = vmatprep.subr.bf16.mxu0 0
        %3127 = vmatpush1.bf16.msra.mxu0 0
        %3128 = vmatprep.subr.bf16.mxu0 0
        %3129 = vmatpush1.bf16.msra.mxu0 0
        %3130 = vmatprep.subr.bf16.mxu0 0
        %3131 = vmatpush1.bf16.msra.mxu0 0
        %3132 = vmatprep.mubr.bf16.mxu0 0
        %3133 = vmatmul.mubr.bf16.gmra.mrb[0].mxu0 %v2883
        %v3134 = vpop.f32.mrb[0].mxu0
        %v3135 = vadd.f32 %v2685, %v3134
        %v3136 = vpop.f32.mrb[0].mxu0
        %v3137 = vadd.f32 %v2689, %v3136
        %v3138 = vpop.f32.mrb[0].mxu0
        %v3139 = vadd.f32 %v2685, %v3138
        %v3140 = vpop.f32.mrb[0].mxu0
        %v3141 = vadd.f32 %v2689, %v3140
        %3142 = vdwg.mxu0
        %3143 = vmatprep.subr.bf16.mxu0 %v2831
        %3144 = vmatpush1.bf16.msra.mxu0 %v2830
        %3145 = vmatprep.subr.bf16.mxu0 %v2847
        %3146 = vmatpush1.bf16.msra.mxu0 %v2846
        %3147 = vmatprep.subr.bf16.mxu0 0
        %3148 = vmatpush1.bf16.msra.mxu0 0
        %3149 = vmatprep.subr.bf16.mxu0 0
        %3150 = vmatpush1.bf16.msra.mxu0 0
        %3151 = vmatprep.subr.bf16.mxu0 0
        %3152 = vmatpush1.bf16.msra.mxu0 0
        %3153 = vmatprep.subr.bf16.mxu0 0
        %3154 = vmatpush1.bf16.msra.mxu0 0
        %3155 = vmatprep.subr.bf16.mxu0 0
        %3156 = vmatpush1.bf16.msra.mxu0 0
        %3157 = vmatprep.subr.bf16.mxu0 0
        %3158 = vmatpush1.bf16.msra.mxu0 0
        %3159 = vmatprep.subr.bf16.mxu0 0
        %3160 = vmatpush1.bf16.msra.mxu0 0
        %3161 = vmatprep.subr.bf16.mxu0 0
        %3162 = vmatpush1.bf16.msra.mxu0 0
        %3163 = vmatprep.subr.bf16.mxu0 0
        %3164 = vmatpush1.bf16.msra.mxu0 0
        %3165 = vmatprep.subr.bf16.mxu0 0
        %3166 = vmatpush1.bf16.msra.mxu0 0
        %3167 = vmatprep.subr.bf16.mxu0 0
        %3168 = vmatpush1.bf16.msra.mxu0 0
        %3169 = vmatprep.subr.bf16.mxu0 0
        %3170 = vmatpush1.bf16.msra.mxu0 0
        %3171 = vmatprep.subr.bf16.mxu0 0
        %3172 = vmatpush1.bf16.msra.mxu0 0
        %3173 = vmatprep.subr.bf16.mxu0 0
        %3174 = vmatpush1.bf16.msra.mxu0 0
        %3175 = vmatprep.mubr.bf16.mxu0 0
        %3176 = vmatmul.mubr.bf16.gmra.mrb[0].mxu0 %v2883
        %v3177 = vpop.f32.mrb[0].mxu0
        %v3178 = vadd.f32 %v2693, %v3177
        %v3179 = vpop.f32.mrb[0].mxu0
        %v3180 = vadd.f32 %v2697, %v3179
        %v3181 = vpop.f32.mrb[0].mxu0
        %v3182 = vadd.f32 %v2693, %v3181
        %v3183 = vpop.f32.mrb[0].mxu0
        %v3184 = vadd.f32 %v2697, %v3183
        %3185 = vdwg.mxu0
        %3186 = vmatprep.subr.bf16.mxu0 %v2833
        %3187 = vmatpush1.bf16.msra.mxu0 %v2832
        %3188 = vmatprep.subr.bf16.mxu0 %v2849
        %3189 = vmatpush1.bf16.msra.mxu0 %v2848
        %3190 = vmatprep.subr.bf16.mxu0 0
        %3191 = vmatpush1.bf16.msra.mxu0 0
        %3192 = vmatprep.subr.bf16.mxu0 0
        %3193 = vmatpush1.bf16.msra.mxu0 0
        %3194 = vmatprep.subr.bf16.mxu0 0
        %3195 = vmatpush1.bf16.msra.mxu0 0
        %3196 = vmatprep.subr.bf16.mxu0 0
        %3197 = vmatpush1.bf16.msra.mxu0 0
        %3198 = vmatprep.subr.bf16.mxu0 0
        %3199 = vmatpush1.bf16.msra.mxu0 0
        %3200 = vmatprep.subr.bf16.mxu0 0
        %3201 = vmatpush1.bf16.msra.mxu0 0
        %3202 = vmatprep.subr.bf16.mxu0 0
        %3203 = vmatpush1.bf16.msra.mxu0 0
        %3204 = vmatprep.subr.bf16.mxu0 0
        %3205 = vmatpush1.bf16.msra.mxu0 0
        %3206 = vmatprep.subr.bf16.mxu0 0
        %3207 = vmatpush1.bf16.msra.mxu0 0
        %3208 = vmatprep.subr.bf16.mxu0 0
        %3209 = vmatpush1.bf16.msra.mxu0 0
        %3210 = vmatprep.subr.bf16.mxu0 0
        %3211 = vmatpush1.bf16.msra.mxu0 0
        %3212 = vmatprep.subr.bf16.mxu0 0
        %3213 = vmatpush1.bf16.msra.mxu0 0
        %3214 = vmatprep.subr.bf16.mxu0 0
        %3215 = vmatpush1.bf16.msra.mxu0 0
        %3216 = vmatprep.subr.bf16.mxu0 0
        %3217 = vmatpush1.bf16.msra.mxu0 0
        %3218 = vmatprep.mubr.bf16.mxu0 0
        %3219 = vmatmul.mubr.bf16.gmra.mrb[0].mxu0 %v2883
        %v3220 = vpop.f32.mrb[0].mxu0
        %v3221 = vadd.f32 %v2701, %v3220
        %v3222 = vpop.f32.mrb[0].mxu0
        %v3223 = vadd.f32 %v2705, %v3222
        %v3224 = vpop.f32.mrb[0].mxu0
        %v3225 = vadd.f32 %v2701, %v3224
        %v3226 = vpop.f32.mrb[0].mxu0
        %v3227 = vadd.f32 %v2705, %v3226
        %3228 = vdwg.mxu0
        %v3229 = vmax.f32 %v2920, 0.0
        %v3230 = vmax.f32 %v2922, 0.0
        %v3231 = vmax.f32 %v2963, 0.0
        %v3232 = vmax.f32 %v2965, 0.0
        %v3233 = vmax.f32 %v3006, 0.0
        %v3234 = vmax.f32 %v3008, 0.0
        %v3235 = vmax.f32 %v3049, 0.0
        %v3236 = vmax.f32 %v3051, 0.0
        %v3237 = vmax.f32 %v3092, 0.0
        %v3238 = vmax.f32 %v3094, 0.0
        %v3239 = vmax.f32 %v3135, 0.0
        %v3240 = vmax.f32 %v3137, 0.0
        %v3241 = vmax.f32 %v3178, 0.0
        %v3242 = vmax.f32 %v3180, 0.0
        %v3243 = vmax.f32 %v3221, 0.0
        %v3244 = vmax.f32 %v3223, 0.0
        %v3245 = vmax.f32 %v2924, 0.0
        %v3246 = vmax.f32 %v2926, 0.0
        %v3247 = vmax.f32 %v2967, 0.0
        %v3248 = vmax.f32 %v2969, 0.0
        %v3249 = vmax.f32 %v3010, 0.0
        %v3250 = vmax.f32 %v3012, 0.0
        %v3251 = vmax.f32 %v3053, 0.0
        %v3252 = vmax.f32 %v3055, 0.0
        %v3253 = vmax.f32 %v3096, 0.0
        %v3254 = vmax.f32 %v3098, 0.0
        %v3255 = vmax.f32 %v3139, 0.0
        %v3256 = vmax.f32 %v3141, 0.0
        %v3257 = vmax.f32 %v3182, 0.0
        %v3258 = vmax.f32 %v3184, 0.0
        %v3259 = vmax.f32 %v3225, 0.0
        %v3260 = vmax.f32 %v3227, 0.0
        %v3261 = vld [vmem:[%s1092] sm:$0xf]
        %v3262 = vld [vmem:[%s1092 + $0x4] sm:$0xf]
        %v3263 = vld [vmem:[%s1092 + $0x8] sm:$0xf]
        %v3264 = vld [vmem:[%s1092 + $0xc] sm:$0xf]
        %v3265 = vld [vmem:[%s1092 + $0x10] sm:$0xf]
        %v3266 = vld [vmem:[%s1092 + $0x14] sm:$0xf]
        %v3267 = vld [vmem:[%s1092 + $0x18] sm:$0xf]
        %v3268 = vld [vmem:[%s1092 + $0x1c] sm:$0xf]
        %v3269 = vld [vmem:[%s1092 + $0x20] sm:$0xf]
        %v3270 = vld [vmem:[%s1092 + $0x24] sm:$0xf]
        %v3271 = vld [vmem:[%s1092 + $0x28] sm:$0xf]
        %v3272 = vld [vmem:[%s1092 + $0x2c] sm:$0xf]
        %v3273 = vld [vmem:[%s1092 + $0x30] sm:$0xf]
        %v3274 = vld [vmem:[%s1092 + $0x34] sm:$0xf]
        %v3275 = vld [vmem:[%s1092 + $0x38] sm:$0xf]
        %v3276 = vld [vmem:[%s1092 + $0x3c] sm:$0xf]
        %v3277 = vld [vmem:[%s1092 + $0x40] sm:$0xf]
        %v3278 = vld [vmem:[%s1092 + $0x44] sm:$0xf]
        %v3279 = vld [vmem:[%s1092 + $0x48] sm:$0xf]
        %v3280 = vld [vmem:[%s1092 + $0x4c] sm:$0xf]
        %v3281 = vld [vmem:[%s1092 + $0x50] sm:$0xf]
        %v3282 = vld [vmem:[%s1092 + $0x54] sm:$0xf]
        %v3283 = vld [vmem:[%s1092 + $0x58] sm:$0xf]
        %v3284 = vld [vmem:[%s1092 + $0x5c] sm:$0xf]
        %v3285 = vld [vmem:[%s1092 + $0x60] sm:$0xf]
        %v3286 = vld [vmem:[%s1092 + $0x64] sm:$0xf]
        %v3287 = vld [vmem:[%s1092 + $0x68] sm:$0xf]
        %v3288 = vld [vmem:[%s1092 + $0x6c] sm:$0xf]
        %v3289 = vld [vmem:[%s1092 + $0x70] sm:$0xf]
        %v3290 = vld [vmem:[%s1092 + $0x74] sm:$0xf]
        %v3291 = vld [vmem:[%s1092 + $0x78] sm:$0xf]
        %v3292 = vld [vmem:[%s1092 + $0x7c] sm:$0xf]
        %v3293 = vld [vmem:[%s1092 + $0x80] sm:$0xf]
        %v3294 = vld [vmem:[%s1092 + $0x84] sm:$0xf]
        %v3295 = vld [vmem:[%s1092 + $0x88] sm:$0xf]
        %v3296 = vld [vmem:[%s1092 + $0x8c] sm:$0xf]
        %v3297 = vld [vmem:[%s1092 + $0x90] sm:$0xf]
        %v3298 = vld [vmem:[%s1092 + $0x94] sm:$0xf]
        %v3299 = vld [vmem:[%s1092 + $0x98] sm:$0xf]
        %v3300 = vld [vmem:[%s1092 + $0x9c] sm:$0xf]
        %v3301 = vld [vmem:[%s1092 + $0xa0] sm:$0xf]
        %v3302 = vld [vmem:[%s1092 + $0xa4] sm:$0xf]
        %v3303 = vld [vmem:[%s1092 + $0xa8] sm:$0xf]
        %v3304 = vld [vmem:[%s1092 + $0xac] sm:$0xf]
        %v3305 = vld [vmem:[%s1092 + $0xb0] sm:$0xf]
        %v3306 = vld [vmem:[%s1092 + $0xb4] sm:$0xf]
        %v3307 = vld [vmem:[%s1092 + $0xb8] sm:$0xf]
        %v3308 = vld [vmem:[%s1092 + $0xbc] sm:$0xf]
        %v3309 = vld [vmem:[%s1092 + $0xc0] sm:$0xf]
        %v3310 = vld [vmem:[%s1092 + $0xc4] sm:$0xf]
        %v3311 = vld [vmem:[%s1092 + $0xc8] sm:$0xf]
        %v3312 = vld [vmem:[%s1092 + $0xcc] sm:$0xf]
        %v3313 = vld [vmem:[%s1092 + $0xd0] sm:$0xf]
        %v3314 = vld [vmem:[%s1092 + $0xd4] sm:$0xf]
        %v3315 = vld [vmem:[%s1092 + $0xd8] sm:$0xf]
        %v3316 = vld [vmem:[%s1092 + $0xdc] sm:$0xf]
        %v3317 = vld [vmem:[%s1092 + $0xe0] sm:$0xf]
        %v3318 = vld [vmem:[%s1092 + $0xe4] sm:$0xf]
        %v3319 = vld [vmem:[%s1092 + $0xe8] sm:$0xf]
        %v3320 = vld [vmem:[%s1092 + $0xec] sm:$0xf]
        %v3321 = vld [vmem:[%s1092 + $0xf0] sm:$0xf]
        %v3322 = vld [vmem:[%s1092 + $0xf4] sm:$0xf]
        %v3323 = vld [vmem:[%s1092 + $0xf8] sm:$0xf]
        %v3324 = vld [vmem:[%s1092 + $0xfc] sm:$0xf]
        %v3325 = vld [vmem:[%s1092 + $0x100] sm:$0xf]
        %v3326 = vld [vmem:[%s1092 + $0x104] sm:$0xf]
        %v3327 = vld [vmem:[%s1092 + $0x108] sm:$0xf]
        %v3328 = vld [vmem:[%s1092 + $0x10c] sm:$0xf]
        %v3329 = vld [vmem:[%s1092 + $0x110] sm:$0xf]
        %v3330 = vld [vmem:[%s1092 + $0x114] sm:$0xf]
        %v3331 = vld [vmem:[%s1092 + $0x118] sm:$0xf]
        %v3332 = vld [vmem:[%s1092 + $0x11c] sm:$0xf]
        %v3333 = vld [vmem:[%s1092 + $0x120] sm:$0xf]
        %v3334 = vld [vmem:[%s1092 + $0x124] sm:$0xf]
        %v3335 = vld [vmem:[%s1092 + $0x128] sm:$0xf]
        %v3336 = vld [vmem:[%s1092 + $0x12c] sm:$0xf]
        %v3337 = vld [vmem:[%s1092 + $0x130] sm:$0xf]
        %v3338 = vld [vmem:[%s1092 + $0x134] sm:$0xf]
        %v3339 = vld [vmem:[%s1092 + $0x138] sm:$0xf]
        %v3340 = vld [vmem:[%s1092 + $0x13c] sm:$0xf]
        %v3341 = vld [vmem:[%s1092 + $0x140] sm:$0xf]
        %v3342 = vld [vmem:[%s1092 + $0x144] sm:$0xf]
        %v3343 = vld [vmem:[%s1092 + $0x148] sm:$0xf]
        %v3344 = vld [vmem:[%s1092 + $0x14c] sm:$0xf]
        %v3345 = vld [vmem:[%s1092 + $0x150] sm:$0xf]
        %v3346 = vld [vmem:[%s1092 + $0x154] sm:$0xf]
        %v3347 = vld [vmem:[%s1092 + $0x158] sm:$0xf]
        %v3348 = vld [vmem:[%s1092 + $0x15c] sm:$0xf]
        %v3349 = vld [vmem:[%s1092 + $0x160] sm:$0xf]
        %v3350 = vld [vmem:[%s1092 + $0x164] sm:$0xf]
        %v3351 = vld [vmem:[%s1092 + $0x168] sm:$0xf]
        %v3352 = vld [vmem:[%s1092 + $0x16c] sm:$0xf]
        %v3353 = vld [vmem:[%s1092 + $0x170] sm:$0xf]
        %v3354 = vld [vmem:[%s1092 + $0x174] sm:$0xf]
        %v3355 = vld [vmem:[%s1092 + $0x178] sm:$0xf]
        %v3356 = vld [vmem:[%s1092 + $0x17c] sm:$0xf]
        %v3357 = vld [vmem:[%s1092 + $0x180] sm:$0xf]
        %v3358 = vld [vmem:[%s1092 + $0x184] sm:$0xf]
        %v3359 = vld [vmem:[%s1092 + $0x188] sm:$0xf]
        %v3360 = vld [vmem:[%s1092 + $0x18c] sm:$0xf]
        %v3361 = vld [vmem:[%s1092 + $0x190] sm:$0xf]
        %v3362 = vld [vmem:[%s1092 + $0x194] sm:$0xf]
        %v3363 = vld [vmem:[%s1092 + $0x198] sm:$0xf]
        %v3364 = vld [vmem:[%s1092 + $0x19c] sm:$0xf]
        %v3365 = vld [vmem:[%s1092 + $0x1a0] sm:$0xf]
        %v3366 = vld [vmem:[%s1092 + $0x1a4] sm:$0xf]
        %v3367 = vld [vmem:[%s1092 + $0x1a8] sm:$0xf]
        %v3368 = vld [vmem:[%s1092 + $0x1ac] sm:$0xf]
        %v3369 = vld [vmem:[%s1092 + $0x1b0] sm:$0xf]
        %v3370 = vld [vmem:[%s1092 + $0x1b4] sm:$0xf]
        %v3371 = vld [vmem:[%s1092 + $0x1b8] sm:$0xf]
        %v3372 = vld [vmem:[%s1092 + $0x1bc] sm:$0xf]
        %v3373 = vld [vmem:[%s1092 + $0x1c0] sm:$0xf]
        %v3374 = vld [vmem:[%s1092 + $0x1c4] sm:$0xf]
        %v3375 = vld [vmem:[%s1092 + $0x1c8] sm:$0xf]
        %v3376 = vld [vmem:[%s1092 + $0x1cc] sm:$0xf]
        %v3377 = vld [vmem:[%s1092 + $0x1d0] sm:$0xf]
        %v3378 = vld [vmem:[%s1092 + $0x1d4] sm:$0xf]
        %v3379 = vld [vmem:[%s1092 + $0x1d8] sm:$0xf]
        %v3380 = vld [vmem:[%s1092 + $0x1dc] sm:$0xf]
        %v3381 = vld [vmem:[%s1092 + $0x1e0] sm:$0xf]
        %v3382 = vld [vmem:[%s1092 + $0x1e4] sm:$0xf]
        %v3383 = vld [vmem:[%s1092 + $0x1e8] sm:$0xf]
        %v3384 = vld [vmem:[%s1092 + $0x1ec] sm:$0xf]
        %v3385 = vld [vmem:[%s1092 + $0x1f0] sm:$0xf]
        %v3386 = vld [vmem:[%s1092 + $0x1f4] sm:$0xf]
        %v3387 = vld [vmem:[%s1092 + $0x1f8] sm:$0xf]
        %v3388 = vld [vmem:[%s1092 + $0x1fc] sm:$0xf]
        %v3389 = vld [vmem:[%s1092 + $0x200] sm:$0xf]
        %v3390 = vld [vmem:[%s1092 + $0x204] sm:$0xf]
        %v3391 = vld [vmem:[%s1092 + $0x208] sm:$0xf]
        %v3392 = vld [vmem:[%s1092 + $0x20c] sm:$0xf]
        %v3393 = vld [vmem:[%s1092 + $0x210] sm:$0xf]
        %v3394 = vld [vmem:[%s1092 + $0x214] sm:$0xf]
        %v3395 = vld [vmem:[%s1092 + $0x218] sm:$0xf]
        %v3396 = vld [vmem:[%s1092 + $0x21c] sm:$0xf]
        %v3397 = vld [vmem:[%s1092 + $0x220] sm:$0xf]
        %v3398 = vld [vmem:[%s1092 + $0x224] sm:$0xf]
        %v3399 = vld [vmem:[%s1092 + $0x228] sm:$0xf]
        %v3400 = vld [vmem:[%s1092 + $0x22c] sm:$0xf]
        %v3401 = vld [vmem:[%s1092 + $0x230] sm:$0xf]
        %v3402 = vld [vmem:[%s1092 + $0x234] sm:$0xf]
        %v3403 = vld [vmem:[%s1092 + $0x238] sm:$0xf]
        %v3404 = vld [vmem:[%s1092 + $0x23c] sm:$0xf]
        %v3405 = vld [vmem:[%s1092 + $0x240] sm:$0xf]
        %v3406 = vld [vmem:[%s1092 + $0x244] sm:$0xf]
        %v3407 = vld [vmem:[%s1092 + $0x248] sm:$0xf]
        %v3408 = vld [vmem:[%s1092 + $0x24c] sm:$0xf]
        %v3409 = vld [vmem:[%s1092 + $0x250] sm:$0xf]
        %v3410 = vld [vmem:[%s1092 + $0x254] sm:$0xf]
        %v3411 = vld [vmem:[%s1092 + $0x258] sm:$0xf]
        %v3412 = vld [vmem:[%s1092 + $0x25c] sm:$0xf]
        %v3413 = vld [vmem:[%s1092 + $0x260] sm:$0xf]
        %v3414 = vld [vmem:[%s1092 + $0x264] sm:$0xf]
        %v3415 = vld [vmem:[%s1092 + $0x268] sm:$0xf]
        %v3416 = vld [vmem:[%s1092 + $0x26c] sm:$0xf]
        %v3417 = vld [vmem:[%s1092 + $0x270] sm:$0xf]
        %v3418 = vld [vmem:[%s1092 + $0x274] sm:$0xf]
        %v3419 = vld [vmem:[%s1092 + $0x278] sm:$0xf]
        %v3420 = vld [vmem:[%s1092 + $0x27c] sm:$0xf]
        %v3421 = vld [vmem:[%s1092 + $0x280] sm:$0xf]
        %v3422 = vld [vmem:[%s1092 + $0x284] sm:$0xf]
        %v3423 = vld [vmem:[%s1092 + $0x288] sm:$0xf]
        %v3424 = vld [vmem:[%s1092 + $0x28c] sm:$0xf]
        %v3425 = vld [vmem:[%s1092 + $0x290] sm:$0xf]
        %v3426 = vld [vmem:[%s1092 + $0x294] sm:$0xf]
        %v3427 = vld [vmem:[%s1092 + $0x298] sm:$0xf]
        %v3428 = vld [vmem:[%s1092 + $0x29c] sm:$0xf]
        %v3429 = vld [vmem:[%s1092 + $0x2a0] sm:$0xf]
        %v3430 = vld [vmem:[%s1092 + $0x2a4] sm:$0xf]
        %v3431 = vld [vmem:[%s1092 + $0x2a8] sm:$0xf]
        %v3432 = vld [vmem:[%s1092 + $0x2ac] sm:$0xf]
        %v3433 = vld [vmem:[%s1092 + $0x2b0] sm:$0xf]
        %v3434 = vld [vmem:[%s1092 + $0x2b4] sm:$0xf]
        %v3435 = vld [vmem:[%s1092 + $0x2b8] sm:$0xf]
        %v3436 = vld [vmem:[%s1092 + $0x2bc] sm:$0xf]
        %v3437 = vld [vmem:[%s1092 + $0x2c0] sm:$0xf]
        %v3438 = vld [vmem:[%s1092 + $0x2c4] sm:$0xf]
        %v3439 = vld [vmem:[%s1092 + $0x2c8] sm:$0xf]
        %v3440 = vld [vmem:[%s1092 + $0x2cc] sm:$0xf]
        %v3441 = vld [vmem:[%s1092 + $0x2d0] sm:$0xf]
        %v3442 = vld [vmem:[%s1092 + $0x2d4] sm:$0xf]
        %v3443 = vld [vmem:[%s1092 + $0x2d8] sm:$0xf]
        %v3444 = vld [vmem:[%s1092 + $0x2dc] sm:$0xf]
        %v3445 = vld [vmem:[%s1092 + $0x2e0] sm:$0xf]
        %v3446 = vld [vmem:[%s1092 + $0x2e4] sm:$0xf]
        %v3447 = vld [vmem:[%s1092 + $0x2e8] sm:$0xf]
        %v3448 = vld [vmem:[%s1092 + $0x2ec] sm:$0xf]
        %v3449 = vld [vmem:[%s1092 + $0x2f0] sm:$0xf]
        %v3450 = vld [vmem:[%s1092 + $0x2f4] sm:$0xf]
        %v3451 = vld [vmem:[%s1092 + $0x2f8] sm:$0xf]
        %v3452 = vld [vmem:[%s1092 + $0x2fc] sm:$0xf]
        %v3453 = vld [vmem:[%s1092 + $0x300] sm:$0xf]
        %v3454 = vld [vmem:[%s1092 + $0x304] sm:$0xf]
        %v3455 = vld [vmem:[%s1092 + $0x308] sm:$0xf]
        %v3456 = vld [vmem:[%s1092 + $0x30c] sm:$0xf]
        %v3457 = vld [vmem:[%s1092 + $0x310] sm:$0xf]
        %v3458 = vld [vmem:[%s1092 + $0x314] sm:$0xf]
        %v3459 = vld [vmem:[%s1092 + $0x318] sm:$0xf]
        %v3460 = vld [vmem:[%s1092 + $0x31c] sm:$0xf]
        %v3461 = vld [vmem:[%s1092 + $0x320] sm:$0xf]
        %v3462 = vld [vmem:[%s1092 + $0x324] sm:$0xf]
        %v3463 = vld [vmem:[%s1092 + $0x328] sm:$0xf]
        %v3464 = vld [vmem:[%s1092 + $0x32c] sm:$0xf]
        %v3465 = vld [vmem:[%s1092 + $0x330] sm:$0xf]
        %v3466 = vld [vmem:[%s1092 + $0x334] sm:$0xf]
        %v3467 = vld [vmem:[%s1092 + $0x338] sm:$0xf]
        %v3468 = vld [vmem:[%s1092 + $0x33c] sm:$0xf]
        %v3469 = vld [vmem:[%s1092 + $0x340] sm:$0xf]
        %v3470 = vld [vmem:[%s1092 + $0x344] sm:$0xf]
        %v3471 = vld [vmem:[%s1092 + $0x348] sm:$0xf]
        %v3472 = vld [vmem:[%s1092 + $0x34c] sm:$0xf]
        %v3473 = vld [vmem:[%s1092 + $0x350] sm:$0xf]
        %v3474 = vld [vmem:[%s1092 + $0x354] sm:$0xf]
        %v3475 = vld [vmem:[%s1092 + $0x358] sm:$0xf]
        %v3476 = vld [vmem:[%s1092 + $0x35c] sm:$0xf]
        %v3477 = vld [vmem:[%s1092 + $0x360] sm:$0xf]
        %v3478 = vld [vmem:[%s1092 + $0x364] sm:$0xf]
        %v3479 = vld [vmem:[%s1092 + $0x368] sm:$0xf]
        %v3480 = vld [vmem:[%s1092 + $0x36c] sm:$0xf]
        %v3481 = vld [vmem:[%s1092 + $0x370] sm:$0xf]
        %v3482 = vld [vmem:[%s1092 + $0x374] sm:$0xf]
        %v3483 = vld [vmem:[%s1092 + $0x378] sm:$0xf]
        %v3484 = vld [vmem:[%s1092 + $0x37c] sm:$0xf]
        %v3485 = vld [vmem:[%s1092 + $0x380] sm:$0xf]
        %v3486 = vld [vmem:[%s1092 + $0x384] sm:$0xf]
        %v3487 = vld [vmem:[%s1092 + $0x388] sm:$0xf]
        %v3488 = vld [vmem:[%s1092 + $0x38c] sm:$0xf]
        %v3489 = vld [vmem:[%s1092 + $0x390] sm:$0xf]
        %v3490 = vld [vmem:[%s1092 + $0x394] sm:$0xf]
        %v3491 = vld [vmem:[%s1092 + $0x398] sm:$0xf]
        %v3492 = vld [vmem:[%s1092 + $0x39c] sm:$0xf]
        %v3493 = vld [vmem:[%s1092 + $0x3a0] sm:$0xf]
        %v3494 = vld [vmem:[%s1092 + $0x3a4] sm:$0xf]
        %v3495 = vld [vmem:[%s1092 + $0x3a8] sm:$0xf]
        %v3496 = vld [vmem:[%s1092 + $0x3ac] sm:$0xf]
        %v3497 = vld [vmem:[%s1092 + $0x3b0] sm:$0xf]
        %v3498 = vld [vmem:[%s1092 + $0x3b4] sm:$0xf]
        %v3499 = vld [vmem:[%s1092 + $0x3b8] sm:$0xf]
        %v3500 = vld [vmem:[%s1092 + $0x3bc] sm:$0xf]
        %v3501 = vld [vmem:[%s1092 + $0x3c0] sm:$0xf]
        %v3502 = vld [vmem:[%s1092 + $0x3c4] sm:$0xf]
        %v3503 = vld [vmem:[%s1092 + $0x3c8] sm:$0xf]
        %v3504 = vld [vmem:[%s1092 + $0x3cc] sm:$0xf]
        %v3505 = vld [vmem:[%s1092 + $0x3d0] sm:$0xf]
        %v3506 = vld [vmem:[%s1092 + $0x3d4] sm:$0xf]
        %v3507 = vld [vmem:[%s1092 + $0x3d8] sm:$0xf]
        %v3508 = vld [vmem:[%s1092 + $0x3dc] sm:$0xf]
        %v3509 = vld [vmem:[%s1092 + $0x3e0] sm:$0xf]
        %v3510 = vld [vmem:[%s1092 + $0x3e4] sm:$0xf]
        %v3511 = vld [vmem:[%s1092 + $0x3e8] sm:$0xf]
        %v3512 = vld [vmem:[%s1092 + $0x3ec] sm:$0xf]
        %v3513 = vld [vmem:[%s1092 + $0x3f0] sm:$0xf]
        %v3514 = vld [vmem:[%s1092 + $0x3f4] sm:$0xf]
        %v3515 = vld [vmem:[%s1092 + $0x3f8] sm:$0xf]
        %v3516 = vld [vmem:[%s1092 + $0x3fc] sm:$0xf]
        %v3517 = vpack.c.bf16 %v3245, %v3229
        %v3518 = vpack.c.bf16 %v3246, %v3230
        %v3519 = vpack.c.bf16 %v3247, %v3231
        %v3520 = vpack.c.bf16 %v3248, %v3232
        %v3521 = vpack.c.bf16 %v3249, %v3233
        %v3522 = vpack.c.bf16 %v3250, %v3234
        %v3523 = vpack.c.bf16 %v3251, %v3235
        %v3524 = vpack.c.bf16 %v3252, %v3236
        %v3525 = vpack.c.bf16 %v3253, %v3237
        %v3526 = vpack.c.bf16 %v3254, %v3238
        %v3527 = vpack.c.bf16 %v3255, %v3239
        %v3528 = vpack.c.bf16 %v3256, %v3240
        %v3529 = vpack.c.bf16 %v3257, %v3241
        %v3530 = vpack.c.bf16 %v3258, %v3242
        %v3531 = vpack.c.bf16 %v3259, %v3243
        %v3532 = vpack.c.bf16 %v3260, %v3244
        %v3533 = vld [vmem:[%s1095] sm:$0x1]
        %v3535 = vlaneseq
        %v3536 = vshrl.u32 %v3535, 7
        %v3537 = vsub.s32 0, %v3536
        %v3538 = vrot.slane %v3533, %v3537
        %v3796 = vunpack.c.l.b16 %v3261
        %v3797 = vunpack.c.l.b16 %v3262
        %v3798 = vunpack.c.l.b16 %v3263
        %v3799 = vunpack.c.l.b16 %v3264
        %v3800 = vunpack.c.l.b16 %v3265
        %v3801 = vunpack.c.l.b16 %v3266
        %v3802 = vunpack.c.l.b16 %v3267
        %v3803 = vunpack.c.l.b16 %v3268
        %v3804 = vunpack.c.l.b16 %v3269
        %v3805 = vunpack.c.l.b16 %v3270
        %v3806 = vunpack.c.l.b16 %v3271
        %v3807 = vunpack.c.l.b16 %v3272
        %v3808 = vunpack.c.l.b16 %v3273
        %v3809 = vunpack.c.l.b16 %v3274
        %v3810 = vunpack.c.l.b16 %v3275
        %v3811 = vunpack.c.l.b16 %v3276
        %v3812 = vunpack.c.l.b16 %v3277
        %v3813 = vunpack.c.l.b16 %v3278
        %v3814 = vunpack.c.l.b16 %v3279
        %v3815 = vunpack.c.l.b16 %v3280
        %v3816 = vunpack.c.l.b16 %v3281
        %v3817 = vunpack.c.l.b16 %v3282
        %v3818 = vunpack.c.l.b16 %v3283
        %v3819 = vunpack.c.l.b16 %v3284
        %v3820 = vunpack.c.l.b16 %v3285
        %v3821 = vunpack.c.l.b16 %v3286
        %v3822 = vunpack.c.l.b16 %v3287
        %v3823 = vunpack.c.l.b16 %v3288
        %v3824 = vunpack.c.l.b16 %v3289
        %v3825 = vunpack.c.l.b16 %v3290
        %v3826 = vunpack.c.l.b16 %v3291
        %v3827 = vunpack.c.l.b16 %v3292
        %v3828 = vunpack.c.l.b16 %v3293
        %v3829 = vunpack.c.l.b16 %v3294
        %v3830 = vunpack.c.l.b16 %v3295
        %v3831 = vunpack.c.l.b16 %v3296
        %v3832 = vunpack.c.l.b16 %v3297
        %v3833 = vunpack.c.l.b16 %v3298
        %v3834 = vunpack.c.l.b16 %v3299
        %v3835 = vunpack.c.l.b16 %v3300
        %v3836 = vunpack.c.l.b16 %v3301
        %v3837 = vunpack.c.l.b16 %v3302
        %v3838 = vunpack.c.l.b16 %v3303
        %v3839 = vunpack.c.l.b16 %v3304
        %v3840 = vunpack.c.l.b16 %v3305
        %v3841 = vunpack.c.l.b16 %v3306
        %v3842 = vunpack.c.l.b16 %v3307
        %v3843 = vunpack.c.l.b16 %v3308
        %v3844 = vunpack.c.l.b16 %v3309
        %v3845 = vunpack.c.l.b16 %v3310
        %v3846 = vunpack.c.l.b16 %v3311
        %v3847 = vunpack.c.l.b16 %v3312
        %v3848 = vunpack.c.l.b16 %v3313
        %v3849 = vunpack.c.l.b16 %v3314
        %v3850 = vunpack.c.l.b16 %v3315
        %v3851 = vunpack.c.l.b16 %v3316
        %v3852 = vunpack.c.l.b16 %v3317
        %v3853 = vunpack.c.l.b16 %v3318
        %v3854 = vunpack.c.l.b16 %v3319
        %v3855 = vunpack.c.l.b16 %v3320
        %v3856 = vunpack.c.l.b16 %v3321
        %v3857 = vunpack.c.l.b16 %v3322
        %v3858 = vunpack.c.l.b16 %v3323
        %v3859 = vunpack.c.l.b16 %v3324
        %v3860 = vunpack.c.l.b16 %v3325
        %v3861 = vunpack.c.l.b16 %v3326
        %v3862 = vunpack.c.l.b16 %v3327
        %v3863 = vunpack.c.l.b16 %v3328
        %v3864 = vunpack.c.l.b16 %v3329
        %v3865 = vunpack.c.l.b16 %v3330
        %v3866 = vunpack.c.l.b16 %v3331
        %v3867 = vunpack.c.l.b16 %v3332
        %v3868 = vunpack.c.l.b16 %v3333
        %v3869 = vunpack.c.l.b16 %v3334
        %v3870 = vunpack.c.l.b16 %v3335
        %v3871 = vunpack.c.l.b16 %v3336
        %v3872 = vunpack.c.l.b16 %v3337
        %v3873 = vunpack.c.l.b16 %v3338
        %v3874 = vunpack.c.l.b16 %v3339
        %v3875 = vunpack.c.l.b16 %v3340
        %v3876 = vunpack.c.l.b16 %v3341
        %v3877 = vunpack.c.l.b16 %v3342
        %v3878 = vunpack.c.l.b16 %v3343
        %v3879 = vunpack.c.l.b16 %v3344
        %v3880 = vunpack.c.l.b16 %v3345
        %v3881 = vunpack.c.l.b16 %v3346
        %v3882 = vunpack.c.l.b16 %v3347
        %v3883 = vunpack.c.l.b16 %v3348
        %v3884 = vunpack.c.l.b16 %v3349
        %v3885 = vunpack.c.l.b16 %v3350
        %v3886 = vunpack.c.l.b16 %v3351
        %v3887 = vunpack.c.l.b16 %v3352
        %v3888 = vunpack.c.l.b16 %v3353
        %v3889 = vunpack.c.l.b16 %v3354
        %v3890 = vunpack.c.l.b16 %v3355
        %v3891 = vunpack.c.l.b16 %v3356
        %v3892 = vunpack.c.l.b16 %v3357
        %v3893 = vunpack.c.l.b16 %v3358
        %v3894 = vunpack.c.l.b16 %v3359
        %v3895 = vunpack.c.l.b16 %v3360
        %v3896 = vunpack.c.l.b16 %v3361
        %v3897 = vunpack.c.l.b16 %v3362
        %v3898 = vunpack.c.l.b16 %v3363
        %v3899 = vunpack.c.l.b16 %v3364
        %v3900 = vunpack.c.l.b16 %v3365
        %v3901 = vunpack.c.l.b16 %v3366
        %v3902 = vunpack.c.l.b16 %v3367
        %v3903 = vunpack.c.l.b16 %v3368
        %v3904 = vunpack.c.l.b16 %v3369
        %v3905 = vunpack.c.l.b16 %v3370
        %v3906 = vunpack.c.l.b16 %v3371
        %v3907 = vunpack.c.l.b16 %v3372
        %v3908 = vunpack.c.l.b16 %v3373
        %v3909 = vunpack.c.l.b16 %v3374
        %v3910 = vunpack.c.l.b16 %v3375
        %v3911 = vunpack.c.l.b16 %v3376
        %v3912 = vunpack.c.l.b16 %v3377
        %v3913 = vunpack.c.l.b16 %v3378
        %v3914 = vunpack.c.l.b16 %v3379
        %v3915 = vunpack.c.l.b16 %v3380
        %v3916 = vunpack.c.l.b16 %v3381
        %v3917 = vunpack.c.l.b16 %v3382
        %v3918 = vunpack.c.l.b16 %v3383
        %v3919 = vunpack.c.l.b16 %v3384
        %v3920 = vunpack.c.l.b16 %v3385
        %v3921 = vunpack.c.l.b16 %v3386
        %v3922 = vunpack.c.l.b16 %v3387
        %v3923 = vunpack.c.l.b16 %v3388
        %v3924 = vunpack.c.l.b16 %v3389
        %v3925 = vunpack.c.l.b16 %v3390
        %v3926 = vunpack.c.l.b16 %v3391
        %v3927 = vunpack.c.l.b16 %v3392
        %v3928 = vunpack.c.l.b16 %v3393
        %v3929 = vunpack.c.l.b16 %v3394
        %v3930 = vunpack.c.l.b16 %v3395
        %v3931 = vunpack.c.l.b16 %v3396
        %v3932 = vunpack.c.l.b16 %v3397
        %v3933 = vunpack.c.l.b16 %v3398
        %v3934 = vunpack.c.l.b16 %v3399
        %v3935 = vunpack.c.l.b16 %v3400
        %v3936 = vunpack.c.l.b16 %v3401
        %v3937 = vunpack.c.l.b16 %v3402
        %v3938 = vunpack.c.l.b16 %v3403
        %v3939 = vunpack.c.l.b16 %v3404
        %v3940 = vunpack.c.l.b16 %v3405
        %v3941 = vunpack.c.l.b16 %v3406
        %v3942 = vunpack.c.l.b16 %v3407
        %v3943 = vunpack.c.l.b16 %v3408
        %v3944 = vunpack.c.l.b16 %v3409
        %v3945 = vunpack.c.l.b16 %v3410
        %v3946 = vunpack.c.l.b16 %v3411
        %v3947 = vunpack.c.l.b16 %v3412
        %v3948 = vunpack.c.l.b16 %v3413
        %v3949 = vunpack.c.l.b16 %v3414
        %v3950 = vunpack.c.l.b16 %v3415
        %v3951 = vunpack.c.l.b16 %v3416
        %v3952 = vunpack.c.l.b16 %v3417
        %v3953 = vunpack.c.l.b16 %v3418
        %v3954 = vunpack.c.l.b16 %v3419
        %v3955 = vunpack.c.l.b16 %v3420
        %v3956 = vunpack.c.l.b16 %v3421
        %v3957 = vunpack.c.l.b16 %v3422
        %v3958 = vunpack.c.l.b16 %v3423
        %v3959 = vunpack.c.l.b16 %v3424
        %v3960 = vunpack.c.l.b16 %v3425
        %v3961 = vunpack.c.l.b16 %v3426
        %v3962 = vunpack.c.l.b16 %v3427
        %v3963 = vunpack.c.l.b16 %v3428
        %v3964 = vunpack.c.l.b16 %v3429
        %v3965 = vunpack.c.l.b16 %v3430
        %v3966 = vunpack.c.l.b16 %v3431
        %v3967 = vunpack.c.l.b16 %v3432
        %v3968 = vunpack.c.l.b16 %v3433
        %v3969 = vunpack.c.l.b16 %v3434
        %v3970 = vunpack.c.l.b16 %v3435
        %v3971 = vunpack.c.l.b16 %v3436
        %v3972 = vunpack.c.l.b16 %v3437
        %v3973 = vunpack.c.l.b16 %v3438
        %v3974 = vunpack.c.l.b16 %v3439
        %v3975 = vunpack.c.l.b16 %v3440
        %v3976 = vunpack.c.l.b16 %v3441
        %v3977 = vunpack.c.l.b16 %v3442
        %v3978 = vunpack.c.l.b16 %v3443
        %v3979 = vunpack.c.l.b16 %v3444
        %v3980 = vunpack.c.l.b16 %v3445
        %v3981 = vunpack.c.l.b16 %v3446
        %v3982 = vunpack.c.l.b16 %v3447
        %v3983 = vunpack.c.l.b16 %v3448
        %v3984 = vunpack.c.l.b16 %v3449
        %v3985 = vunpack.c.l.b16 %v3450
        %v3986 = vunpack.c.l.b16 %v3451
        %v3987 = vunpack.c.l.b16 %v3452
        %v3988 = vunpack.c.l.b16 %v3453
        %v3989 = vunpack.c.l.b16 %v3454
        %v3990 = vunpack.c.l.b16 %v3455
        %v3991 = vunpack.c.l.b16 %v3456
        %v3992 = vunpack.c.l.b16 %v3457
        %v3993 = vunpack.c.l.b16 %v3458
        %v3994 = vunpack.c.l.b16 %v3459
        %v3995 = vunpack.c.l.b16 %v3460
        %v3996 = vunpack.c.l.b16 %v3461
        %v3997 = vunpack.c.l.b16 %v3462
        %v3998 = vunpack.c.l.b16 %v3463
        %v3999 = vunpack.c.l.b16 %v3464
        %v4000 = vunpack.c.l.b16 %v3465
        %v4001 = vunpack.c.l.b16 %v3466
        %v4002 = vunpack.c.l.b16 %v3467
        %v4003 = vunpack.c.l.b16 %v3468
        %v4004 = vunpack.c.l.b16 %v3469
        %v4005 = vunpack.c.l.b16 %v3470
        %v4006 = vunpack.c.l.b16 %v3471
        %v4007 = vunpack.c.l.b16 %v3472
        %v4008 = vunpack.c.l.b16 %v3473
        %v4009 = vunpack.c.l.b16 %v3474
        %v4010 = vunpack.c.l.b16 %v3475
        %v4011 = vunpack.c.l.b16 %v3476
        %v4012 = vunpack.c.l.b16 %v3477
        %v4013 = vunpack.c.l.b16 %v3478
        %v4014 = vunpack.c.l.b16 %v3479
        %v4015 = vunpack.c.l.b16 %v3480
        %v4016 = vunpack.c.l.b16 %v3481
        %v4017 = vunpack.c.l.b16 %v3482
        %v4018 = vunpack.c.l.b16 %v3483
        %v4019 = vunpack.c.l.b16 %v3484
        %v4020 = vunpack.c.l.b16 %v3485
        %v4021 = vunpack.c.l.b16 %v3486
        %v4022 = vunpack.c.l.b16 %v3487
        %v4023 = vunpack.c.l.b16 %v3488
        %v4024 = vunpack.c.l.b16 %v3489
        %v4025 = vunpack.c.l.b16 %v3490
        %v4026 = vunpack.c.l.b16 %v3491
        %v4027 = vunpack.c.l.b16 %v3492
        %v4028 = vunpack.c.l.b16 %v3493
        %v4029 = vunpack.c.l.b16 %v3494
        %v4030 = vunpack.c.l.b16 %v3495
        %v4031 = vunpack.c.l.b16 %v3496
        %v4032 = vunpack.c.l.b16 %v3497
        %v4033 = vunpack.c.l.b16 %v3498
        %v4034 = vunpack.c.l.b16 %v3499
        %v4035 = vunpack.c.l.b16 %v3500
        %v4036 = vunpack.c.l.b16 %v3501
        %v4037 = vunpack.c.l.b16 %v3502
        %v4038 = vunpack.c.l.b16 %v3503
        %v4039 = vunpack.c.l.b16 %v3504
        %v4040 = vunpack.c.l.b16 %v3505
        %v4041 = vunpack.c.l.b16 %v3506
        %v4042 = vunpack.c.l.b16 %v3507
        %v4043 = vunpack.c.l.b16 %v3508
        %v4044 = vunpack.c.l.b16 %v3509
        %v4045 = vunpack.c.l.b16 %v3510
        %v4046 = vunpack.c.l.b16 %v3511
        %v4047 = vunpack.c.l.b16 %v3512
        %v4048 = vunpack.c.l.b16 %v3513
        %v4049 = vunpack.c.l.b16 %v3514
        %v4050 = vunpack.c.l.b16 %v3515
        %v4051 = vunpack.c.l.b16 %v3516
        %v4052 = vpack.c.b16 %v3797, %v3796
        %v4053 = vpack.c.b16 %v3799, %v3798
        %v4054 = vpack.c.b16 %v3801, %v3800
        %v4055 = vpack.c.b16 %v3803, %v3802
        %v4056 = vpack.c.b16 %v3805, %v3804
        %v4057 = vpack.c.b16 %v3807, %v3806
        %v4058 = vpack.c.b16 %v3809, %v3808
        %v4059 = vpack.c.b16 %v3811, %v3810
        %v4060 = vpack.c.b16 %v3813, %v3812
        %v4061 = vpack.c.b16 %v3815, %v3814
        %v4062 = vpack.c.b16 %v3817, %v3816
        %v4063 = vpack.c.b16 %v3819, %v3818
        %v4064 = vpack.c.b16 %v3821, %v3820
        %v4065 = vpack.c.b16 %v3823, %v3822
        %v4066 = vpack.c.b16 %v3825, %v3824
        %v4067 = vpack.c.b16 %v3827, %v3826
        %v4068 = vpack.c.b16 %v3829, %v3828
        %v4069 = vpack.c.b16 %v3831, %v3830
        %v4070 = vpack.c.b16 %v3833, %v3832
        %v4071 = vpack.c.b16 %v3835, %v3834
        %v4072 = vpack.c.b16 %v3837, %v3836
        %v4073 = vpack.c.b16 %v3839, %v3838
        %v4074 = vpack.c.b16 %v3841, %v3840
        %v4075 = vpack.c.b16 %v3843, %v3842
        %v4076 = vpack.c.b16 %v3845, %v3844
        %v4077 = vpack.c.b16 %v3847, %v3846
        %v4078 = vpack.c.b16 %v3849, %v3848
        %v4079 = vpack.c.b16 %v3851, %v3850
        %v4080 = vpack.c.b16 %v3853, %v3852
        %v4081 = vpack.c.b16 %v3855, %v3854
        %v4082 = vpack.c.b16 %v3857, %v3856
        %v4083 = vpack.c.b16 %v3859, %v3858
        %v4084 = vpack.c.b16 %v3861, %v3860
        %v4085 = vpack.c.b16 %v3863, %v3862
        %v4086 = vpack.c.b16 %v3865, %v3864
        %v4087 = vpack.c.b16 %v3867, %v3866
        %v4088 = vpack.c.b16 %v3869, %v3868
        %v4089 = vpack.c.b16 %v3871, %v3870
        %v4090 = vpack.c.b16 %v3873, %v3872
        %v4091 = vpack.c.b16 %v3875, %v3874
        %v4092 = vpack.c.b16 %v3877, %v3876
        %v4093 = vpack.c.b16 %v3879, %v3878
        %v4094 = vpack.c.b16 %v3881, %v3880
        %v4095 = vpack.c.b16 %v3883, %v3882
        %v4096 = vpack.c.b16 %v3885, %v3884
        %v4097 = vpack.c.b16 %v3887, %v3886
        %v4098 = vpack.c.b16 %v3889, %v3888
        %v4099 = vpack.c.b16 %v3891, %v3890
        %v4100 = vpack.c.b16 %v3893, %v3892
        %v4101 = vpack.c.b16 %v3895, %v3894
        %v4102 = vpack.c.b16 %v3897, %v3896
        %v4103 = vpack.c.b16 %v3899, %v3898
        %v4104 = vpack.c.b16 %v3901, %v3900
        %v4105 = vpack.c.b16 %v3903, %v3902
        %v4106 = vpack.c.b16 %v3905, %v3904
        %v4107 = vpack.c.b16 %v3907, %v3906
        %v4108 = vpack.c.b16 %v3909, %v3908
        %v4109 = vpack.c.b16 %v3911, %v3910
        %v4110 = vpack.c.b16 %v3913, %v3912
        %v4111 = vpack.c.b16 %v3915, %v3914
        %v4112 = vpack.c.b16 %v3917, %v3916
        %v4113 = vpack.c.b16 %v3919, %v3918
        %v4114 = vpack.c.b16 %v3921, %v3920
        %v4115 = vpack.c.b16 %v3923, %v3922
        %v4116 = vpack.c.b16 %v3925, %v3924
        %v4117 = vpack.c.b16 %v3927, %v3926
        %v4118 = vpack.c.b16 %v3929, %v3928
        %v4119 = vpack.c.b16 %v3931, %v3930
        %v4120 = vpack.c.b16 %v3933, %v3932
        %v4121 = vpack.c.b16 %v3935, %v3934
        %v4122 = vpack.c.b16 %v3937, %v3936
        %v4123 = vpack.c.b16 %v3939, %v3938
        %v4124 = vpack.c.b16 %v3941, %v3940
        %v4125 = vpack.c.b16 %v3943, %v3942
        %v4126 = vpack.c.b16 %v3945, %v3944
        %v4127 = vpack.c.b16 %v3947, %v3946
        %v4128 = vpack.c.b16 %v3949, %v3948
        %v4129 = vpack.c.b16 %v3951, %v3950
        %v4130 = vpack.c.b16 %v3953, %v3952
        %v4131 = vpack.c.b16 %v3955, %v3954
        %v4132 = vpack.c.b16 %v3957, %v3956
        %v4133 = vpack.c.b16 %v3959, %v3958
        %v4134 = vpack.c.b16 %v3961, %v3960
        %v4135 = vpack.c.b16 %v3963, %v3962
        %v4136 = vpack.c.b16 %v3965, %v3964
        %v4137 = vpack.c.b16 %v3967, %v3966
        %v4138 = vpack.c.b16 %v3969, %v3968
        %v4139 = vpack.c.b16 %v3971, %v3970
        %v4140 = vpack.c.b16 %v3973, %v3972
        %v4141 = vpack.c.b16 %v3975, %v3974
        %v4142 = vpack.c.b16 %v3977, %v3976
        %v4143 = vpack.c.b16 %v3979, %v3978
        %v4144 = vpack.c.b16 %v3981, %v3980
        %v4145 = vpack.c.b16 %v3983, %v3982
        %v4146 = vpack.c.b16 %v3985, %v3984
        %v4147 = vpack.c.b16 %v3987, %v3986
        %v4148 = vpack.c.b16 %v3989, %v3988
        %v4149 = vpack.c.b16 %v3991, %v3990
        %v4150 = vpack.c.b16 %v3993, %v3992
        %v4151 = vpack.c.b16 %v3995, %v3994
        %v4152 = vpack.c.b16 %v3997, %v3996
        %v4153 = vpack.c.b16 %v3999, %v3998
        %v4154 = vpack.c.b16 %v4001, %v4000
        %v4155 = vpack.c.b16 %v4003, %v4002
        %v4156 = vpack.c.b16 %v4005, %v4004
        %v4157 = vpack.c.b16 %v4007, %v4006
        %v4158 = vpack.c.b16 %v4009, %v4008
        %v4159 = vpack.c.b16 %v4011, %v4010
        %v4160 = vpack.c.b16 %v4013, %v4012
        %v4161 = vpack.c.b16 %v4015, %v4014
        %v4162 = vpack.c.b16 %v4017, %v4016
        %v4163 = vpack.c.b16 %v4019, %v4018
        %v4164 = vpack.c.b16 %v4021, %v4020
        %v4165 = vpack.c.b16 %v4023, %v4022
        %v4166 = vpack.c.b16 %v4025, %v4024
        %v4167 = vpack.c.b16 %v4027, %v4026
        %v4168 = vpack.c.b16 %v4029, %v4028
        %v4169 = vpack.c.b16 %v4031, %v4030
        %v4170 = vpack.c.b16 %v4033, %v4032
        %v4171 = vpack.c.b16 %v4035, %v4034
        %v4172 = vpack.c.b16 %v4037, %v4036
        %v4173 = vpack.c.b16 %v4039, %v4038
        %v4174 = vpack.c.b16 %v4041, %v4040
        %v4175 = vpack.c.b16 %v4043, %v4042
        %v4176 = vpack.c.b16 %v4045, %v4044
        %v4177 = vpack.c.b16 %v4047, %v4046
        %v4178 = vpack.c.b16 %v4049, %v4048
        %v4179 = vpack.c.b16 %v4051, %v4050
        %4308 = vmatprep.subr.bf16.mxu0 0
        %4309 = vmatpush1.bf16.msra.mxu0 %v4052
        %4310 = vmatprep.subr.bf16.mxu0 0
        %4311 = vmatpush1.bf16.msra.mxu0 %v4053
        %4312 = vmatprep.subr.bf16.mxu0 0
        %4313 = vmatpush1.bf16.msra.mxu0 %v4054
        %4314 = vmatprep.subr.bf16.mxu0 0
        %4315 = vmatpush1.bf16.msra.mxu0 %v4055
        %4316 = vmatprep.subr.bf16.mxu0 0
        %4317 = vmatpush1.bf16.msra.mxu0 %v4056
        %4318 = vmatprep.subr.bf16.mxu0 0
        %4319 = vmatpush1.bf16.msra.mxu0 %v4057
        %4320 = vmatprep.subr.bf16.mxu0 0
        %4321 = vmatpush1.bf16.msra.mxu0 %v4058
        %4322 = vmatprep.subr.bf16.mxu0 0
        %4323 = vmatpush1.bf16.msra.mxu0 %v4059
        %4324 = vmatprep.subr.bf16.mxu0 0
        %4325 = vmatpush1.bf16.msra.mxu0 %v4060
        %4326 = vmatprep.subr.bf16.mxu0 0
        %4327 = vmatpush1.bf16.msra.mxu0 %v4061
        %4328 = vmatprep.subr.bf16.mxu0 0
        %4329 = vmatpush1.bf16.msra.mxu0 %v4062
        %4330 = vmatprep.subr.bf16.mxu0 0
        %4331 = vmatpush1.bf16.msra.mxu0 %v4063
        %4332 = vmatprep.subr.bf16.mxu0 0
        %4333 = vmatpush1.bf16.msra.mxu0 %v4064
        %4334 = vmatprep.subr.bf16.mxu0 0
        %4335 = vmatpush1.bf16.msra.mxu0 %v4065
        %4336 = vmatprep.subr.bf16.mxu0 0
        %4337 = vmatpush1.bf16.msra.mxu0 %v4066
        %4338 = vmatprep.subr.bf16.mxu0 0
        %4339 = vmatpush1.bf16.msra.mxu0 %v4067
        %4340 = vmatprep.mubr.bf16.mxu0 %v3518
        %4341 = vmatmul.mubr.bf16.gmra.mrb[0].mxu0 %v3517
        %v4342 = vpop.f32.mrb[0].mxu0
        %v4343 = vadd.f32 %v3538, %v4342
        %v4344 = vpop.f32.mrb[0].mxu0
        %v4345 = vpop.f32.mrb[0].mxu0
        %v4346 = vadd.f32 %v3538, %v4345
        %v4347 = vpop.f32.mrb[0].mxu0
        %4348 = vdwg.mxu0
        %4349 = vmatprep.subr.bf16.mxu0 0
        %4350 = vmatpush1.bf16.msra.mxu0 %v4068
        %4351 = vmatprep.subr.bf16.mxu0 0
        %4352 = vmatpush1.bf16.msra.mxu0 %v4069
        %4353 = vmatprep.subr.bf16.mxu0 0
        %4354 = vmatpush1.bf16.msra.mxu0 %v4070
        %4355 = vmatprep.subr.bf16.mxu0 0
        %4356 = vmatpush1.bf16.msra.mxu0 %v4071
        %4357 = vmatprep.subr.bf16.mxu0 0
        %4358 = vmatpush1.bf16.msra.mxu0 %v4072
        %4359 = vmatprep.subr.bf16.mxu0 0
        %4360 = vmatpush1.bf16.msra.mxu0 %v4073
        %4361 = vmatprep.subr.bf16.mxu0 0
        %4362 = vmatpush1.bf16.msra.mxu0 %v4074
        %4363 = vmatprep.subr.bf16.mxu0 0
        %4364 = vmatpush1.bf16.msra.mxu0 %v4075
        %4365 = vmatprep.subr.bf16.mxu0 0
        %4366 = vmatpush1.bf16.msra.mxu0 %v4076
        %4367 = vmatprep.subr.bf16.mxu0 0
        %4368 = vmatpush1.bf16.msra.mxu0 %v4077
        %4369 = vmatprep.subr.bf16.mxu0 0
        %4370 = vmatpush1.bf16.msra.mxu0 %v4078
        %4371 = vmatprep.subr.bf16.mxu0 0
        %4372 = vmatpush1.bf16.msra.mxu0 %v4079
        %4373 = vmatprep.subr.bf16.mxu0 0
        %4374 = vmatpush1.bf16.msra.mxu0 %v4080
        %4375 = vmatprep.subr.bf16.mxu0 0
        %4376 = vmatpush1.bf16.msra.mxu0 %v4081
        %4377 = vmatprep.subr.bf16.mxu0 0
        %4378 = vmatpush1.bf16.msra.mxu0 %v4082
        %4379 = vmatprep.subr.bf16.mxu0 0
        %4380 = vmatpush1.bf16.msra.mxu0 %v4083
        %4381 = vmatprep.mubr.bf16.mxu0 %v3520
        %4382 = vmatmul.mubr.bf16.gmra.mrb[0].mxu0 %v3519
        %v4383 = vpop.f32.mrb[0].mxu0
        %v4384 = vadd.f32 %v4343, %v4383
        %v4385 = vpop.f32.mrb[0].mxu0
        %v4386 = vpop.f32.mrb[0].mxu0
        %v4387 = vadd.f32 %v4346, %v4386
        %v4388 = vpop.f32.mrb[0].mxu0
        %4389 = vdwg.mxu0
        %4390 = vmatprep.subr.bf16.mxu0 0
        %4391 = vmatpush1.bf16.msra.mxu0 %v4084
        %4392 = vmatprep.subr.bf16.mxu0 0
        %4393 = vmatpush1.bf16.msra.mxu0 %v4085
        %4394 = vmatprep.subr.bf16.mxu0 0
        %4395 = vmatpush1.bf16.msra.mxu0 %v4086
        %4396 = vmatprep.subr.bf16.mxu0 0
        %4397 = vmatpush1.bf16.msra.mxu0 %v4087
        %4398 = vmatprep.subr.bf16.mxu0 0
        %4399 = vmatpush1.bf16.msra.mxu0 %v4088
        %4400 = vmatprep.subr.bf16.mxu0 0
        %4401 = vmatpush1.bf16.msra.mxu0 %v4089
        %4402 = vmatprep.subr.bf16.mxu0 0
        %4403 = vmatpush1.bf16.msra.mxu0 %v4090
        %4404 = vmatprep.subr.bf16.mxu0 0
        %4405 = vmatpush1.bf16.msra.mxu0 %v4091
        %4406 = vmatprep.subr.bf16.mxu0 0
        %4407 = vmatpush1.bf16.msra.mxu0 %v4092
        %4408 = vmatprep.subr.bf16.mxu0 0
        %4409 = vmatpush1.bf16.msra.mxu0 %v4093
        %4410 = vmatprep.subr.bf16.mxu0 0
        %4411 = vmatpush1.bf16.msra.mxu0 %v4094
        %4412 = vmatprep.subr.bf16.mxu0 0
        %4413 = vmatpush1.bf16.msra.mxu0 %v4095
        %4414 = vmatprep.subr.bf16.mxu0 0
        %4415 = vmatpush1.bf16.msra.mxu0 %v4096
        %4416 = vmatprep.subr.bf16.mxu0 0
        %4417 = vmatpush1.bf16.msra.mxu0 %v4097
        %4418 = vmatprep.subr.bf16.mxu0 0
        %4419 = vmatpush1.bf16.msra.mxu0 %v4098
        %4420 = vmatprep.subr.bf16.mxu0 0
        %4421 = vmatpush1.bf16.msra.mxu0 %v4099
        %4422 = vmatprep.mubr.bf16.mxu0 %v3522
        %4423 = vmatmul.mubr.bf16.gmra.mrb[0].mxu0 %v3521
        %v4424 = vpop.f32.mrb[0].mxu0
        %v4425 = vadd.f32 %v4384, %v4424
        %v4426 = vpop.f32.mrb[0].mxu0
        %v4427 = vpop.f32.mrb[0].mxu0
        %v4428 = vadd.f32 %v4387, %v4427
        %v4429 = vpop.f32.mrb[0].mxu0
        %4430 = vdwg.mxu0
        %4431 = vmatprep.subr.bf16.mxu0 0
        %4432 = vmatpush1.bf16.msra.mxu0 %v4100
        %4433 = vmatprep.subr.bf16.mxu0 0
        %4434 = vmatpush1.bf16.msra.mxu0 %v4101
        %4435 = vmatprep.subr.bf16.mxu0 0
        %4436 = vmatpush1.bf16.msra.mxu0 %v4102
        %4437 = vmatprep.subr.bf16.mxu0 0
        %4438 = vmatpush1.bf16.msra.mxu0 %v4103
        %4439 = vmatprep.subr.bf16.mxu0 0
        %4440 = vmatpush1.bf16.msra.mxu0 %v4104
        %4441 = vmatprep.subr.bf16.mxu0 0
        %4442 = vmatpush1.bf16.msra.mxu0 %v4105
        %4443 = vmatprep.subr.bf16.mxu0 0
        %4444 = vmatpush1.bf16.msra.mxu0 %v4106
        %4445 = vmatprep.subr.bf16.mxu0 0
        %4446 = vmatpush1.bf16.msra.mxu0 %v4107
        %4447 = vmatprep.subr.bf16.mxu0 0
        %4448 = vmatpush1.bf16.msra.mxu0 %v4108
        %4449 = vmatprep.subr.bf16.mxu0 0
        %4450 = vmatpush1.bf16.msra.mxu0 %v4109
        %4451 = vmatprep.subr.bf16.mxu0 0
        %4452 = vmatpush1.bf16.msra.mxu0 %v4110
        %4453 = vmatprep.subr.bf16.mxu0 0
        %4454 = vmatpush1.bf16.msra.mxu0 %v4111
        %4455 = vmatprep.subr.bf16.mxu0 0
        %4456 = vmatpush1.bf16.msra.mxu0 %v4112
        %4457 = vmatprep.subr.bf16.mxu0 0
        %4458 = vmatpush1.bf16.msra.mxu0 %v4113
        %4459 = vmatprep.subr.bf16.mxu0 0
        %4460 = vmatpush1.bf16.msra.mxu0 %v4114
        %4461 = vmatprep.subr.bf16.mxu0 0
        %4462 = vmatpush1.bf16.msra.mxu0 %v4115
        %4463 = vmatprep.mubr.bf16.mxu0 %v3524
        %4464 = vmatmul.mubr.bf16.gmra.mrb[0].mxu0 %v3523
        %v4465 = vpop.f32.mrb[0].mxu0
        %v4466 = vadd.f32 %v4425, %v4465
        %v4467 = vpop.f32.mrb[0].mxu0
        %v4468 = vpop.f32.mrb[0].mxu0
        %v4469 = vadd.f32 %v4428, %v4468
        %v4470 = vpop.f32.mrb[0].mxu0
        %4471 = vdwg.mxu0
        %4472 = vmatprep.subr.bf16.mxu0 0
        %4473 = vmatpush1.bf16.msra.mxu0 %v4116
        %4474 = vmatprep.subr.bf16.mxu0 0
        %4475 = vmatpush1.bf16.msra.mxu0 %v4117
        %4476 = vmatprep.subr.bf16.mxu0 0
        %4477 = vmatpush1.bf16.msra.mxu0 %v4118
        %4478 = vmatprep.subr.bf16.mxu0 0
        %4479 = vmatpush1.bf16.msra.mxu0 %v4119
        %4480 = vmatprep.subr.bf16.mxu0 0
        %4481 = vmatpush1.bf16.msra.mxu0 %v4120
        %4482 = vmatprep.subr.bf16.mxu0 0
        %4483 = vmatpush1.bf16.msra.mxu0 %v4121
        %4484 = vmatprep.subr.bf16.mxu0 0
        %4485 = vmatpush1.bf16.msra.mxu0 %v4122
        %4486 = vmatprep.subr.bf16.mxu0 0
        %4487 = vmatpush1.bf16.msra.mxu0 %v4123
        %4488 = vmatprep.subr.bf16.mxu0 0
        %4489 = vmatpush1.bf16.msra.mxu0 %v4124
        %4490 = vmatprep.subr.bf16.mxu0 0
        %4491 = vmatpush1.bf16.msra.mxu0 %v4125
        %4492 = vmatprep.subr.bf16.mxu0 0
        %4493 = vmatpush1.bf16.msra.mxu0 %v4126
        %4494 = vmatprep.subr.bf16.mxu0 0
        %4495 = vmatpush1.bf16.msra.mxu0 %v4127
        %4496 = vmatprep.subr.bf16.mxu0 0
        %4497 = vmatpush1.bf16.msra.mxu0 %v4128
        %4498 = vmatprep.subr.bf16.mxu0 0
        %4499 = vmatpush1.bf16.msra.mxu0 %v4129
        %4500 = vmatprep.subr.bf16.mxu0 0
        %4501 = vmatpush1.bf16.msra.mxu0 %v4130
        %4502 = vmatprep.subr.bf16.mxu0 0
        %4503 = vmatpush1.bf16.msra.mxu0 %v4131
        %4504 = vmatprep.mubr.bf16.mxu0 %v3526
        %4505 = vmatmul.mubr.bf16.gmra.mrb[0].mxu0 %v3525
        %v4506 = vpop.f32.mrb[0].mxu0
        %v4507 = vadd.f32 %v4466, %v4506
        %v4508 = vpop.f32.mrb[0].mxu0
        %v4509 = vpop.f32.mrb[0].mxu0
        %v4510 = vadd.f32 %v4469, %v4509
        %v4511 = vpop.f32.mrb[0].mxu0
        %4512 = vdwg.mxu0
        %4513 = vmatprep.subr.bf16.mxu0 0
        %4514 = vmatpush1.bf16.msra.mxu0 %v4132
        %4515 = vmatprep.subr.bf16.mxu0 0
        %4516 = vmatpush1.bf16.msra.mxu0 %v4133
        %4517 = vmatprep.subr.bf16.mxu0 0
        %4518 = vmatpush1.bf16.msra.mxu0 %v4134
        %4519 = vmatprep.subr.bf16.mxu0 0
        %4520 = vmatpush1.bf16.msra.mxu0 %v4135
        %4521 = vmatprep.subr.bf16.mxu0 0
        %4522 = vmatpush1.bf16.msra.mxu0 %v4136
        %4523 = vmatprep.subr.bf16.mxu0 0
        %4524 = vmatpush1.bf16.msra.mxu0 %v4137
        %4525 = vmatprep.subr.bf16.mxu0 0
        %4526 = vmatpush1.bf16.msra.mxu0 %v4138
        %4527 = vmatprep.subr.bf16.mxu0 0
        %4528 = vmatpush1.bf16.msra.mxu0 %v4139
        %4529 = vmatprep.subr.bf16.mxu0 0
        %4530 = vmatpush1.bf16.msra.mxu0 %v4140
        %4531 = vmatprep.subr.bf16.mxu0 0
        %4532 = vmatpush1.bf16.msra.mxu0 %v4141
        %4533 = vmatprep.subr.bf16.mxu0 0
        %4534 = vmatpush1.bf16.msra.mxu0 %v4142
        %4535 = vmatprep.subr.bf16.mxu0 0
        %4536 = vmatpush1.bf16.msra.mxu0 %v4143
        %4537 = vmatprep.subr.bf16.mxu0 0
        %4538 = vmatpush1.bf16.msra.mxu0 %v4144
        %4539 = vmatprep.subr.bf16.mxu0 0
        %4540 = vmatpush1.bf16.msra.mxu0 %v4145
        %4541 = vmatprep.subr.bf16.mxu0 0
        %4542 = vmatpush1.bf16.msra.mxu0 %v4146
        %4543 = vmatprep.subr.bf16.mxu0 0
        %4544 = vmatpush1.bf16.msra.mxu0 %v4147
        %4545 = vmatprep.mubr.bf16.mxu0 %v3528
        %4546 = vmatmul.mubr.bf16.gmra.mrb[0].mxu0 %v3527
        %v4547 = vpop.f32.mrb[0].mxu0
        %v4548 = vadd.f32 %v4507, %v4547
        %v4549 = vpop.f32.mrb[0].mxu0
        %v4550 = vpop.f32.mrb[0].mxu0
        %v4551 = vadd.f32 %v4510, %v4550
        %v4552 = vpop.f32.mrb[0].mxu0
        %4553 = vdwg.mxu0
        %4554 = vmatprep.subr.bf16.mxu0 0
        %4555 = vmatpush1.bf16.msra.mxu0 %v4148
        %4556 = vmatprep.subr.bf16.mxu0 0
        %4557 = vmatpush1.bf16.msra.mxu0 %v4149
        %4558 = vmatprep.subr.bf16.mxu0 0
        %4559 = vmatpush1.bf16.msra.mxu0 %v4150
        %4560 = vmatprep.subr.bf16.mxu0 0
        %4561 = vmatpush1.bf16.msra.mxu0 %v4151
        %4562 = vmatprep.subr.bf16.mxu0 0
        %4563 = vmatpush1.bf16.msra.mxu0 %v4152
        %4564 = vmatprep.subr.bf16.mxu0 0
        %4565 = vmatpush1.bf16.msra.mxu0 %v4153
        %4566 = vmatprep.subr.bf16.mxu0 0
        %4567 = vmatpush1.bf16.msra.mxu0 %v4154
        %4568 = vmatprep.subr.bf16.mxu0 0
        %4569 = vmatpush1.bf16.msra.mxu0 %v4155
        %4570 = vmatprep.subr.bf16.mxu0 0
        %4571 = vmatpush1.bf16.msra.mxu0 %v4156
        %4572 = vmatprep.subr.bf16.mxu0 0
        %4573 = vmatpush1.bf16.msra.mxu0 %v4157
        %4574 = vmatprep.subr.bf16.mxu0 0
        %4575 = vmatpush1.bf16.msra.mxu0 %v4158
        %4576 = vmatprep.subr.bf16.mxu0 0
        %4577 = vmatpush1.bf16.msra.mxu0 %v4159
        %4578 = vmatprep.subr.bf16.mxu0 0
        %4579 = vmatpush1.bf16.msra.mxu0 %v4160
        %4580 = vmatprep.subr.bf16.mxu0 0
        %4581 = vmatpush1.bf16.msra.mxu0 %v4161
        %4582 = vmatprep.subr.bf16.mxu0 0
        %4583 = vmatpush1.bf16.msra.mxu0 %v4162
        %4584 = vmatprep.subr.bf16.mxu0 0
        %4585 = vmatpush1.bf16.msra.mxu0 %v4163
        %4586 = vmatprep.mubr.bf16.mxu0 %v3530
        %4587 = vmatmul.mubr.bf16.gmra.mrb[0].mxu0 %v3529
        %v4588 = vpop.f32.mrb[0].mxu0
        %v4589 = vadd.f32 %v4548, %v4588
        %v4590 = vpop.f32.mrb[0].mxu0
        %v4591 = vpop.f32.mrb[0].mxu0
        %v4592 = vadd.f32 %v4551, %v4591
        %v4593 = vpop.f32.mrb[0].mxu0
        %4594 = vdwg.mxu0
        %4595 = vmatprep.subr.bf16.mxu0 0
        %4596 = vmatpush1.bf16.msra.mxu0 %v4164
        %4597 = vmatprep.subr.bf16.mxu0 0
        %4598 = vmatpush1.bf16.msra.mxu0 %v4165
        %4599 = vmatprep.subr.bf16.mxu0 0
        %4600 = vmatpush1.bf16.msra.mxu0 %v4166
        %4601 = vmatprep.subr.bf16.mxu0 0
        %4602 = vmatpush1.bf16.msra.mxu0 %v4167
        %4603 = vmatprep.subr.bf16.mxu0 0
        %4604 = vmatpush1.bf16.msra.mxu0 %v4168
        %4605 = vmatprep.subr.bf16.mxu0 0
        %4606 = vmatpush1.bf16.msra.mxu0 %v4169
        %4607 = vmatprep.subr.bf16.mxu0 0
        %4608 = vmatpush1.bf16.msra.mxu0 %v4170
        %4609 = vmatprep.subr.bf16.mxu0 0
        %4610 = vmatpush1.bf16.msra.mxu0 %v4171
        %4611 = vmatprep.subr.bf16.mxu0 0
        %4612 = vmatpush1.bf16.msra.mxu0 %v4172
        %4613 = vmatprep.subr.bf16.mxu0 0
        %4614 = vmatpush1.bf16.msra.mxu0 %v4173
        %4615 = vmatprep.subr.bf16.mxu0 0
        %4616 = vmatpush1.bf16.msra.mxu0 %v4174
        %4617 = vmatprep.subr.bf16.mxu0 0
        %4618 = vmatpush1.bf16.msra.mxu0 %v4175
        %4619 = vmatprep.subr.bf16.mxu0 0
        %4620 = vmatpush1.bf16.msra.mxu0 %v4176
        %4621 = vmatprep.subr.bf16.mxu0 0
        %4622 = vmatpush1.bf16.msra.mxu0 %v4177
        %4623 = vmatprep.subr.bf16.mxu0 0
        %4624 = vmatpush1.bf16.msra.mxu0 %v4178
        %4625 = vmatprep.subr.bf16.mxu0 0
        %4626 = vmatpush1.bf16.msra.mxu0 %v4179
        %4627 = vmatprep.mubr.bf16.mxu0 %v3532
        %4628 = vmatmul.mubr.bf16.gmra.mrb[0].mxu0 %v3531
        %v4629 = vpop.f32.mrb[0].mxu0
        %v4630 = vadd.f32 %v4589, %v4629
        %v4631 = vpop.f32.mrb[0].mxu0
        %v4632 = vpop.f32.mrb[0].mxu0
        %v4633 = vadd.f32 %v4592, %v4632
        %v4634 = vpop.f32.mrb[0].mxu0
        %4635 = vdwg.mxu0
        %v4636 = vadd.f32 %v2603, %v4630
        %v4637 = vadd.f32 %v2604, %v4633
        %v4638 = vld [vmem:[%s1110] sm:$0x1]
        %v4639 = vld [vmem:[%s1113] sm:$0x1]
        %v4640 = vsel %vm1241, %v4636, 0.0
        %4641 = vadd.xlane.f32.xlu0 %v4640
        %v4642 = vpop.xlane.xlu0 %4641
        %v4643 = vsel %vm1241, %v4637, 0.0
        %4644 = vadd.xlane.f32.xlu0 %v4643
        %v4645 = vpop.xlane.xlu0 %4644
        %v4646 = vmul.f32 %v4642, %v2422
        %v4647 = vmul.f32 %v4645, %v2422
        %v4648 = vsub.f32 %v4636, %v4646
        %v4649 = vsub.f32 %v4637, %v4647
        %v4650 = vmul.f32 %v4648, %v4648
        %v4651 = vmul.f32 %v4649, %v4649
        %v4652 = vsel %vm1241, %v4650, 0.0
        %4653 = vadd.xlane.f32.xlu0 %v4652
        %v4654 = vpop.xlane.xlu0 %4653
        %v4655 = vsel %vm1241, %v4651, 0.0
        %4656 = vadd.xlane.f32.xlu0 %v4655
        %v4657 = vpop.xlane.xlu0 %4656
        %v4658 = vmul.f32 %v4654, %v2422
        %v4659 = vmul.f32 %v4657, %v2422
        %v4660 = vadd.f32 %v4658, 1e-05
        %v4661 = vadd.f32 %v4659, 1e-05
        %v4662 = vrsqrt.pop %v4660
        %v4663 = vrsqrt.pop %v4661
        %v4664 = vmul.f32 %v4648, %v4662
        %v4665 = vmul.f32 %v4649, %v4663
        %v4667 = vlaneseq
        %v4668 = vshrl.u32 %v4667, 7
        %v4669 = vsub.s32 0, %v4668
        %v4670 = vrot.slane %v4638, %v4669
        %v4672 = vmul.f32 %v4664, %v4670
        %v4673 = vmul.f32 %v4665, %v4670
        %v4675 = vlaneseq
        %v4676 = vshrl.u32 %v4675, 7
        %v4677 = vsub.s32 0, %v4676
        %v4678 = vrot.slane %v4639, %v4677
        %v4680 = vadd.f32 %v4672, %v4678
        %v4681 = vadd.f32 %v4673, %v4678
        %4682 = vst.msk [vmem:[#allocation2] sm:$0xff] %vm1241, %v4680
        %4683 = vst.msk [vmem:[#allocation2 + $0x8] sm:$0xff] %vm1241, %v4681
        %p4684 = scmp.eq.s32.totalorder %s42, 1
        // Predicated region
        $region125: #{tpu_custom_call.1} parent=119 // pred_check
          %p4685 = pneg %p4684
        $region126: #{tpu_custom_call.1} parent=119 // pred_check_branch
          %4687 = sbr.rel (%p4685) target = $region128
        $region127: #{tpu_custom_call.1} parent=119 // pred_region
          %4688 = vst.msk [vmem:[#allocation4] sm:$0xff] %vm1241, %v4680
          %4689 = vst.msk [vmem:[#allocation4 + $0x8] sm:$0xff] %vm1241, %v4681
        $region128: #{tpu_custom_call.1} parent=119 // pred_fallthru
          _
        // Predicated region
        $region129: #{tpu_custom_call.1} parent=119 // pred_check
          %p4690 = pneg %p702
        $region130: #{tpu_custom_call.1} parent=119 // pred_check_branch
          %4692 = sbr.rel (%p4690) target = $region132
        $region131: #{tpu_custom_call.1} parent=119 // pred_region
          %s4693 = smul.u32 2, %s41
          %s4695 = ssub.s32 256, 256
          %4696 = vsyncadd [#allocation5], %s4695
          %s4697 = smul.addr %s4693, 128
          %s4698 = scalar_lea.hbm %s25, %s4697
          %s4699 = sshll.u32 [#allocation4], 4
          %s4700 = int_to_ptr.vmem [resolvable:$true] %s4699
          %4705 = dma.vmem_to_hbm [thread:$0]  %s4700, 256, %s4698, [#allocation5], 128, 128, 8
        $region132: #{tpu_custom_call.1} parent=119 // pred_fallthru
          _
        // Predicated region
        $region133: #{tpu_custom_call.1} parent=119 // pred_check
          %p4706 = pneg %p702
        $region134: #{tpu_custom_call.1} parent=119 // pred_check_branch
          %4708 = sbr.rel (%p4706) target = $region136
        $region135: #{tpu_custom_call.1} parent=119 // pred_region
          %4709 = dma.done [#allocation5], 256
        $region136: #{tpu_custom_call.1} parent=119 // pred_fallthru
          _
      $region120: #{tpu_custom_call.1} parent=5 // pred_fallthru
        _
      %p4710 = scmp.le.s32.totalorder 2, %s32
      // Predicated region
      $region137: #{tpu_custom_call.1} parent=5 // pred_check
        %p4711 = pneg %p4710
      $region138: #{tpu_custom_call.1} parent=5 // pred_check_branch
        %4713 = sbr.rel (%p4711) target = $region140
      $region139: #{tpu_custom_call.1} parent=5 // pred_region
        %s4714 = ssub.s32 %s32, 2
      $region140: #{tpu_custom_call.1} parent=5 // pred_fallthru
        _
    $region6: #{tpu_custom_call.1} parent=1 // loop_footer
      %s36 = sadd.s32 1, %s32
    $region7: #{tpu_custom_call.1} parent=1 // loop_footer_branch
      %31 = sbr.rel target = $region3
    $region8: #{tpu_custom_call.1} parent=1 // loop_exit
      _
    %4715 = vsyncpa [#allocation5], 1
    %s4716 = scalar_lea.sflag [#allocation5], 1
    %4717 = vsyncpa %s4716, 1

</llo_original>
